<compile_context>
chip_gen: v5e
topology: v5e:2x2
jax: 0.10.0
libtpu: 0.0.40
codegen_flags: <defaults>
</compile_context>

<pallas_src>
import numpy as np

import jax
import jax.numpy as jnp
from jax.experimental import pallas as pl
from jax.experimental.pallas import tpu as pltpu


# ----------------------------------------------------------------------------
# Fused encoder kernel: all conv layers in one invocation, activations kept
# in VMEM/vregs.  Per layer: 1 selection matmul + kh weight matmuls (f32 acc).
# ----------------------------------------------------------------------------
def _encoder_kernel(*refs):
    """refs = (x, rh_0..rh_{L-1}, m_0..m_{L-1}, bias_0..bias_{L-1}, out)

      x      : (N*H0, W0*C0)                 f32   input, row=(n,h), col=(w,c)
      rh_l   : (kh_l*N*Ho_l, N*H_l)          bf16  stacked 0/1 row-selection
      m_l    : (kh_l, W_l*Cin_l, Wo_l*Cout_l) bf16 folded conv weights (+padding)
      bias_l : (1, Wo_l*Cout_l)              f32   bias tiled along Wo
      out    : (N*Ho_last, Wo_last*Cout_last) f32
    """
    num_layers = (len(refs) - 2) // 3
    x_ref = refs[0]
    rh_refs = refs[1:1 + num_layers]
    m_refs = refs[1 + num_layers:1 + 2 * num_layers]
    bias_refs = refs[1 + 2 * num_layers:1 + 3 * num_layers]
    o_ref = refs[1 + 3 * num_layers]

    act = x_ref[...]                                     # f32 (N*H, W*Cin)
    for l in range(num_layers):
        kh, _wcin, wocout = m_refs[l].shape
        nho = rh_refs[l].shape[0] // kh                  # N * Ho

        act_bf = act.astype(jnp.bfloat16)                # bf16 MXU operand
        # One MXU matmul realizes ALL kh vertical-tap row selections (stride,
        # zero padding, batch boundaries) at once.  The result rows are exact
        # copies of bf16 activation rows -> casting back to bf16 is lossless.
        sel = jnp.dot(rh_refs[l][...], act_bf,
                      preferred_element_type=jnp.float32)  # (kh*NHo, W*Cin)
        sel_bf = sel.astype(jnp.bfloat16)

        # Horizontal taps: per vertical offset i, one matmul on the already
        # row-decimated activations; accumulate the full conv sum in f32.
        acc = jnp.dot(sel_bf[0:nho, :], m_refs[l][0],
                      preferred_element_type=jnp.float32)
        for i in range(1, kh):
            acc = acc + jnp.dot(sel_bf[i * nho:(i + 1) * nho, :],
                                m_refs[l][i],
                                preferred_element_type=jnp.float32)

        acc = acc + bias_refs[l][...]                    # f32 bias
        if l < num_layers - 1:
            acc = jnp.maximum(acc, 0.0)                  # ReLU (all but last)
        act = acc

    o_ref[...] = act.astype(o_ref.dtype)                 # (8, 128) lane-dense store


# ----------------------------------------------------------------------------
# One-off weight preprocessing: fold conv taps + zero padding + stride into
# (RHall, M, bias_row) constants for the 2-D (N*H, W*C) activation layout.
# ----------------------------------------------------------------------------
def _fold_conv_constants(w_oihw, b, stride, pad, n, h, w):
    w_np = np.asarray(w_oihw, np.float32)
    b_np = np.asarray(b, np.float32)
    cout, cin, kh, kw = w_np.shape
    ho = (h + 2 * pad - kh) // stride + 1
    wo = (w + 2 * pad - kw) // stride + 1

    # RH[i, (n, r_out), (n, r_in)] = 1  iff  r_in == stride*r_out + i - pad (in-bounds).
    rh = np.zeros((kh, n * ho, n * h), np.float32)
    for i in range(kh):
        for nn in range(n):
            for r in range(ho):
                src = stride * r + i - pad
                if 0 <= src < h:
                    rh[i, nn * ho + r, nn * h + src] = 1.0
    rhall = rh.reshape(kh * n * ho, n * h)               # stacked along rows

    # M[i, (w_in, ci), (w_out, co)] = W[co, ci, i, j]  with  w_in = stride*w_out + j - pad.
    m = np.zeros((kh, w * cin, wo * cout), np.float32)
    for i in range(kh):
        for c in range(wo):
            for j in range(kw):
                src = stride * c + j - pad
                if 0 <= src < w:
                    m[i, src * cin:(src + 1) * cin,
                      c * cout:(c + 1) * cout] = w_np[:, :, i, j].T

    bias_row = np.tile(b_np, wo)[None, :]                # (1, Wo*Cout)
    return (jnp.asarray(rhall, jnp.bfloat16),
            jnp.asarray(m, jnp.bfloat16),
            jnp.asarray(bias_row, jnp.float32),
            ho, wo, cout)


# ----------------------------------------------------------------------------
# BaseHyperEncoder (concrete h_a realization)
# ----------------------------------------------------------------------------
class BaseHyperEncoder:
    def __init__(self, latent_ch=4, hyper_ch=32, num_downscale=2, key=None):
        self.num_downscale = num_downscale
        self.latent_ch = latent_ch
        self.hyper_ch = hyper_ch

        if key is None:
            key = jax.random.PRNGKey(0)
        self.layers = []  # (weight OIHW, bias, stride, pad)

        key, k_w, k_b = jax.random.split(key, 3)
        w0 = 0.05 * jax.random.normal(k_w, (hyper_ch, latent_ch, 3, 3), jnp.float32)
        b0 = 0.01 * jax.random.normal(k_b, (hyper_ch,), jnp.float32)
        self.layers.append((w0, b0, 1, 1))

        for _ in range(num_downscale):
            key, k_w, k_b = jax.random.split(key, 3)
            w = 0.05 * jax.random.normal(k_w, (hyper_ch, hyper_ch, 5, 5), jnp.float32)
            b = 0.01 * jax.random.normal(k_b, (hyper_ch,), jnp.float32)
            self.layers.append((w, b, 2, 2))

        self._cache = {}   # (N, H, W) -> (constants, pallas callable, out geometry)

    def _build(self, n, h, w):
        cache_key = (n, h, w)
        if cache_key in self._cache:
            return self._cache[cache_key]

        rh_list, m_list, bias_list = [], [], []
        cur_h, cur_w, cur_c = h, w, self.latent_ch
        for (wt, bi, stride, pad) in self.layers:
            rhall, m, brow, ho, wo, cout = _fold_conv_constants(
                wt, bi, stride, pad, n, cur_h, cur_w)
            rh_list.append(rhall)
            m_list.append(m)
            bias_list.append(brow)
            cur_h, cur_w, cur_c = ho, wo, cout

        out_rows = n * cur_h
        out_cols = cur_w * cur_c

        def full_spec(shape):
            zeros = (0,) * len(shape)
            return pl.BlockSpec(shape, lambda i, _z=zeros: _z)

        in_shapes = ([(n * h, w * self.latent_ch)]
                     + [tuple(a.shape) for a in rh_list]
                     + [tuple(a.shape) for a in m_list]
                     + [tuple(a.shape) for a in bias_list])

        call = pl.pallas_call(
            _encoder_kernel,
            out_shape=jax.ShapeDtypeStruct((out_rows, out_cols), jnp.float32),
            grid_spec=pltpu.PrefetchScalarGridSpec(
                num_scalar_prefetch=0,
                grid=(1,),                       # whole encoder = one grid step
                in_specs=[full_spec(s) for s in in_shapes],
                out_specs=full_spec((out_rows, out_cols)),
            ),
            compiler_params=pltpu.CompilerParams(
                dimension_semantics=("arbitrary",)),
        )

        entry = (rh_list, m_list, bias_list, call, (cur_h, cur_w, cur_c))
        self._cache[cache_key] = entry
        return entry

    def __call__(self, x_nchw):
        n, c, h, w = x_nchw.shape
        assert c == self.latent_ch
        rh_list, m_list, bias_list, call, (ho, wo, co) = self._build(n, h, w)

        # One-off layout glue (tiny): NCHW -> 2-D (N*H, W*C) lane-dense layout.
        x2d = jnp.transpose(x_nchw, (0, 2, 3, 1)).reshape(n * h, w * c)
        x2d = x2d.astype(jnp.float32)

        out2d = call(x2d, *rh_list, *m_list, *bias_list)

        out = out2d.reshape(n, ho, wo, co)
        return jnp.transpose(out, (0, 3, 1, 2))   # NHWC -> NCHW


if __name__ == "__main__":
    key = jax.random.PRNGKey(0)
    k_x, k_p = jax.random.split(key)

    # small shapes: batch=2, latent channels=4, spatial=16, hyper channels=32
    x = jax.random.normal(k_x, (2, 4, 16, 16), jnp.float32)   # NCHW

    enc = BaseHyperEncoder(latent_ch=4, hyper_ch=32, num_downscale=2, key=k_p)
    z = enc(x)
    z = jax.block_until_ready(z)

    assert z.shape == (2, 32, 4, 4), z.shape      # 16 -> 8 -> 4 (two downscales)
    assert bool(jnp.all(jnp.isfinite(z)))

    # Pure-JAX f32 reference (same conv stack) to validate the folded-matmul kernel.
    def _ref_forward(inp):
        y = inp
        for idx, (wt, bi, stride, pad) in enumerate(enc.layers):
            y = jax.lax.conv_general_dilated(
                y, wt, window_strides=(stride, stride),
                padding=[(pad, pad), (pad, pad)],
                dimension_numbers=("NCHW", "OIHW", "NCHW"))
            y = y + bi[None, :, None, None]
            if idx < len(enc.layers) - 1:
                y = jnp.maximum(y, 0.0)
        return y

    z_ref = _ref_forward(x)
    err = float(jnp.max(jnp.abs(z - z_ref)))
    assert err < 3e-2, f"max abs error vs f32 reference: {err}"

    print("KERNEL_OK")
</pallas_src>

<mosaic_0001>
module attributes {stable_mosaic.version = 11 : i64} {
  func.func @_encoder_kernel(%arg0: i32, %arg1: memref<32x64xf32, #tpu.memory_space<vmem>>, %arg2: memref<96x32xbf16, #tpu.memory_space<vmem>>, %arg3: memref<80x32xbf16, #tpu.memory_space<vmem>>, %arg4: memref<40x16xbf16, #tpu.memory_space<vmem>>, %arg5: memref<3x64x512xbf16, #tpu.memory_space<vmem>>, %arg6: memref<5x512x256xbf16, #tpu.memory_space<vmem>>, %arg7: memref<5x256x128xbf16, #tpu.memory_space<vmem>>, %arg8: memref<1x512xf32, #tpu.memory_space<vmem>>, %arg9: memref<1x256xf32, #tpu.memory_space<vmem>>, %arg10: memref<1x128xf32, #tpu.memory_space<vmem>>, %arg11: memref<8x128xf32, #tpu.memory_space<vmem>>) attributes {dimension_semantics = [#tpu.dimension_semantics<arbitrary>], iteration_bounds = array<i64: 1>, scalar_prefetch = 0 : i64, scratch_operands = 0 : i64, tpu.core_type = #tpu.core_type<tc>, window_params = [{pipeline_mode = #tpu.pipeline_mode<synchronous>, transform_indices = @transform_0, window_bounds = array<i64: 32, 64>}, {pipeline_mode = #tpu.pipeline_mode<synchronous>, transform_indices = @transform_1, window_bounds = array<i64: 96, 32>}, {pipeline_mode = #tpu.pipeline_mode<synchronous>, transform_indices = @transform_2, window_bounds = array<i64: 80, 32>}, {pipeline_mode = #tpu.pipeline_mode<synchronous>, transform_indices = @transform_3, window_bounds = array<i64: 40, 16>}, {pipeline_mode = #tpu.pipeline_mode<synchronous>, transform_indices = @transform_4, window_bounds = array<i64: 3, 64, 512>}, {pipeline_mode = #tpu.pipeline_mode<synchronous>, transform_indices = @transform_5, window_bounds = array<i64: 5, 512, 256>}, {pipeline_mode = #tpu.pipeline_mode<synchronous>, transform_indices = @transform_6, window_bounds = array<i64: 5, 256, 128>}, {pipeline_mode = #tpu.pipeline_mode<synchronous>, transform_indices = @transform_7, window_bounds = array<i64: 1, 512>}, {pipeline_mode = #tpu.pipeline_mode<synchronous>, transform_indices = @transform_8, window_bounds = array<i64: 1, 256>}, {pipeline_mode = #tpu.pipeline_mode<synchronous>, transform_indices = @transform_9, window_bounds = array<i64: 1, 128>}, {pipeline_mode = #tpu.pipeline_mode<synchronous>, transform_indices = @transform_10, window_bounds = array<i64: 8, 128>}]} {
    %c0 = arith.constant 0 : index
    %c0_0 = arith.constant 0 : index
    %0 = vector.load %arg1[%c0, %c0_0] : memref<32x64xf32, #tpu.memory_space<vmem>>, vector<32x64xf32>
    %1 = arith.truncf %0 : vector<32x64xf32> to vector<32x64xbf16>
    %c0_1 = arith.constant 0 : index
    %c0_2 = arith.constant 0 : index
    %2 = vector.load %arg2[%c0_1, %c0_2] : memref<96x32xbf16, #tpu.memory_space<vmem>>, vector<96x32xbf16>
    %cst = arith.constant dense<0.000000e+00> : vector<96x64xf32>
    %3 = tpu.matmul %2, %1, %cst {dimension_numbers = #tpu.dot_dimension_numbers<[1], [0], [0], [1], [0, 0, 1, 1], [], []>} : vector<96x32xbf16>, vector<32x64xbf16>, vector<96x64xf32> -> vector<96x64xf32>
    %4 = arith.truncf %3 : vector<96x64xf32> to vector<96x64xbf16>
    %5 = vector.extract_strided_slice %4 {offsets = [0, 0], sizes = [32, 64], strides = [1, 1]} : vector<96x64xbf16> to vector<32x64xbf16>
    %c0_3 = arith.constant 0 : index
    %c0_4 = arith.constant 0 : index
    %c0_5 = arith.constant 0 : index
    %6 = vector.load %arg5[%c0_3, %c0_4, %c0_5] : memref<3x64x512xbf16, #tpu.memory_space<vmem>>, vector<1x64x512xbf16>
    %7 = vector.shape_cast %6 : vector<1x64x512xbf16> to vector<64x512xbf16>
    %cst_6 = arith.constant dense<0.000000e+00> : vector<32x512xf32>
    %8 = tpu.matmul %5, %7, %cst_6 {dimension_numbers = #tpu.dot_dimension_numbers<[1], [0], [0], [1], [0, 0, 1, 1], [], []>} : vector<32x64xbf16>, vector<64x512xbf16>, vector<32x512xf32> -> vector<32x512xf32>
    %9 = vector.extract_strided_slice %4 {offsets = [32, 0], sizes = [32, 64], strides = [1, 1]} : vector<96x64xbf16> to vector<32x64xbf16>
    %c1 = arith.constant 1 : index
    %c0_7 = arith.constant 0 : index
    %c0_8 = arith.constant 0 : index
    %10 = vector.load %arg5[%c1, %c0_7, %c0_8] : memref<3x64x512xbf16, #tpu.memory_space<vmem>>, vector<1x64x512xbf16>
    %11 = vector.shape_cast %10 : vector<1x64x512xbf16> to vector<64x512xbf16>
    %cst_9 = arith.constant dense<0.000000e+00> : vector<32x512xf32>
    %12 = tpu.matmul %9, %11, %cst_9 {dimension_numbers = #tpu.dot_dimension_numbers<[1], [0], [0], [1], [0, 0, 1, 1], [], []>} : vector<32x64xbf16>, vector<64x512xbf16>, vector<32x512xf32> -> vector<32x512xf32>
    %13 = arith.addf %8, %12 : vector<32x512xf32>
    %14 = vector.extract_strided_slice %4 {offsets = [64, 0], sizes = [32, 64], strides = [1, 1]} : vector<96x64xbf16> to vector<32x64xbf16>
    %c2 = arith.constant 2 : index
    %c0_10 = arith.constant 0 : index
    %c0_11 = arith.constant 0 : index
    %15 = vector.load %arg5[%c2, %c0_10, %c0_11] : memref<3x64x512xbf16, #tpu.memory_space<vmem>>, vector<1x64x512xbf16>
    %16 = vector.shape_cast %15 : vector<1x64x512xbf16> to vector<64x512xbf16>
    %cst_12 = arith.constant dense<0.000000e+00> : vector<32x512xf32>
    %17 = tpu.matmul %14, %16, %cst_12 {dimension_numbers = #tpu.dot_dimension_numbers<[1], [0], [0], [1], [0, 0, 1, 1], [], []>} : vector<32x64xbf16>, vector<64x512xbf16>, vector<32x512xf32> -> vector<32x512xf32>
    %18 = arith.addf %13, %17 : vector<32x512xf32>
    %c0_13 = arith.constant 0 : index
    %c0_14 = arith.constant 0 : index
    %19 = vector.load %arg8[%c0_13, %c0_14] : memref<1x512xf32, #tpu.memory_space<vmem>>, vector<1x512xf32>
    %20 = vector.broadcast %19 : vector<1x512xf32> to vector<32x512xf32>
    %21 = arith.addf %18, %20 : vector<32x512xf32>
    %cst_15 = arith.constant 0.000000e+00 : f32
    %22 = vector.broadcast %cst_15 : f32 to vector<32x512xf32>
    %23 = arith.maximumf %21, %22 : vector<32x512xf32>
    %24 = arith.truncf %23 : vector<32x512xf32> to vector<32x512xbf16>
    %c0_16 = arith.constant 0 : index
    %c0_17 = arith.constant 0 : index
    %25 = vector.load %arg3[%c0_16, %c0_17] : memref<80x32xbf16, #tpu.memory_space<vmem>>, vector<80x32xbf16>
    %cst_18 = arith.constant dense<0.000000e+00> : vector<80x512xf32>
    %26 = tpu.matmul %25, %24, %cst_18 {dimension_numbers = #tpu.dot_dimension_numbers<[1], [0], [0], [1], [0, 0, 1, 1], [], []>} : vector<80x32xbf16>, vector<32x512xbf16>, vector<80x512xf32> -> vector<80x512xf32>
    %27 = arith.truncf %26 : vector<80x512xf32> to vector<80x512xbf16>
    %28 = vector.extract_strided_slice %27 {offsets = [0, 0], sizes = [16, 512], strides = [1, 1]} : vector<80x512xbf16> to vector<16x512xbf16>
    %c0_19 = arith.constant 0 : index
    %c0_20 = arith.constant 0 : index
    %c0_21 = arith.constant 0 : index
    %29 = vector.load %arg6[%c0_19, %c0_20, %c0_21] : memref<5x512x256xbf16, #tpu.memory_space<vmem>>, vector<1x512x256xbf16>
    %30 = vector.shape_cast %29 : vector<1x512x256xbf16> to vector<512x256xbf16>
    %cst_22 = arith.constant dense<0.000000e+00> : vector<16x256xf32>
    %31 = tpu.matmul %28, %30, %cst_22 {dimension_numbers = #tpu.dot_dimension_numbers<[1], [0], [0], [1], [0, 0, 1, 1], [], []>} : vector<16x512xbf16>, vector<512x256xbf16>, vector<16x256xf32> -> vector<16x256xf32>
    %32 = vector.extract_strided_slice %27 {offsets = [16, 0], sizes = [16, 512], strides = [1, 1]} : vector<80x512xbf16> to vector<16x512xbf16>
    %c1_23 = arith.constant 1 : index
    %c0_24 = arith.constant 0 : index
    %c0_25 = arith.constant 0 : index
    %33 = vector.load %arg6[%c1_23, %c0_24, %c0_25] : memref<5x512x256xbf16, #tpu.memory_space<vmem>>, vector<1x512x256xbf16>
    %34 = vector.shape_cast %33 : vector<1x512x256xbf16> to vector<512x256xbf16>
    %cst_26 = arith.constant dense<0.000000e+00> : vector<16x256xf32>
    %35 = tpu.matmul %32, %34, %cst_26 {dimension_numbers = #tpu.dot_dimension_numbers<[1], [0], [0], [1], [0, 0, 1, 1], [], []>} : vector<16x512xbf16>, vector<512x256xbf16>, vector<16x256xf32> -> vector<16x256xf32>
    %36 = arith.addf %31, %35 : vector<16x256xf32>
    %37 = vector.extract_strided_slice %27 {offsets = [32, 0], sizes = [16, 512], strides = [1, 1]} : vector<80x512xbf16> to vector<16x512xbf16>
    %c2_27 = arith.constant 2 : index
    %c0_28 = arith.constant 0 : index
    %c0_29 = arith.constant 0 : index
    %38 = vector.load %arg6[%c2_27, %c0_28, %c0_29] : memref<5x512x256xbf16, #tpu.memory_space<vmem>>, vector<1x512x256xbf16>
    %39 = vector.shape_cast %38 : vector<1x512x256xbf16> to vector<512x256xbf16>
    %cst_30 = arith.constant dense<0.000000e+00> : vector<16x256xf32>
    %40 = tpu.matmul %37, %39, %cst_30 {dimension_numbers = #tpu.dot_dimension_numbers<[1], [0], [0], [1], [0, 0, 1, 1], [], []>} : vector<16x512xbf16>, vector<512x256xbf16>, vector<16x256xf32> -> vector<16x256xf32>
    %41 = arith.addf %36, %40 : vector<16x256xf32>
    %42 = vector.extract_strided_slice %27 {offsets = [48, 0], sizes = [16, 512], strides = [1, 1]} : vector<80x512xbf16> to vector<16x512xbf16>
    %c3 = arith.constant 3 : index
    %c0_31 = arith.constant 0 : index
    %c0_32 = arith.constant 0 : index
    %43 = vector.load %arg6[%c3, %c0_31, %c0_32] : memref<5x512x256xbf16, #tpu.memory_space<vmem>>, vector<1x512x256xbf16>
    %44 = vector.shape_cast %43 : vector<1x512x256xbf16> to vector<512x256xbf16>
    %cst_33 = arith.constant dense<0.000000e+00> : vector<16x256xf32>
    %45 = tpu.matmul %42, %44, %cst_33 {dimension_numbers = #tpu.dot_dimension_numbers<[1], [0], [0], [1], [0, 0, 1, 1], [], []>} : vector<16x512xbf16>, vector<512x256xbf16>, vector<16x256xf32> -> vector<16x256xf32>
    %46 = arith.addf %41, %45 : vector<16x256xf32>
    %47 = vector.extract_strided_slice %27 {offsets = [64, 0], sizes = [16, 512], strides = [1, 1]} : vector<80x512xbf16> to vector<16x512xbf16>
    %c4 = arith.constant 4 : index
    %c0_34 = arith.constant 0 : index
    %c0_35 = arith.constant 0 : index
    %48 = vector.load %arg6[%c4, %c0_34, %c0_35] : memref<5x512x256xbf16, #tpu.memory_space<vmem>>, vector<1x512x256xbf16>
    %49 = vector.shape_cast %48 : vector<1x512x256xbf16> to vector<512x256xbf16>
    %cst_36 = arith.constant dense<0.000000e+00> : vector<16x256xf32>
    %50 = tpu.matmul %47, %49, %cst_36 {dimension_numbers = #tpu.dot_dimension_numbers<[1], [0], [0], [1], [0, 0, 1, 1], [], []>} : vector<16x512xbf16>, vector<512x256xbf16>, vector<16x256xf32> -> vector<16x256xf32>
    %51 = arith.addf %46, %50 : vector<16x256xf32>
    %c0_37 = arith.constant 0 : index
    %c0_38 = arith.constant 0 : index
    %52 = vector.load %arg9[%c0_37, %c0_38] : memref<1x256xf32, #tpu.memory_space<vmem>>, vector<1x256xf32>
    %53 = vector.broadcast %52 : vector<1x256xf32> to vector<16x256xf32>
    %54 = arith.addf %51, %53 : vector<16x256xf32>
    %cst_39 = arith.constant 0.000000e+00 : f32
    %55 = vector.broadcast %cst_39 : f32 to vector<16x256xf32>
    %56 = arith.maximumf %54, %55 : vector<16x256xf32>
    %57 = arith.truncf %56 : vector<16x256xf32> to vector<16x256xbf16>
    %c0_40 = arith.constant 0 : index
    %c0_41 = arith.constant 0 : index
    %58 = vector.load %arg4[%c0_40, %c0_41] : memref<40x16xbf16, #tpu.memory_space<vmem>>, vector<40x16xbf16>
    %cst_42 = arith.constant dense<0.000000e+00> : vector<40x256xf32>
    %59 = tpu.matmul %58, %57, %cst_42 {dimension_numbers = #tpu.dot_dimension_numbers<[1], [0], [0], [1], [0, 0, 1, 1], [], []>} : vector<40x16xbf16>, vector<16x256xbf16>, vector<40x256xf32> -> vector<40x256xf32>
    %60 = arith.truncf %59 : vector<40x256xf32> to vector<40x256xbf16>
    %61 = vector.extract_strided_slice %60 {offsets = [0, 0], sizes = [8, 256], strides = [1, 1]} : vector<40x256xbf16> to vector<8x256xbf16>
    %c0_43 = arith.constant 0 : index
    %c0_44 = arith.constant 0 : index
    %c0_45 = arith.constant 0 : index
    %62 = vector.load %arg7[%c0_43, %c0_44, %c0_45] : memref<5x256x128xbf16, #tpu.memory_space<vmem>>, vector<1x256x128xbf16>
    %63 = vector.shape_cast %62 : vector<1x256x128xbf16> to vector<256x128xbf16>
    %cst_46 = arith.constant dense<0.000000e+00> : vector<8x128xf32>
    %64 = tpu.matmul %61, %63, %cst_46 {dimension_numbers = #tpu.dot_dimension_numbers<[1], [0], [0], [1], [0, 0, 1, 1], [], []>} : vector<8x256xbf16>, vector<256x128xbf16>, vector<8x128xf32> -> vector<8x128xf32>
    %65 = vector.extract_strided_slice %60 {offsets = [8, 0], sizes = [8, 256], strides = [1, 1]} : vector<40x256xbf16> to vector<8x256xbf16>
    %c1_47 = arith.constant 1 : index
    %c0_48 = arith.constant 0 : index
    %c0_49 = arith.constant 0 : index
    %66 = vector.load %arg7[%c1_47, %c0_48, %c0_49] : memref<5x256x128xbf16, #tpu.memory_space<vmem>>, vector<1x256x128xbf16>
    %67 = vector.shape_cast %66 : vector<1x256x128xbf16> to vector<256x128xbf16>
    %cst_50 = arith.constant dense<0.000000e+00> : vector<8x128xf32>
    %68 = tpu.matmul %65, %67, %cst_50 {dimension_numbers = #tpu.dot_dimension_numbers<[1], [0], [0], [1], [0, 0, 1, 1], [], []>} : vector<8x256xbf16>, vector<256x128xbf16>, vector<8x128xf32> -> vector<8x128xf32>
    %69 = arith.addf %64, %68 : vector<8x128xf32>
    %70 = vector.extract_strided_slice %60 {offsets = [16, 0], sizes = [8, 256], strides = [1, 1]} : vector<40x256xbf16> to vector<8x256xbf16>
    %c2_51 = arith.constant 2 : index
    %c0_52 = arith.constant 0 : index
    %c0_53 = arith.constant 0 : index
    %71 = vector.load %arg7[%c2_51, %c0_52, %c0_53] : memref<5x256x128xbf16, #tpu.memory_space<vmem>>, vector<1x256x128xbf16>
    %72 = vector.shape_cast %71 : vector<1x256x128xbf16> to vector<256x128xbf16>
    %cst_54 = arith.constant dense<0.000000e+00> : vector<8x128xf32>
    %73 = tpu.matmul %70, %72, %cst_54 {dimension_numbers = #tpu.dot_dimension_numbers<[1], [0], [0], [1], [0, 0, 1, 1], [], []>} : vector<8x256xbf16>, vector<256x128xbf16>, vector<8x128xf32> -> vector<8x128xf32>
    %74 = arith.addf %69, %73 : vector<8x128xf32>
    %75 = vector.extract_strided_slice %60 {offsets = [24, 0], sizes = [8, 256], strides = [1, 1]} : vector<40x256xbf16> to vector<8x256xbf16>
    %c3_55 = arith.constant 3 : index
    %c0_56 = arith.constant 0 : index
    %c0_57 = arith.constant 0 : index
    %76 = vector.load %arg7[%c3_55, %c0_56, %c0_57] : memref<5x256x128xbf16, #tpu.memory_space<vmem>>, vector<1x256x128xbf16>
    %77 = vector.shape_cast %76 : vector<1x256x128xbf16> to vector<256x128xbf16>
    %cst_58 = arith.constant dense<0.000000e+00> : vector<8x128xf32>
    %78 = tpu.matmul %75, %77, %cst_58 {dimension_numbers = #tpu.dot_dimension_numbers<[1], [0], [0], [1], [0, 0, 1, 1], [], []>} : vector<8x256xbf16>, vector<256x128xbf16>, vector<8x128xf32> -> vector<8x128xf32>
    %79 = arith.addf %74, %78 : vector<8x128xf32>
    %80 = vector.extract_strided_slice %60 {offsets = [32, 0], sizes = [8, 256], strides = [1, 1]} : vector<40x256xbf16> to vector<8x256xbf16>
    %c4_59 = arith.constant 4 : index
    %c0_60 = arith.constant 0 : index
    %c0_61 = arith.constant 0 : index
    %81 = vector.load %arg7[%c4_59, %c0_60, %c0_61] : memref<5x256x128xbf16, #tpu.memory_space<vmem>>, vector<1x256x128xbf16>
    %82 = vector.shape_cast %81 : vector<1x256x128xbf16> to vector<256x128xbf16>
    %cst_62 = arith.constant dense<0.000000e+00> : vector<8x128xf32>
    %83 = tpu.matmul %80, %82, %cst_62 {dimension_numbers = #tpu.dot_dimension_numbers<[1], [0], [0], [1], [0, 0, 1, 1], [], []>} : vector<8x256xbf16>, vector<256x128xbf16>, vector<8x128xf32> -> vector<8x128xf32>
    %84 = arith.addf %79, %83 : vector<8x128xf32>
    %c0_63 = arith.constant 0 : index
    %c0_64 = arith.constant 0 : index
    %85 = vector.load %arg10[%c0_63, %c0_64] : memref<1x128xf32, #tpu.memory_space<vmem>>, vector<1x128xf32>
    %86 = vector.broadcast %85 : vector<1x128xf32> to vector<8x128xf32>
    %87 = arith.addf %84, %86 : vector<8x128xf32>
    %c0_65 = arith.constant 0 : index
    %c0_66 = arith.constant 0 : index
    %88 = vector.load %arg11[%c0_65, %c0_66] : memref<8x128xf32, #tpu.memory_space<vmem>>, vector<8x128xf32>
    tpu.vector_store %arg11[%c0_65, %c0_66], %87 {strides = array<i32>} : memref<8x128xf32, #tpu.memory_space<vmem>>, vector<8x128xf32>,
    return
  }
  func.func @transform_0(%arg0: i32) -> (i32, i32) {
    %c0_i32 = arith.constant 0 : i32
    %c0_i32_0 = arith.constant 0 : i32
    %c0_i32_1 = arith.constant 0 : i32
    return %c0_i32, %c0_i32_0 : i32, i32
  }
  func.func @transform_1(%arg0: i32) -> (i32, i32) {
    %c0_i32 = arith.constant 0 : i32
    %c0_i32_0 = arith.constant 0 : i32
    %c0_i32_1 = arith.constant 0 : i32
    return %c0_i32, %c0_i32_0 : i32, i32
  }
  func.func @transform_2(%arg0: i32) -> (i32, i32) {
    %c0_i32 = arith.constant 0 : i32
    %c0_i32_0 = arith.constant 0 : i32
    %c0_i32_1 = arith.constant 0 : i32
    return %c0_i32, %c0_i32_0 : i32, i32
  }
  func.func @transform_3(%arg0: i32) -> (i32, i32) {
    %c0_i32 = arith.constant 0 : i32
    %c0_i32_0 = arith.constant 0 : i32
    %c0_i32_1 = arith.constant 0 : i32
    return %c0_i32, %c0_i32_0 : i32, i32
  }
  func.func @transform_4(%arg0: i32) -> (i32, i32, i32) {
    %c0_i32 = arith.constant 0 : i32
    %c0_i32_0 = arith.constant 0 : i32
    %c0_i32_1 = arith.constant 0 : i32
    %c0_i32_2 = arith.constant 0 : i32
    return %c0_i32, %c0_i32_0, %c0_i32_1 : i32, i32, i32
  }
  func.func @transform_5(%arg0: i32) -> (i32, i32, i32) {
    %c0_i32 = arith.constant 0 : i32
    %c0_i32_0 = arith.constant 0 : i32
    %c0_i32_1 = arith.constant 0 : i32
    %c0_i32_2 = arith.constant 0 : i32
    return %c0_i32, %c0_i32_0, %c0_i32_1 : i32, i32, i32
  }
  func.func @transform_6(%arg0: i32) -> (i32, i32, i32) {
    %c0_i32 = arith.constant 0 : i32
    %c0_i32_0 = arith.constant 0 : i32
    %c0_i32_1 = arith.constant 0 : i32
    %c0_i32_2 = arith.constant 0 : i32
    return %c0_i32, %c0_i32_0, %c0_i32_1 : i32, i32, i32
  }
  func.func @transform_7(%arg0: i32) -> (i32, i32) {
    %c0_i32 = arith.constant 0 : i32
    %c0_i32_0 = arith.constant 0 : i32
    %c0_i32_1 = arith.constant 0 : i32
    return %c0_i32, %c0_i32_0 : i32, i32
  }
  func.func @transform_8(%arg0: i32) -> (i32, i32) {
    %c0_i32 = arith.constant 0 : i32
    %c0_i32_0 = arith.constant 0 : i32
    %c0_i32_1 = arith.constant 0 : i32
    return %c0_i32, %c0_i32_0 : i32, i32
  }
  func.func @transform_9(%arg0: i32) -> (i32, i32) {
    %c0_i32 = arith.constant 0 : i32
    %c0_i32_0 = arith.constant 0 : i32
    %c0_i32_1 = arith.constant 0 : i32
    return %c0_i32, %c0_i32_0 : i32, i32
  }
  func.func @transform_10(%arg0: i32) -> (i32, i32) {
    %c0_i32 = arith.constant 0 : i32
    %c0_i32_0 = arith.constant 0 : i32
    %c0_i32_1 = arith.constant 0 : i32
    return %c0_i32, %c0_i32_0 : i32, i32
  }
}

</mosaic_0001>

<llo_original>
// kernel: tpu_custom_call.1
$region0: #{tpu_custom_call.1}
  #allocation0 [shape = 'u32[]', space=smem, size = 0x4, offset = 0x4, fixed_abs, tag = 'smem constant byte address 0x4 - core index']
  #allocation1 [shape = 'u32[72,128]{1,0:T(1,128)}', space=vmem, size = 0x9000, scoped, tag = 'internal scratch']
  %s0 = inlined_call_operand.hbm [shape: f32[32,64], index: 0, kind: input, shape index: {}]
  %s1 = inlined_call_operand.vmem [shape: bf16[96,32], index: 1, kind: input, shape index: {}]
  %s2 = inlined_call_operand.vmem [shape: bf16[80,32], index: 2, kind: input, shape index: {}]
  %s3 = inlined_call_operand.vmem [shape: bf16[40,16], index: 3, kind: input, shape index: {}]
  %s4 = inlined_call_operand.hbm [shape: bf16[3,64,512], index: 4, kind: input, shape index: {}]
  %s5 = inlined_call_operand.hbm [shape: bf16[5,512,256], index: 5, kind: input, shape index: {}]
  %s6 = inlined_call_operand.hbm [shape: bf16[5,256,128], index: 6, kind: input, shape index: {}]
  %s7 = inlined_call_operand.hbm [shape: f32[1,512], index: 7, kind: input, shape index: {}]
  %s8 = inlined_call_operand.hbm [shape: f32[1,256], index: 8, kind: input, shape index: {}]
  %s9 = inlined_call_operand.hbm [shape: f32[1,128], index: 9, kind: input, shape index: {}]
  %s10 = inlined_call_operand.hbm [shape: f32[8,128], index: 10, kind: output, shape index: {}]
  %s11 = sld [smem:[#allocation0]]
  $region78: #{tpu_custom_call.1} parent=0
    _
  %s13 = ssub.s32 1, %s11
  %s14 = scalar_select 0, %s13, %s11
  $region1: #{tpu_custom_call.1} parent=0
    #allocation2 [shape = 'u8[16384]{0}', space=vmem, size = 0x4000, scoped, tag = 'input window, operand 0, single buffered']
    #allocation3 [shape = 's32[1]{0}', space=sflag, size = 0x4, scoped, tag = 'scoped memory for tpu_custom_call.1']
    #allocation4 [shape = 's32[1]{0}', space=sflag, size = 0x4, scoped, tag = 'scoped memory for tpu_custom_call.1']
    #allocation5 [shape = 'u8[196608]{0}', space=vmem, size = 0x30000, scoped, tag = 'input window, operand 4, single buffered']
    #allocation6 [shape = 's32[1]{0}', space=sflag, size = 0x4, scoped, tag = 'scoped memory for tpu_custom_call.1']
    #allocation7 [shape = 'u8[1310720]{0}', space=vmem, size = 0x140000, scoped, tag = 'input window, operand 5, single buffered']
    #allocation8 [shape = 'u8[327680]{0}', space=vmem, size = 0x50000, scoped, tag = 'input window, operand 6, single buffered']
    #allocation9 [shape = 's32[1]{0}', space=sflag, size = 0x4, scoped, tag = 'scoped memory for tpu_custom_call.1']
    #allocation10 [shape = 'u8[2048]{0}', space=vmem, size = 0x800, scoped, tag = 'input window, operand 7, single buffered']
    #allocation11 [shape = 'u8[1024]{0}', space=vmem, size = 0x400, scoped, tag = 'input window, operand 8, single buffered']
    #allocation12 [shape = 's32[1]{0}', space=sflag, size = 0x4, scoped, tag = 'scoped memory for tpu_custom_call.1']
    #allocation13 [shape = 'u8[512]{0}', space=vmem, size = 0x400, scoped, tag = 'input window, operand 9, single buffered']
    #allocation14 [shape = 'u8[4096]{0}', space=vmem, size = 0x1000, scoped, tag = 'output window, operand 0, single buffered']
    %15 = vsyncpa [#allocation3], 0
    %16 = vsyncpa [#allocation6], 0
    %17 = vsyncpa [#allocation9], 0
    %18 = vsyncpa [#allocation12], 0
    %19 = vsyncpa [#allocation4], 0
    // Predicated region
    $region2: #{tpu_custom_call.1} parent=1 // pred_check
      _
    $region3: #{tpu_custom_call.1} parent=1 // pred_check_branch
      %21 = sbr.rel (0) target = $region5
    $region4: #{tpu_custom_call.1} parent=1 // pred_region
      %23 = vsyncadd [#allocation3], 0
      %s24 = sshll.u32 %s0, 4
      %s25 = int_to_ptr.hbm [resolvable:$true] %s24
      %s26 = sshll.u32 [#allocation2], 4
      %s27 = int_to_ptr.vmem [resolvable:$true] %s26
      %32 = dma.hbm_to_vmem [thread:$0]  %s25, 512, %s27, [#allocation3], 128, 128, 8
    $region5: #{tpu_custom_call.1} parent=1 // pred_fallthru
      _
    // Predicated region
    $region6: #{tpu_custom_call.1} parent=1 // pred_check
      _
    $region7: #{tpu_custom_call.1} parent=1 // pred_check_branch
      %34 = sbr.rel (0) target = $region9
    $region8: #{tpu_custom_call.1} parent=1 // pred_region
      _
    $region9: #{tpu_custom_call.1} parent=1 // pred_fallthru
      _
    // Predicated region
    $region10: #{tpu_custom_call.1} parent=1 // pred_check
      _
    $region11: #{tpu_custom_call.1} parent=1 // pred_check_branch
      %36 = sbr.rel (0) target = $region13
    $region12: #{tpu_custom_call.1} parent=1 // pred_region
      _
    $region13: #{tpu_custom_call.1} parent=1 // pred_fallthru
      _
    // Predicated region
    $region14: #{tpu_custom_call.1} parent=1 // pred_check
      _
    $region15: #{tpu_custom_call.1} parent=1 // pred_check_branch
      %38 = sbr.rel (0) target = $region17
    $region16: #{tpu_custom_call.1} parent=1 // pred_region
      _
    $region17: #{tpu_custom_call.1} parent=1 // pred_fallthru
      _
    // Predicated region
    $region18: #{tpu_custom_call.1} parent=1 // pred_check
      _
    $region19: #{tpu_custom_call.1} parent=1 // pred_check_branch
      %40 = sbr.rel (0) target = $region21
    $region20: #{tpu_custom_call.1} parent=1 // pred_region
      %42 = vsyncadd [#allocation6], 0
      %s43 = sshll.u32 %s4, 4
      %s44 = int_to_ptr.hbm [resolvable:$true] %s43
      %s45 = sshll.u32 [#allocation5], 4
      %s46 = int_to_ptr.vmem [resolvable:$true] %s45
      %51 = dma.hbm_to_vmem [thread:$0]  %s44, 6144, %s46, [#allocation6], 256, 256, 16
    $region21: #{tpu_custom_call.1} parent=1 // pred_fallthru
      _
    // Predicated region
    $region22: #{tpu_custom_call.1} parent=1 // pred_check
      _
    $region23: #{tpu_custom_call.1} parent=1 // pred_check_branch
      %53 = sbr.rel (0) target = $region25
    $region24: #{tpu_custom_call.1} parent=1 // pred_region
      %55 = vsyncadd [#allocation6], 0
      %s56 = sshll.u32 %s5, 4
      %s57 = int_to_ptr.hbm [resolvable:$true] %s56
      %s58 = sshll.u32 [#allocation7], 4
      %s59 = int_to_ptr.vmem [resolvable:$true] %s58
      %64 = dma.hbm_to_vmem [thread:$0]  %s57, 40960, %s59, [#allocation6], 128, 128, 8
    $region25: #{tpu_custom_call.1} parent=1 // pred_fallthru
      _
    // Predicated region
    $region26: #{tpu_custom_call.1} parent=1 // pred_check
      _
    $region27: #{tpu_custom_call.1} parent=1 // pred_check_branch
      %66 = sbr.rel (0) target = $region29
    $region28: #{tpu_custom_call.1} parent=1 // pred_region
      %68 = vsyncadd [#allocation9], 0
      %s69 = sshll.u32 %s6, 4
      %s70 = int_to_ptr.hbm [resolvable:$true] %s69
      %s71 = sshll.u32 [#allocation8], 4
      %s72 = int_to_ptr.vmem [resolvable:$true] %s71
      %77 = dma.hbm_to_vmem [thread:$0]  %s70, 10240, %s72, [#allocation9], 64, 64, 4
    $region29: #{tpu_custom_call.1} parent=1 // pred_fallthru
      _
    // Predicated region
    $region30: #{tpu_custom_call.1} parent=1 // pred_check
      _
    $region31: #{tpu_custom_call.1} parent=1 // pred_check_branch
      %79 = sbr.rel (0) target = $region33
    $region32: #{tpu_custom_call.1} parent=1 // pred_region
      %81 = vsyncadd [#allocation9], 0
      %s83 = sshll.u32 %s7, 4
      %s84 = int_to_ptr.hbm [resolvable:$true] %s83
      %s85 = sshll.u32 [#allocation10], 4
      %s86 = int_to_ptr.vmem [resolvable:$true] %s85
      %88 = dma.hbm_to_vmem [thread:$0]  %s84, 64, %s86, [#allocation9]
    $region33: #{tpu_custom_call.1} parent=1 // pred_fallthru
      _
    // Predicated region
    $region34: #{tpu_custom_call.1} parent=1 // pred_check
      _
    $region35: #{tpu_custom_call.1} parent=1 // pred_check_branch
      %90 = sbr.rel (0) target = $region37
    $region36: #{tpu_custom_call.1} parent=1 // pred_region
      %92 = vsyncadd [#allocation12], 0
      %s94 = sshll.u32 %s8, 4
      %s95 = int_to_ptr.hbm [resolvable:$true] %s94
      %s96 = sshll.u32 [#allocation11], 4
      %s97 = int_to_ptr.vmem [resolvable:$true] %s96
      %99 = dma.hbm_to_vmem [thread:$0]  %s95, 32, %s97, [#allocation12]
    $region37: #{tpu_custom_call.1} parent=1 // pred_fallthru
      _
    // Predicated region
    $region38: #{tpu_custom_call.1} parent=1 // pred_check
      _
    $region39: #{tpu_custom_call.1} parent=1 // pred_check_branch
      %101 = sbr.rel (0) target = $region41
    $region40: #{tpu_custom_call.1} parent=1 // pred_region
      %103 = vsyncadd [#allocation12], 0
      %s105 = sshll.u32 %s9, 4
      %s106 = int_to_ptr.hbm [resolvable:$true] %s105
      %s107 = sshll.u32 [#allocation13], 4
      %s108 = int_to_ptr.vmem [resolvable:$true] %s107
      %110 = dma.hbm_to_vmem [thread:$0]  %s106, 16, %s108, [#allocation12]
    $region41: #{tpu_custom_call.1} parent=1 // pred_fallthru
      _
    // Predicated region
    $region42: #{tpu_custom_call.1} parent=1 // pred_check
      _
    $region43: #{tpu_custom_call.1} parent=1 // pred_check_branch
      %112 = sbr.rel (0) target = $region45
    $region44: #{tpu_custom_call.1} parent=1 // pred_region
      %114 = dma.done [#allocation3], 512
    $region45: #{tpu_custom_call.1} parent=1 // pred_fallthru
      _
    // Predicated region
    $region46: #{tpu_custom_call.1} parent=1 // pred_check
      _
    $region47: #{tpu_custom_call.1} parent=1 // pred_check_branch
      %116 = sbr.rel (0) target = $region49
    $region48: #{tpu_custom_call.1} parent=1 // pred_region
      %118 = dma.done [#allocation6], 6144
    $region49: #{tpu_custom_call.1} parent=1 // pred_fallthru
      _
    // Predicated region
    $region50: #{tpu_custom_call.1} parent=1 // pred_check
      _
    $region51: #{tpu_custom_call.1} parent=1 // pred_check_branch
      %120 = sbr.rel (0) target = $region53
    $region52: #{tpu_custom_call.1} parent=1 // pred_region
      %122 = dma.done [#allocation6], 40960
    $region53: #{tpu_custom_call.1} parent=1 // pred_fallthru
      _
    // Predicated region
    $region54: #{tpu_custom_call.1} parent=1 // pred_check
      _
    $region55: #{tpu_custom_call.1} parent=1 // pred_check_branch
      %124 = sbr.rel (0) target = $region57
    $region56: #{tpu_custom_call.1} parent=1 // pred_region
      %126 = dma.done [#allocation9], 10240
    $region57: #{tpu_custom_call.1} parent=1 // pred_fallthru
      _
    // Predicated region
    $region58: #{tpu_custom_call.1} parent=1 // pred_check
      _
    $region59: #{tpu_custom_call.1} parent=1 // pred_check_branch
      %128 = sbr.rel (0) target = $region61
    $region60: #{tpu_custom_call.1} parent=1 // pred_region
      %130 = dma.done [#allocation9], 64
    $region61: #{tpu_custom_call.1} parent=1 // pred_fallthru
      _
    // Predicated region
    $region62: #{tpu_custom_call.1} parent=1 // pred_check
      _
    $region63: #{tpu_custom_call.1} parent=1 // pred_check_branch
      %132 = sbr.rel (0) target = $region65
    $region64: #{tpu_custom_call.1} parent=1 // pred_region
      %134 = dma.done [#allocation12], 32
    $region65: #{tpu_custom_call.1} parent=1 // pred_fallthru
      _
    // Predicated region
    $region66: #{tpu_custom_call.1} parent=1 // pred_check
      _
    $region67: #{tpu_custom_call.1} parent=1 // pred_check_branch
      %136 = sbr.rel (0) target = $region69
    $region68: #{tpu_custom_call.1} parent=1 // pred_region
      %138 = dma.done [#allocation12], 16
    $region69: #{tpu_custom_call.1} parent=1 // pred_fallthru
      _
    %v140 = vld [vmem:[#allocation2] sm:$0xff]
    %v141 = vld [vmem:[#allocation2 + $0x8] sm:$0xff]
    %v142 = vld [vmem:[#allocation2 + $0x10] sm:$0xff]
    %v143 = vld [vmem:[#allocation2 + $0x18] sm:$0xff]
    %v144 = vpack.c.bf16 %v141, %v140
    %v145 = vpack.c.bf16 %v143, %v142
    %v146 = vld [vmem:[%s1] sm:$0xf]
    %v147 = vld [vmem:[%s1 + $0x4] sm:$0xf]
    %v148 = vld [vmem:[%s1 + $0x8] sm:$0xf]
    %v149 = vld [vmem:[%s1 + $0xc] sm:$0xf]
    %v150 = vld [vmem:[%s1 + $0x10] sm:$0xf]
    %v151 = vld [vmem:[%s1 + $0x14] sm:$0xf]
    %v152 = vld [vmem:[%s1 + $0x18] sm:$0xf]
    %v153 = vld [vmem:[%s1 + $0x1c] sm:$0xf]
    %v154 = vld [vmem:[%s1 + $0x20] sm:$0xf]
    %v155 = vld [vmem:[%s1 + $0x24] sm:$0xf]
    %v156 = vld [vmem:[%s1 + $0x28] sm:$0xf]
    %v157 = vld [vmem:[%s1 + $0x2c] sm:$0xf]
    %v170 = vunpack.c.l.b16 %v146
    %v171 = vunpack.c.l.b16 %v147
    %v172 = vunpack.c.l.b16 %v148
    %v173 = vunpack.c.l.b16 %v149
    %v174 = vunpack.c.l.b16 %v150
    %v175 = vunpack.c.l.b16 %v151
    %v176 = vunpack.c.l.b16 %v152
    %v177 = vunpack.c.l.b16 %v153
    %v178 = vunpack.c.l.b16 %v154
    %v179 = vunpack.c.l.b16 %v155
    %v180 = vunpack.c.l.b16 %v156
    %v181 = vunpack.c.l.b16 %v157
    %v182 = vpack.c.b16 %v171, %v170
    %v183 = vpack.c.b16 %v173, %v172
    %v184 = vpack.c.b16 %v175, %v174
    %v185 = vpack.c.b16 %v177, %v176
    %v186 = vpack.c.b16 %v179, %v178
    %v187 = vpack.c.b16 %v181, %v180
    %vm188 = vcmask 261120
    %v190 = vsel %vm188, %v182, 0
    %v193 = vsel %vm188, %v183, 0
    %v196 = vsel %vm188, %v184, 0
    %v199 = vsel %vm188, %v185, 0
    %v202 = vsel %vm188, %v186, 0
    %v205 = vsel %vm188, %v187, 0
    %207 = vmatpush.bf16.msra.mxu0 0
    %208 = vmatpush.bf16.msra.mxu0 0
    %209 = vmatpush.bf16.msra.mxu0 0
    %210 = vmatpush.bf16.msra.mxu0 0
    %211 = vmatpush.bf16.msra.mxu0 0
    %212 = vmatpush.bf16.msra.mxu0 0
    %213 = vmatpush.bf16.msra.mxu0 %v145
    %214 = vmatpush.bf16.msra.mxu0 %v144
    %215 = vmatmul.bf16.gmra.mxu0 %v190
    %v216 = vpop.f32.mrf.mxu0
    %v217 = vadd.f32 0.0, %v216
    %v218 = vpop.f32.mrf.mxu0
    %v219 = vadd.f32 0.0, %v218
    %220 = vmatmul.bf16.gmra.mxu0 %v193
    %v221 = vpop.f32.mrf.mxu0
    %v222 = vadd.f32 0.0, %v221
    %v223 = vpop.f32.mrf.mxu0
    %v224 = vadd.f32 0.0, %v223
    %225 = vmatmul.bf16.gmra.mxu0 %v196
    %v226 = vpop.f32.mrf.mxu0
    %v227 = vadd.f32 0.0, %v226
    %v228 = vpop.f32.mrf.mxu0
    %v229 = vadd.f32 0.0, %v228
    %230 = vmatmul.bf16.gmra.mxu0 %v199
    %v231 = vpop.f32.mrf.mxu0
    %v232 = vadd.f32 0.0, %v231
    %v233 = vpop.f32.mrf.mxu0
    %v234 = vadd.f32 0.0, %v233
    %235 = vmatmul.bf16.gmra.mxu0 %v202
    %v236 = vpop.f32.mrf.mxu0
    %v237 = vadd.f32 0.0, %v236
    %v238 = vpop.f32.mrf.mxu0
    %v239 = vadd.f32 0.0, %v238
    %240 = vmatmul.bf16.gmra.mxu0 %v205
    %v241 = vpop.f32.mrf.mxu0
    %v242 = vadd.f32 0.0, %v241
    %v243 = vpop.f32.mrf.mxu0
    %v244 = vadd.f32 0.0, %v243
    %245 = vdwg.mxu0
    %v246 = vpack.c.bf16 %v217, %v217
    %v247 = vpack.c.bf16 %v219, %v219
    %v248 = vpack.c.bf16 %v222, %v222
    %v249 = vpack.c.bf16 %v224, %v224
    %v250 = vpack.c.bf16 %v227, %v227
    %v251 = vpack.c.bf16 %v229, %v229
    %v252 = vpack.c.bf16 %v232, %v232
    %v253 = vpack.c.bf16 %v234, %v234
    %v254 = vpack.c.bf16 %v237, %v237
    %v255 = vpack.c.bf16 %v239, %v239
    %v256 = vpack.c.bf16 %v242, %v242
    %v257 = vpack.c.bf16 %v244, %v244
    %v258 = vld [vmem:[#allocation5] sm:$0xff]
    %v259 = vld [vmem:[#allocation5 + $0x8] sm:$0xff]
    %v260 = vld [vmem:[#allocation5 + $0x10] sm:$0xff]
    %v261 = vld [vmem:[#allocation5 + $0x18] sm:$0xff]
    %v262 = vld [vmem:[#allocation5 + $0x20] sm:$0xff]
    %v263 = vld [vmem:[#allocation5 + $0x28] sm:$0xff]
    %v264 = vld [vmem:[#allocation5 + $0x30] sm:$0xff]
    %v265 = vld [vmem:[#allocation5 + $0x38] sm:$0xff]
    %v266 = vld [vmem:[#allocation5 + $0x40] sm:$0xff]
    %v267 = vld [vmem:[#allocation5 + $0x48] sm:$0xff]
    %v268 = vld [vmem:[#allocation5 + $0x50] sm:$0xff]
    %v269 = vld [vmem:[#allocation5 + $0x58] sm:$0xff]
    %v270 = vld [vmem:[#allocation5 + $0x60] sm:$0xff]
    %v271 = vld [vmem:[#allocation5 + $0x68] sm:$0xff]
    %v272 = vld [vmem:[#allocation5 + $0x70] sm:$0xff]
    %v273 = vld [vmem:[#allocation5 + $0x78] sm:$0xff]
    %s274 = scalar_lea.vmem [#allocation5], 128
    %v275 = vld [vmem:[%s274] sm:$0xff]
    %v276 = vld [vmem:[%s274 + $0x8] sm:$0xff]
    %v277 = vld [vmem:[%s274 + $0x10] sm:$0xff]
    %v278 = vld [vmem:[%s274 + $0x18] sm:$0xff]
    %v279 = vld [vmem:[%s274 + $0x20] sm:$0xff]
    %v280 = vld [vmem:[%s274 + $0x28] sm:$0xff]
    %v281 = vld [vmem:[%s274 + $0x30] sm:$0xff]
    %v282 = vld [vmem:[%s274 + $0x38] sm:$0xff]
    %v283 = vld [vmem:[%s274 + $0x40] sm:$0xff]
    %v284 = vld [vmem:[%s274 + $0x48] sm:$0xff]
    %v285 = vld [vmem:[%s274 + $0x50] sm:$0xff]
    %v286 = vld [vmem:[%s274 + $0x58] sm:$0xff]
    %v287 = vld [vmem:[%s274 + $0x60] sm:$0xff]
    %v288 = vld [vmem:[%s274 + $0x68] sm:$0xff]
    %v289 = vld [vmem:[%s274 + $0x70] sm:$0xff]
    %v290 = vld [vmem:[%s274 + $0x78] sm:$0xff]
    %v295 = vunpack.c.l.b16 %v250
    %v296 = vunpack.c.l.b16 %v251
    %v297 = vunpack.c.l.b16 %v252
    %v298 = vunpack.c.l.b16 %v253
    %v299 = vpack.c.b16 %v296, %v295
    %v300 = vpack.c.b16 %v298, %v297
    %v317 = vunpack.c.l.b16 %v275
    %v318 = vunpack.c.h.b16 %v275
    %v319 = vunpack.c.l.b16 %v276
    %v320 = vunpack.c.h.b16 %v276
    %v321 = vunpack.c.l.b16 %v277
    %v322 = vunpack.c.h.b16 %v277
    %v323 = vunpack.c.l.b16 %v278
    %v324 = vunpack.c.h.b16 %v278
    %v325 = vunpack.c.l.b16 %v279
    %v326 = vunpack.c.h.b16 %v279
    %v327 = vunpack.c.l.b16 %v280
    %v328 = vunpack.c.h.b16 %v280
    %v329 = vunpack.c.l.b16 %v281
    %v330 = vunpack.c.h.b16 %v281
    %v331 = vunpack.c.l.b16 %v282
    %v332 = vunpack.c.h.b16 %v282
    %v333 = vunpack.c.l.b16 %v283
    %v334 = vunpack.c.h.b16 %v283
    %v335 = vunpack.c.l.b16 %v284
    %v336 = vunpack.c.h.b16 %v284
    %v337 = vunpack.c.l.b16 %v285
    %v338 = vunpack.c.h.b16 %v285
    %v339 = vunpack.c.l.b16 %v286
    %v340 = vunpack.c.h.b16 %v286
    %v341 = vunpack.c.l.b16 %v287
    %v342 = vunpack.c.h.b16 %v287
    %v343 = vunpack.c.l.b16 %v288
    %v344 = vunpack.c.h.b16 %v288
    %v345 = vunpack.c.l.b16 %v289
    %v346 = vunpack.c.h.b16 %v289
    %v347 = vunpack.c.l.b16 %v290
    %v348 = vunpack.c.h.b16 %v290
    %v349 = vpack.c.b16 %v321, %v317
    %v350 = vpack.c.b16 %v322, %v318
    %v351 = vpack.c.b16 %v323, %v319
    %v352 = vpack.c.b16 %v324, %v320
    %v353 = vpack.c.b16 %v329, %v325
    %v354 = vpack.c.b16 %v330, %v326
    %v355 = vpack.c.b16 %v331, %v327
    %v356 = vpack.c.b16 %v332, %v328
    %v357 = vpack.c.b16 %v337, %v333
    %v358 = vpack.c.b16 %v338, %v334
    %v359 = vpack.c.b16 %v339, %v335
    %v360 = vpack.c.b16 %v340, %v336
    %v361 = vpack.c.b16 %v345, %v341
    %v362 = vpack.c.b16 %v346, %v342
    %v363 = vpack.c.b16 %v347, %v343
    %v364 = vpack.c.b16 %v348, %v344
    %vm381 = vcmask 523264
    %v383 = vsel %vm381, %v299, 0
    %v386 = vsel %vm381, %v300, 0
    %388 = vmatpush.bf16.msra.mxu0 0
    %389 = vmatpush.bf16.msra.mxu0 0
    %390 = vmatpush.bf16.msra.mxu0 0
    %391 = vmatpush.bf16.msra.mxu0 0
    %392 = vmatpush.bf16.msra.mxu0 %v361
    %393 = vmatpush.bf16.msra.mxu0 %v357
    %394 = vmatpush.bf16.msra.mxu0 %v353
    %395 = vmatpush.bf16.msra.mxu0 %v349
    %396 = vmatmul.bf16.gmra.mxu0 %v383
    %v397 = vpop.f32.mrf.mxu0
    %v398 = vadd.f32 0.0, %v397
    %v399 = vpop.f32.mrf.mxu0
    %v400 = vadd.f32 0.0, %v399
    %401 = vmatmul.bf16.gmra.mxu0 %v386
    %v402 = vpop.f32.mrf.mxu0
    %v403 = vadd.f32 0.0, %v402
    %v404 = vpop.f32.mrf.mxu0
    %v405 = vadd.f32 0.0, %v404
    %406 = vdwg.mxu0
    %407 = vmatpush.bf16.msra.mxu0 0
    %408 = vmatpush.bf16.msra.mxu0 0
    %409 = vmatpush.bf16.msra.mxu0 0
    %410 = vmatpush.bf16.msra.mxu0 0
    %411 = vmatpush.bf16.msra.mxu0 %v362
    %412 = vmatpush.bf16.msra.mxu0 %v358
    %413 = vmatpush.bf16.msra.mxu0 %v354
    %414 = vmatpush.bf16.msra.mxu0 %v350
    %415 = vmatmul.bf16.gmra.mxu0 %v383
    %v416 = vpop.f32.mrf.mxu0
    %v417 = vadd.f32 0.0, %v416
    %v418 = vpop.f32.mrf.mxu0
    %v419 = vadd.f32 0.0, %v418
    %420 = vmatmul.bf16.gmra.mxu0 %v386
    %v421 = vpop.f32.mrf.mxu0
    %v422 = vadd.f32 0.0, %v421
    %v423 = vpop.f32.mrf.mxu0
    %v424 = vadd.f32 0.0, %v423
    %425 = vdwg.mxu0
    %426 = vmatpush.bf16.msra.mxu0 0
    %427 = vmatpush.bf16.msra.mxu0 0
    %428 = vmatpush.bf16.msra.mxu0 0
    %429 = vmatpush.bf16.msra.mxu0 0
    %430 = vmatpush.bf16.msra.mxu0 %v363
    %431 = vmatpush.bf16.msra.mxu0 %v359
    %432 = vmatpush.bf16.msra.mxu0 %v355
    %433 = vmatpush.bf16.msra.mxu0 %v351
    %434 = vmatmul.bf16.gmra.mxu0 %v383
    %v435 = vpop.f32.mrf.mxu0
    %v436 = vadd.f32 0.0, %v435
    %v437 = vpop.f32.mrf.mxu0
    %v438 = vadd.f32 0.0, %v437
    %439 = vmatmul.bf16.gmra.mxu0 %v386
    %v440 = vpop.f32.mrf.mxu0
    %v441 = vadd.f32 0.0, %v440
    %v442 = vpop.f32.mrf.mxu0
    %v443 = vadd.f32 0.0, %v442
    %444 = vdwg.mxu0
    %445 = vmatpush.bf16.msra.mxu0 0
    %446 = vmatpush.bf16.msra.mxu0 0
    %447 = vmatpush.bf16.msra.mxu0 0
    %448 = vmatpush.bf16.msra.mxu0 0
    %449 = vmatpush.bf16.msra.mxu0 %v364
    %450 = vmatpush.bf16.msra.mxu0 %v360
    %451 = vmatpush.bf16.msra.mxu0 %v356
    %452 = vmatpush.bf16.msra.mxu0 %v352
    %453 = vmatmul.bf16.gmra.mxu0 %v383
    %v454 = vpop.f32.mrf.mxu0
    %v455 = vadd.f32 0.0, %v454
    %v456 = vpop.f32.mrf.mxu0
    %v457 = vadd.f32 0.0, %v456
    %458 = vmatmul.bf16.gmra.mxu0 %v386
    %v459 = vpop.f32.mrf.mxu0
    %v460 = vadd.f32 0.0, %v459
    %v461 = vpop.f32.mrf.mxu0
    %v462 = vadd.f32 0.0, %v461
    %463 = vdwg.mxu0
    %v468 = vunpack.c.l.b16 %v246
    %v469 = vunpack.c.l.b16 %v247
    %v470 = vunpack.c.l.b16 %v248
    %v471 = vunpack.c.l.b16 %v249
    %v472 = vpack.c.b16 %v469, %v468
    %v473 = vpack.c.b16 %v471, %v470
    %v490 = vunpack.c.l.b16 %v258
    %v491 = vunpack.c.h.b16 %v258
    %v492 = vunpack.c.l.b16 %v259
    %v493 = vunpack.c.h.b16 %v259
    %v494 = vunpack.c.l.b16 %v260
    %v495 = vunpack.c.h.b16 %v260
    %v496 = vunpack.c.l.b16 %v261
    %v497 = vunpack.c.h.b16 %v261
    %v498 = vunpack.c.l.b16 %v262
    %v499 = vunpack.c.h.b16 %v262
    %v500 = vunpack.c.l.b16 %v263
    %v501 = vunpack.c.h.b16 %v263
    %v502 = vunpack.c.l.b16 %v264
    %v503 = vunpack.c.h.b16 %v264
    %v504 = vunpack.c.l.b16 %v265
    %v505 = vunpack.c.h.b16 %v265
    %v506 = vunpack.c.l.b16 %v266
    %v507 = vunpack.c.h.b16 %v266
    %v508 = vunpack.c.l.b16 %v267
    %v509 = vunpack.c.h.b16 %v267
    %v510 = vunpack.c.l.b16 %v268
    %v511 = vunpack.c.h.b16 %v268
    %v512 = vunpack.c.l.b16 %v269
    %v513 = vunpack.c.h.b16 %v269
    %v514 = vunpack.c.l.b16 %v270
    %v515 = vunpack.c.h.b16 %v270
    %v516 = vunpack.c.l.b16 %v271
    %v517 = vunpack.c.h.b16 %v271
    %v518 = vunpack.c.l.b16 %v272
    %v519 = vunpack.c.h.b16 %v272
    %v520 = vunpack.c.l.b16 %v273
    %v521 = vunpack.c.h.b16 %v273
    %v522 = vpack.c.b16 %v494, %v490
    %v523 = vpack.c.b16 %v495, %v491
    %v524 = vpack.c.b16 %v496, %v492
    %v525 = vpack.c.b16 %v497, %v493
    %v526 = vpack.c.b16 %v502, %v498
    %v527 = vpack.c.b16 %v503, %v499
    %v528 = vpack.c.b16 %v504, %v500
    %v529 = vpack.c.b16 %v505, %v501
    %v530 = vpack.c.b16 %v510, %v506
    %v531 = vpack.c.b16 %v511, %v507
    %v532 = vpack.c.b16 %v512, %v508
    %v533 = vpack.c.b16 %v513, %v509
    %v534 = vpack.c.b16 %v518, %v514
    %v535 = vpack.c.b16 %v519, %v515
    %v536 = vpack.c.b16 %v520, %v516
    %v537 = vpack.c.b16 %v521, %v517
    %v555 = vsel %vm381, %v472, 0
    %v558 = vsel %vm381, %v473, 0
    %560 = vmatpush.bf16.msra.mxu0 0
    %561 = vmatpush.bf16.msra.mxu0 0
    %562 = vmatpush.bf16.msra.mxu0 0
    %563 = vmatpush.bf16.msra.mxu0 0
    %564 = vmatpush.bf16.msra.mxu0 %v534
    %565 = vmatpush.bf16.msra.mxu0 %v530
    %566 = vmatpush.bf16.msra.mxu0 %v526
    %567 = vmatpush.bf16.msra.mxu0 %v522
    %568 = vmatmul.bf16.gmra.mxu0 %v555
    %v569 = vpop.f32.mrf.mxu0
    %v570 = vadd.f32 %v398, %v569
    %v571 = vpop.f32.mrf.mxu0
    %v572 = vadd.f32 %v400, %v571
    %573 = vmatmul.bf16.gmra.mxu0 %v558
    %v574 = vpop.f32.mrf.mxu0
    %v575 = vadd.f32 %v403, %v574
    %v576 = vpop.f32.mrf.mxu0
    %v577 = vadd.f32 %v405, %v576
    %578 = vdwg.mxu0
    %579 = vmatpush.bf16.msra.mxu0 0
    %580 = vmatpush.bf16.msra.mxu0 0
    %581 = vmatpush.bf16.msra.mxu0 0
    %582 = vmatpush.bf16.msra.mxu0 0
    %583 = vmatpush.bf16.msra.mxu0 %v535
    %584 = vmatpush.bf16.msra.mxu0 %v531
    %585 = vmatpush.bf16.msra.mxu0 %v527
    %586 = vmatpush.bf16.msra.mxu0 %v523
    %587 = vmatmul.bf16.gmra.mxu0 %v555
    %v588 = vpop.f32.mrf.mxu0
    %v589 = vadd.f32 %v417, %v588
    %v590 = vpop.f32.mrf.mxu0
    %v591 = vadd.f32 %v419, %v590
    %592 = vmatmul.bf16.gmra.mxu0 %v558
    %v593 = vpop.f32.mrf.mxu0
    %v594 = vadd.f32 %v422, %v593
    %v595 = vpop.f32.mrf.mxu0
    %v596 = vadd.f32 %v424, %v595
    %597 = vdwg.mxu0
    %598 = vmatpush.bf16.msra.mxu0 0
    %599 = vmatpush.bf16.msra.mxu0 0
    %600 = vmatpush.bf16.msra.mxu0 0
    %601 = vmatpush.bf16.msra.mxu0 0
    %602 = vmatpush.bf16.msra.mxu0 %v536
    %603 = vmatpush.bf16.msra.mxu0 %v532
    %604 = vmatpush.bf16.msra.mxu0 %v528
    %605 = vmatpush.bf16.msra.mxu0 %v524
    %606 = vmatmul.bf16.gmra.mxu0 %v555
    %v607 = vpop.f32.mrf.mxu0
    %v608 = vadd.f32 %v436, %v607
    %v609 = vpop.f32.mrf.mxu0
    %v610 = vadd.f32 %v438, %v609
    %611 = vmatmul.bf16.gmra.mxu0 %v558
    %v612 = vpop.f32.mrf.mxu0
    %v613 = vadd.f32 %v441, %v612
    %v614 = vpop.f32.mrf.mxu0
    %v615 = vadd.f32 %v443, %v614
    %616 = vdwg.mxu0
    %617 = vmatpush.bf16.msra.mxu0 0
    %618 = vmatpush.bf16.msra.mxu0 0
    %619 = vmatpush.bf16.msra.mxu0 0
    %620 = vmatpush.bf16.msra.mxu0 0
    %621 = vmatpush.bf16.msra.mxu0 %v537
    %622 = vmatpush.bf16.msra.mxu0 %v533
    %623 = vmatpush.bf16.msra.mxu0 %v529
    %624 = vmatpush.bf16.msra.mxu0 %v525
    %625 = vmatmul.bf16.gmra.mxu0 %v555
    %v626 = vpop.f32.mrf.mxu0
    %v627 = vadd.f32 %v455, %v626
    %v628 = vpop.f32.mrf.mxu0
    %v629 = vadd.f32 %v457, %v628
    %630 = vmatmul.bf16.gmra.mxu0 %v558
    %v631 = vpop.f32.mrf.mxu0
    %v632 = vadd.f32 %v460, %v631
    %v633 = vpop.f32.mrf.mxu0
    %v634 = vadd.f32 %v462, %v633
    %635 = vdwg.mxu0
    %s636 = scalar_lea.vmem [#allocation5], 256
    %v637 = vld [vmem:[%s636] sm:$0xff]
    %v638 = vld [vmem:[%s636 + $0x8] sm:$0xff]
    %v639 = vld [vmem:[%s636 + $0x10] sm:$0xff]
    %v640 = vld [vmem:[%s636 + $0x18] sm:$0xff]
    %v641 = vld [vmem:[%s636 + $0x20] sm:$0xff]
    %v642 = vld [vmem:[%s636 + $0x28] sm:$0xff]
    %v643 = vld [vmem:[%s636 + $0x30] sm:$0xff]
    %v644 = vld [vmem:[%s636 + $0x38] sm:$0xff]
    %v645 = vld [vmem:[%s636 + $0x40] sm:$0xff]
    %v646 = vld [vmem:[%s636 + $0x48] sm:$0xff]
    %v647 = vld [vmem:[%s636 + $0x50] sm:$0xff]
    %v648 = vld [vmem:[%s636 + $0x58] sm:$0xff]
    %v649 = vld [vmem:[%s636 + $0x60] sm:$0xff]
    %v650 = vld [vmem:[%s636 + $0x68] sm:$0xff]
    %v651 = vld [vmem:[%s636 + $0x70] sm:$0xff]
    %v652 = vld [vmem:[%s636 + $0x78] sm:$0xff]
    %v657 = vunpack.c.l.b16 %v254
    %v658 = vunpack.c.l.b16 %v255
    %v659 = vunpack.c.l.b16 %v256
    %v660 = vunpack.c.l.b16 %v257
    %v661 = vpack.c.b16 %v658, %v657
    %v662 = vpack.c.b16 %v660, %v659
    %v679 = vunpack.c.l.b16 %v637
    %v680 = vunpack.c.h.b16 %v637
    %v681 = vunpack.c.l.b16 %v638
    %v682 = vunpack.c.h.b16 %v638
    %v683 = vunpack.c.l.b16 %v639
    %v684 = vunpack.c.h.b16 %v639
    %v685 = vunpack.c.l.b16 %v640
    %v686 = vunpack.c.h.b16 %v640
    %v687 = vunpack.c.l.b16 %v641
    %v688 = vunpack.c.h.b16 %v641
    %v689 = vunpack.c.l.b16 %v642
    %v690 = vunpack.c.h.b16 %v642
    %v691 = vunpack.c.l.b16 %v643
    %v692 = vunpack.c.h.b16 %v643
    %v693 = vunpack.c.l.b16 %v644
    %v694 = vunpack.c.h.b16 %v644
    %v695 = vunpack.c.l.b16 %v645
    %v696 = vunpack.c.h.b16 %v645
    %v697 = vunpack.c.l.b16 %v646
    %v698 = vunpack.c.h.b16 %v646
    %v699 = vunpack.c.l.b16 %v647
    %v700 = vunpack.c.h.b16 %v647
    %v701 = vunpack.c.l.b16 %v648
    %v702 = vunpack.c.h.b16 %v648
    %v703 = vunpack.c.l.b16 %v649
    %v704 = vunpack.c.h.b16 %v649
    %v705 = vunpack.c.l.b16 %v650
    %v706 = vunpack.c.h.b16 %v650
    %v707 = vunpack.c.l.b16 %v651
    %v708 = vunpack.c.h.b16 %v651
    %v709 = vunpack.c.l.b16 %v652
    %v710 = vunpack.c.h.b16 %v652
    %v711 = vpack.c.b16 %v683, %v679
    %v712 = vpack.c.b16 %v684, %v680
    %v713 = vpack.c.b16 %v685, %v681
    %v714 = vpack.c.b16 %v686, %v682
    %v715 = vpack.c.b16 %v691, %v687
    %v716 = vpack.c.b16 %v692, %v688
    %v717 = vpack.c.b16 %v693, %v689
    %v718 = vpack.c.b16 %v694, %v690
    %v719 = vpack.c.b16 %v699, %v695
    %v720 = vpack.c.b16 %v700, %v696
    %v721 = vpack.c.b16 %v701, %v697
    %v722 = vpack.c.b16 %v702, %v698
    %v723 = vpack.c.b16 %v707, %v703
    %v724 = vpack.c.b16 %v708, %v704
    %v725 = vpack.c.b16 %v709, %v705
    %v726 = vpack.c.b16 %v710, %v706
    %v744 = vsel %vm381, %v661, 0
    %v747 = vsel %vm381, %v662, 0
    %749 = vmatpush.bf16.msra.mxu0 0
    %750 = vmatpush.bf16.msra.mxu0 0
    %751 = vmatpush.bf16.msra.mxu0 0
    %752 = vmatpush.bf16.msra.mxu0 0
    %753 = vmatpush.bf16.msra.mxu0 %v723
    %754 = vmatpush.bf16.msra.mxu0 %v719
    %755 = vmatpush.bf16.msra.mxu0 %v715
    %756 = vmatpush.bf16.msra.mxu0 %v711
    %757 = vmatmul.bf16.gmra.mxu0 %v744
    %v758 = vpop.f32.mrf.mxu0
    %v759 = vadd.f32 0.0, %v758
    %v760 = vpop.f32.mrf.mxu0
    %v761 = vadd.f32 0.0, %v760
    %762 = vmatmul.bf16.gmra.mxu0 %v747
    %v763 = vpop.f32.mrf.mxu0
    %v764 = vadd.f32 0.0, %v763
    %v765 = vpop.f32.mrf.mxu0
    %v766 = vadd.f32 0.0, %v765
    %767 = vdwg.mxu0
    %768 = vmatpush.bf16.msra.mxu0 0
    %769 = vmatpush.bf16.msra.mxu0 0
    %770 = vmatpush.bf16.msra.mxu0 0
    %771 = vmatpush.bf16.msra.mxu0 0
    %772 = vmatpush.bf16.msra.mxu0 %v724
    %773 = vmatpush.bf16.msra.mxu0 %v720
    %774 = vmatpush.bf16.msra.mxu0 %v716
    %775 = vmatpush.bf16.msra.mxu0 %v712
    %776 = vmatmul.bf16.gmra.mxu0 %v744
    %v777 = vpop.f32.mrf.mxu0
    %v778 = vadd.f32 0.0, %v777
    %v779 = vpop.f32.mrf.mxu0
    %v780 = vadd.f32 0.0, %v779
    %781 = vmatmul.bf16.gmra.mxu0 %v747
    %v782 = vpop.f32.mrf.mxu0
    %v783 = vadd.f32 0.0, %v782
    %v784 = vpop.f32.mrf.mxu0
    %v785 = vadd.f32 0.0, %v784
    %786 = vdwg.mxu0
    %787 = vmatpush.bf16.msra.mxu0 0
    %788 = vmatpush.bf16.msra.mxu0 0
    %789 = vmatpush.bf16.msra.mxu0 0
    %790 = vmatpush.bf16.msra.mxu0 0
    %791 = vmatpush.bf16.msra.mxu0 %v725
    %792 = vmatpush.bf16.msra.mxu0 %v721
    %793 = vmatpush.bf16.msra.mxu0 %v717
    %794 = vmatpush.bf16.msra.mxu0 %v713
    %795 = vmatmul.bf16.gmra.mxu0 %v744
    %v796 = vpop.f32.mrf.mxu0
    %v797 = vadd.f32 0.0, %v796
    %v798 = vpop.f32.mrf.mxu0
    %v799 = vadd.f32 0.0, %v798
    %800 = vmatmul.bf16.gmra.mxu0 %v747
    %v801 = vpop.f32.mrf.mxu0
    %v802 = vadd.f32 0.0, %v801
    %v803 = vpop.f32.mrf.mxu0
    %v804 = vadd.f32 0.0, %v803
    %805 = vdwg.mxu0
    %806 = vmatpush.bf16.msra.mxu0 0
    %807 = vmatpush.bf16.msra.mxu0 0
    %808 = vmatpush.bf16.msra.mxu0 0
    %809 = vmatpush.bf16.msra.mxu0 0
    %810 = vmatpush.bf16.msra.mxu0 %v726
    %811 = vmatpush.bf16.msra.mxu0 %v722
    %812 = vmatpush.bf16.msra.mxu0 %v718
    %813 = vmatpush.bf16.msra.mxu0 %v714
    %814 = vmatmul.bf16.gmra.mxu0 %v744
    %v815 = vpop.f32.mrf.mxu0
    %v816 = vadd.f32 0.0, %v815
    %v817 = vpop.f32.mrf.mxu0
    %v818 = vadd.f32 0.0, %v817
    %819 = vmatmul.bf16.gmra.mxu0 %v747
    %v820 = vpop.f32.mrf.mxu0
    %v821 = vadd.f32 0.0, %v820
    %v822 = vpop.f32.mrf.mxu0
    %v823 = vadd.f32 0.0, %v822
    %824 = vdwg.mxu0
    %v825 = vadd.f32 %v570, %v759
    %v826 = vadd.f32 %v589, %v778
    %v827 = vadd.f32 %v608, %v797
    %v828 = vadd.f32 %v627, %v816
    %v829 = vadd.f32 %v572, %v761
    %v830 = vadd.f32 %v591, %v780
    %v831 = vadd.f32 %v610, %v799
    %v832 = vadd.f32 %v629, %v818
    %v833 = vadd.f32 %v575, %v764
    %v834 = vadd.f32 %v594, %v783
    %v835 = vadd.f32 %v613, %v802
    %v836 = vadd.f32 %v632, %v821
    %v837 = vadd.f32 %v577, %v766
    %v838 = vadd.f32 %v596, %v785
    %v839 = vadd.f32 %v615, %v804
    %v840 = vadd.f32 %v634, %v823
    %v841 = vld [vmem:[#allocation10] sm:$0xf]
    %v843 = vperm.slane %v841, 0
    %v844 = vperm.slane %v841, 1
    %v845 = vperm.slane %v841, 2
    %v846 = vperm.slane %v841, 3
    %v851 = vadd.f32 %v825, %v843
    %v852 = vadd.f32 %v826, %v844
    %v853 = vadd.f32 %v827, %v845
    %v854 = vadd.f32 %v828, %v846
    %v855 = vadd.f32 %v829, %v843
    %v856 = vadd.f32 %v830, %v844
    %v857 = vadd.f32 %v831, %v845
    %v858 = vadd.f32 %v832, %v846
    %v859 = vadd.f32 %v833, %v843
    %v860 = vadd.f32 %v834, %v844
    %v861 = vadd.f32 %v835, %v845
    %v862 = vadd.f32 %v836, %v846
    %v863 = vadd.f32 %v837, %v843
    %v864 = vadd.f32 %v838, %v844
    %v865 = vadd.f32 %v839, %v845
    %v866 = vadd.f32 %v840, %v846
    %v867 = vmax.f32 %v851, 0.0
    %v868 = vmax.f32 %v852, 0.0
    %v869 = vmax.f32 %v853, 0.0
    %v870 = vmax.f32 %v854, 0.0
    %v871 = vmax.f32 %v855, 0.0
    %v872 = vmax.f32 %v856, 0.0
    %v873 = vmax.f32 %v857, 0.0
    %v874 = vmax.f32 %v858, 0.0
    %v875 = vmax.f32 %v859, 0.0
    %v876 = vmax.f32 %v860, 0.0
    %v877 = vmax.f32 %v861, 0.0
    %v878 = vmax.f32 %v862, 0.0
    %v879 = vmax.f32 %v863, 0.0
    %v880 = vmax.f32 %v864, 0.0
    %v881 = vmax.f32 %v865, 0.0
    %v882 = vmax.f32 %v866, 0.0
    %v883 = vpack.c.bf16 %v871, %v867
    %v884 = vpack.c.bf16 %v872, %v868
    %v885 = vpack.c.bf16 %v873, %v869
    %v886 = vpack.c.bf16 %v874, %v870
    %v887 = vpack.c.bf16 %v879, %v875
    %v888 = vpack.c.bf16 %v880, %v876
    %v889 = vpack.c.bf16 %v881, %v877
    %v890 = vpack.c.bf16 %v882, %v878
    %v891 = vld [vmem:[%s2] sm:$0xf]
    %v892 = vld [vmem:[%s2 + $0x4] sm:$0xf]
    %v893 = vld [vmem:[%s2 + $0x8] sm:$0xf]
    %v894 = vld [vmem:[%s2 + $0xc] sm:$0xf]
    %v895 = vld [vmem:[%s2 + $0x10] sm:$0xf]
    %v896 = vld [vmem:[%s2 + $0x14] sm:$0xf]
    %v897 = vld [vmem:[%s2 + $0x18] sm:$0xf]
    %v898 = vld [vmem:[%s2 + $0x1c] sm:$0xf]
    %v899 = vld [vmem:[%s2 + $0x20] sm:$0xf]
    %v900 = vld [vmem:[%s2 + $0x24] sm:$0xf]
    %v911 = vunpack.c.l.b16 %v891
    %v912 = vunpack.c.l.b16 %v892
    %v913 = vunpack.c.l.b16 %v893
    %v914 = vunpack.c.l.b16 %v894
    %v915 = vunpack.c.l.b16 %v895
    %v916 = vunpack.c.l.b16 %v896
    %v917 = vunpack.c.l.b16 %v897
    %v918 = vunpack.c.l.b16 %v898
    %v919 = vunpack.c.l.b16 %v899
    %v920 = vunpack.c.l.b16 %v900
    %v921 = vpack.c.b16 %v912, %v911
    %v922 = vpack.c.b16 %v914, %v913
    %v923 = vpack.c.b16 %v916, %v915
    %v924 = vpack.c.b16 %v918, %v917
    %v925 = vpack.c.b16 %v920, %v919
    %v927 = vsel %vm188, %v921, 0
    %v930 = vsel %vm188, %v922, 0
    %v933 = vsel %vm188, %v923, 0
    %v936 = vsel %vm188, %v924, 0
    %v939 = vsel %vm188, %v925, 0
    %941 = vmatpush.bf16.msra.mxu0 0
    %942 = vmatpush.bf16.msra.mxu0 0
    %943 = vmatpush.bf16.msra.mxu0 0
    %944 = vmatpush.bf16.msra.mxu0 0
    %945 = vmatpush.bf16.msra.mxu0 0
    %946 = vmatpush.bf16.msra.mxu0 0
    %947 = vmatpush.bf16.msra.mxu0 %v887
    %948 = vmatpush.bf16.msra.mxu0 %v883
    %949 = vmatmul.bf16.gmra.mxu0 %v927
    %v950 = vpop.f32.mrf.mxu0
    %v951 = vadd.f32 0.0, %v950
    %v952 = vpop.f32.mrf.mxu0
    %v953 = vadd.f32 0.0, %v952
    %954 = vmatmul.bf16.gmra.mxu0 %v930
    %v955 = vpop.f32.mrf.mxu0
    %v956 = vadd.f32 0.0, %v955
    %v957 = vpop.f32.mrf.mxu0
    %v958 = vadd.f32 0.0, %v957
    %959 = vmatmul.bf16.gmra.mxu0 %v933
    %v960 = vpop.f32.mrf.mxu0
    %v961 = vadd.f32 0.0, %v960
    %v962 = vpop.f32.mrf.mxu0
    %v963 = vadd.f32 0.0, %v962
    %964 = vmatmul.bf16.gmra.mxu0 %v936
    %v965 = vpop.f32.mrf.mxu0
    %v966 = vadd.f32 0.0, %v965
    %v967 = vpop.f32.mrf.mxu0
    %v968 = vadd.f32 0.0, %v967
    %969 = vmatmul.bf16.gmra.mxu0 %v939
    %v970 = vpop.f32.mrf.mxu0
    %v971 = vadd.f32 0.0, %v970
    %v972 = vpop.f32.mrf.mxu0
    %v973 = vadd.f32 0.0, %v972
    %974 = vdwg.mxu0
    %975 = vmatpush.bf16.msra.mxu0 0
    %976 = vmatpush.bf16.msra.mxu0 0
    %977 = vmatpush.bf16.msra.mxu0 0
    %978 = vmatpush.bf16.msra.mxu0 0
    %979 = vmatpush.bf16.msra.mxu0 0
    %980 = vmatpush.bf16.msra.mxu0 0
    %981 = vmatpush.bf16.msra.mxu0 %v888
    %982 = vmatpush.bf16.msra.mxu0 %v884
    %983 = vmatmul.bf16.gmra.mxu0 %v927
    %v984 = vpop.f32.mrf.mxu0
    %v985 = vadd.f32 0.0, %v984
    %v986 = vpop.f32.mrf.mxu0
    %v987 = vadd.f32 0.0, %v986
    %988 = vmatmul.bf16.gmra.mxu0 %v930
    %v989 = vpop.f32.mrf.mxu0
    %v990 = vadd.f32 0.0, %v989
    %v991 = vpop.f32.mrf.mxu0
    %v992 = vadd.f32 0.0, %v991
    %993 = vmatmul.bf16.gmra.mxu0 %v933
    %v994 = vpop.f32.mrf.mxu0
    %v995 = vadd.f32 0.0, %v994
    %v996 = vpop.f32.mrf.mxu0
    %v997 = vadd.f32 0.0, %v996
    %998 = vmatmul.bf16.gmra.mxu0 %v936
    %v999 = vpop.f32.mrf.mxu0
    %v1000 = vadd.f32 0.0, %v999
    %v1001 = vpop.f32.mrf.mxu0
    %v1002 = vadd.f32 0.0, %v1001
    %1003 = vmatmul.bf16.gmra.mxu0 %v939
    %v1004 = vpop.f32.mrf.mxu0
    %v1005 = vadd.f32 0.0, %v1004
    %v1006 = vpop.f32.mrf.mxu0
    %v1007 = vadd.f32 0.0, %v1006
    %1008 = vdwg.mxu0
    %1009 = vmatpush.bf16.msra.mxu0 0
    %1010 = vmatpush.bf16.msra.mxu0 0
    %1011 = vmatpush.bf16.msra.mxu0 0
    %1012 = vmatpush.bf16.msra.mxu0 0
    %1013 = vmatpush.bf16.msra.mxu0 0
    %1014 = vmatpush.bf16.msra.mxu0 0
    %1015 = vmatpush.bf16.msra.mxu0 %v889
    %1016 = vmatpush.bf16.msra.mxu0 %v885
    %1017 = vmatmul.bf16.gmra.mxu0 %v927
    %v1018 = vpop.f32.mrf.mxu0
    %v1019 = vadd.f32 0.0, %v1018
    %v1020 = vpop.f32.mrf.mxu0
    %v1021 = vadd.f32 0.0, %v1020
    %1022 = vmatmul.bf16.gmra.mxu0 %v930
    %v1023 = vpop.f32.mrf.mxu0
    %v1024 = vadd.f32 0.0, %v1023
    %v1025 = vpop.f32.mrf.mxu0
    %v1026 = vadd.f32 0.0, %v1025
    %1027 = vmatmul.bf16.gmra.mxu0 %v933
    %v1028 = vpop.f32.mrf.mxu0
    %v1029 = vadd.f32 0.0, %v1028
    %v1030 = vpop.f32.mrf.mxu0
    %v1031 = vadd.f32 0.0, %v1030
    %1032 = vmatmul.bf16.gmra.mxu0 %v936
    %v1033 = vpop.f32.mrf.mxu0
    %v1034 = vadd.f32 0.0, %v1033
    %v1035 = vpop.f32.mrf.mxu0
    %v1036 = vadd.f32 0.0, %v1035
    %1037 = vmatmul.bf16.gmra.mxu0 %v939
    %v1038 = vpop.f32.mrf.mxu0
    %v1039 = vadd.f32 0.0, %v1038
    %v1040 = vpop.f32.mrf.mxu0
    %v1041 = vadd.f32 0.0, %v1040
    %1042 = vdwg.mxu0
    %1043 = vmatpush.bf16.msra.mxu0 0
    %1044 = vmatpush.bf16.msra.mxu0 0
    %1045 = vmatpush.bf16.msra.mxu0 0
    %1046 = vmatpush.bf16.msra.mxu0 0
    %1047 = vmatpush.bf16.msra.mxu0 0
    %1048 = vmatpush.bf16.msra.mxu0 0
    %1049 = vmatpush.bf16.msra.mxu0 %v890
    %1050 = vmatpush.bf16.msra.mxu0 %v886
    %1051 = vmatmul.bf16.gmra.mxu0 %v927
    %v1052 = vpop.f32.mrf.mxu0
    %v1053 = vadd.f32 0.0, %v1052
    %v1054 = vpop.f32.mrf.mxu0
    %v1055 = vadd.f32 0.0, %v1054
    %1056 = vmatmul.bf16.gmra.mxu0 %v930
    %v1057 = vpop.f32.mrf.mxu0
    %v1058 = vadd.f32 0.0, %v1057
    %v1059 = vpop.f32.mrf.mxu0
    %v1060 = vadd.f32 0.0, %v1059
    %1061 = vmatmul.bf16.gmra.mxu0 %v933
    %v1062 = vpop.f32.mrf.mxu0
    %v1063 = vadd.f32 0.0, %v1062
    %v1064 = vpop.f32.mrf.mxu0
    %v1065 = vadd.f32 0.0, %v1064
    %1066 = vmatmul.bf16.gmra.mxu0 %v936
    %v1067 = vpop.f32.mrf.mxu0
    %v1068 = vadd.f32 0.0, %v1067
    %v1069 = vpop.f32.mrf.mxu0
    %v1070 = vadd.f32 0.0, %v1069
    %1071 = vmatmul.bf16.gmra.mxu0 %v939
    %v1072 = vpop.f32.mrf.mxu0
    %v1073 = vadd.f32 0.0, %v1072
    %v1074 = vpop.f32.mrf.mxu0
    %v1075 = vadd.f32 0.0, %v1074
    %1076 = vdwg.mxu0
    %v1077 = vpack.c.bf16 %v985, %v951
    %v1078 = vpack.c.bf16 %v1053, %v1019
    %v1079 = vpack.c.bf16 %v987, %v953
    %v1080 = vpack.c.bf16 %v1055, %v1021
    %v1081 = vpack.c.bf16 %v990, %v956
    %v1082 = vpack.c.bf16 %v1058, %v1024
    %v1083 = vpack.c.bf16 %v992, %v958
    %v1084 = vpack.c.bf16 %v1060, %v1026
    %v1085 = vpack.c.bf16 %v995, %v961
    %v1086 = vpack.c.bf16 %v1063, %v1029
    %v1087 = vpack.c.bf16 %v997, %v963
    %v1088 = vpack.c.bf16 %v1065, %v1031
    %v1089 = vpack.c.bf16 %v1000, %v966
    %v1090 = vpack.c.bf16 %v1068, %v1034
    %v1091 = vpack.c.bf16 %v1002, %v968
    %v1092 = vpack.c.bf16 %v1070, %v1036
    %v1093 = vpack.c.bf16 %v1005, %v971
    %v1094 = vpack.c.bf16 %v1073, %v1039
    %v1095 = vpack.c.bf16 %v1007, %v973
    %v1096 = vpack.c.bf16 %v1075, %v1041
    %v1097 = vld [vmem:[#allocation7] sm:$0xff]
    %v1098 = vld [vmem:[#allocation7 + $0x8] sm:$0xff]
    %v1099 = vld [vmem:[#allocation7 + $0x10] sm:$0xff]
    %v1100 = vld [vmem:[#allocation7 + $0x18] sm:$0xff]
    %v1101 = vld [vmem:[#allocation7 + $0x20] sm:$0xff]
    %v1102 = vld [vmem:[#allocation7 + $0x28] sm:$0xff]
    %v1103 = vld [vmem:[#allocation7 + $0x30] sm:$0xff]
    %v1104 = vld [vmem:[#allocation7 + $0x38] sm:$0xff]
    %v1105 = vld [vmem:[#allocation7 + $0x40] sm:$0xff]
    %v1106 = vld [vmem:[#allocation7 + $0x48] sm:$0xff]
    %v1107 = vld [vmem:[#allocation7 + $0x50] sm:$0xff]
    %v1108 = vld [vmem:[#allocation7 + $0x58] sm:$0xff]
    %v1109 = vld [vmem:[#allocation7 + $0x60] sm:$0xff]
    %v1110 = vld [vmem:[#allocation7 + $0x68] sm:$0xff]
    %v1111 = vld [vmem:[#allocation7 + $0x70] sm:$0xff]
    %v1112 = vld [vmem:[#allocation7 + $0x78] sm:$0xff]
    %v1113 = vld [vmem:[#allocation7 + $0x80] sm:$0xff]
    %v1114 = vld [vmem:[#allocation7 + $0x88] sm:$0xff]
    %v1115 = vld [vmem:[#allocation7 + $0x90] sm:$0xff]
    %v1116 = vld [vmem:[#allocation7 + $0x98] sm:$0xff]
    %v1117 = vld [vmem:[#allocation7 + $0xa0] sm:$0xff]
    %v1118 = vld [vmem:[#allocation7 + $0xa8] sm:$0xff]
    %v1119 = vld [vmem:[#allocation7 + $0xb0] sm:$0xff]
    %v1120 = vld [vmem:[#allocation7 + $0xb8] sm:$0xff]
    %v1121 = vld [vmem:[#allocation7 + $0xc0] sm:$0xff]
    %v1122 = vld [vmem:[#allocation7 + $0xc8] sm:$0xff]
    %v1123 = vld [vmem:[#allocation7 + $0xd0] sm:$0xff]
    %v1124 = vld [vmem:[#allocation7 + $0xd8] sm:$0xff]
    %v1125 = vld [vmem:[#allocation7 + $0xe0] sm:$0xff]
    %v1126 = vld [vmem:[#allocation7 + $0xe8] sm:$0xff]
    %v1127 = vld [vmem:[#allocation7 + $0xf0] sm:$0xff]
    %v1128 = vld [vmem:[#allocation7 + $0xf8] sm:$0xff]
    %v1129 = vld [vmem:[#allocation7 + $0x100] sm:$0xff]
    %v1130 = vld [vmem:[#allocation7 + $0x108] sm:$0xff]
    %v1131 = vld [vmem:[#allocation7 + $0x110] sm:$0xff]
    %v1132 = vld [vmem:[#allocation7 + $0x118] sm:$0xff]
    %v1133 = vld [vmem:[#allocation7 + $0x120] sm:$0xff]
    %v1134 = vld [vmem:[#allocation7 + $0x128] sm:$0xff]
    %v1135 = vld [vmem:[#allocation7 + $0x130] sm:$0xff]
    %v1136 = vld [vmem:[#allocation7 + $0x138] sm:$0xff]
    %v1137 = vld [vmem:[#allocation7 + $0x140] sm:$0xff]
    %v1138 = vld [vmem:[#allocation7 + $0x148] sm:$0xff]
    %v1139 = vld [vmem:[#allocation7 + $0x150] sm:$0xff]
    %v1140 = vld [vmem:[#allocation7 + $0x158] sm:$0xff]
    %v1141 = vld [vmem:[#allocation7 + $0x160] sm:$0xff]
    %v1142 = vld [vmem:[#allocation7 + $0x168] sm:$0xff]
    %v1143 = vld [vmem:[#allocation7 + $0x170] sm:$0xff]
    %v1144 = vld [vmem:[#allocation7 + $0x178] sm:$0xff]
    %v1145 = vld [vmem:[#allocation7 + $0x180] sm:$0xff]
    %v1146 = vld [vmem:[#allocation7 + $0x188] sm:$0xff]
    %v1147 = vld [vmem:[#allocation7 + $0x190] sm:$0xff]
    %v1148 = vld [vmem:[#allocation7 + $0x198] sm:$0xff]
    %v1149 = vld [vmem:[#allocation7 + $0x1a0] sm:$0xff]
    %v1150 = vld [vmem:[#allocation7 + $0x1a8] sm:$0xff]
    %v1151 = vld [vmem:[#allocation7 + $0x1b0] sm:$0xff]
    %v1152 = vld [vmem:[#allocation7 + $0x1b8] sm:$0xff]
    %v1153 = vld [vmem:[#allocation7 + $0x1c0] sm:$0xff]
    %v1154 = vld [vmem:[#allocation7 + $0x1c8] sm:$0xff]
    %v1155 = vld [vmem:[#allocation7 + $0x1d0] sm:$0xff]
    %v1156 = vld [vmem:[#allocation7 + $0x1d8] sm:$0xff]
    %v1157 = vld [vmem:[#allocation7 + $0x1e0] sm:$0xff]
    %v1158 = vld [vmem:[#allocation7 + $0x1e8] sm:$0xff]
    %v1159 = vld [vmem:[#allocation7 + $0x1f0] sm:$0xff]
    %v1160 = vld [vmem:[#allocation7 + $0x1f8] sm:$0xff]
    %s1161 = scalar_lea.vmem [#allocation7], 512
    %v1162 = vld [vmem:[%s1161] sm:$0xff]
    %v1163 = vld [vmem:[%s1161 + $0x8] sm:$0xff]
    %v1164 = vld [vmem:[%s1161 + $0x10] sm:$0xff]
    %v1165 = vld [vmem:[%s1161 + $0x18] sm:$0xff]
    %v1166 = vld [vmem:[%s1161 + $0x20] sm:$0xff]
    %v1167 = vld [vmem:[%s1161 + $0x28] sm:$0xff]
    %v1168 = vld [vmem:[%s1161 + $0x30] sm:$0xff]
    %v1169 = vld [vmem:[%s1161 + $0x38] sm:$0xff]
    %v1170 = vld [vmem:[%s1161 + $0x40] sm:$0xff]
    %v1171 = vld [vmem:[%s1161 + $0x48] sm:$0xff]
    %v1172 = vld [vmem:[%s1161 + $0x50] sm:$0xff]
    %v1173 = vld [vmem:[%s1161 + $0x58] sm:$0xff]
    %v1174 = vld [vmem:[%s1161 + $0x60] sm:$0xff]
    %v1175 = vld [vmem:[%s1161 + $0x68] sm:$0xff]
    %v1176 = vld [vmem:[%s1161 + $0x70] sm:$0xff]
    %v1177 = vld [vmem:[%s1161 + $0x78] sm:$0xff]
    %v1178 = vld [vmem:[%s1161 + $0x80] sm:$0xff]
    %v1179 = vld [vmem:[%s1161 + $0x88] sm:$0xff]
    %v1180 = vld [vmem:[%s1161 + $0x90] sm:$0xff]
    %v1181 = vld [vmem:[%s1161 + $0x98] sm:$0xff]
    %v1182 = vld [vmem:[%s1161 + $0xa0] sm:$0xff]
    %v1183 = vld [vmem:[%s1161 + $0xa8] sm:$0xff]
    %v1184 = vld [vmem:[%s1161 + $0xb0] sm:$0xff]
    %v1185 = vld [vmem:[%s1161 + $0xb8] sm:$0xff]
    %v1186 = vld [vmem:[%s1161 + $0xc0] sm:$0xff]
    %v1187 = vld [vmem:[%s1161 + $0xc8] sm:$0xff]
    %v1188 = vld [vmem:[%s1161 + $0xd0] sm:$0xff]
    %v1189 = vld [vmem:[%s1161 + $0xd8] sm:$0xff]
    %v1190 = vld [vmem:[%s1161 + $0xe0] sm:$0xff]
    %v1191 = vld [vmem:[%s1161 + $0xe8] sm:$0xff]
    %v1192 = vld [vmem:[%s1161 + $0xf0] sm:$0xff]
    %v1193 = vld [vmem:[%s1161 + $0xf8] sm:$0xff]
    %v1194 = vld [vmem:[%s1161 + $0x100] sm:$0xff]
    %v1195 = vld [vmem:[%s1161 + $0x108] sm:$0xff]
    %v1196 = vld [vmem:[%s1161 + $0x110] sm:$0xff]
    %v1197 = vld [vmem:[%s1161 + $0x118] sm:$0xff]
    %v1198 = vld [vmem:[%s1161 + $0x120] sm:$0xff]
    %v1199 = vld [vmem:[%s1161 + $0x128] sm:$0xff]
    %v1200 = vld [vmem:[%s1161 + $0x130] sm:$0xff]
    %v1201 = vld [vmem:[%s1161 + $0x138] sm:$0xff]
    %v1202 = vld [vmem:[%s1161 + $0x140] sm:$0xff]
    %v1203 = vld [vmem:[%s1161 + $0x148] sm:$0xff]
    %v1204 = vld [vmem:[%s1161 + $0x150] sm:$0xff]
    %v1205 = vld [vmem:[%s1161 + $0x158] sm:$0xff]
    %v1206 = vld [vmem:[%s1161 + $0x160] sm:$0xff]
    %v1207 = vld [vmem:[%s1161 + $0x168] sm:$0xff]
    %v1208 = vld [vmem:[%s1161 + $0x170] sm:$0xff]
    %v1209 = vld [vmem:[%s1161 + $0x178] sm:$0xff]
    %v1210 = vld [vmem:[%s1161 + $0x180] sm:$0xff]
    %v1211 = vld [vmem:[%s1161 + $0x188] sm:$0xff]
    %v1212 = vld [vmem:[%s1161 + $0x190] sm:$0xff]
    %v1213 = vld [vmem:[%s1161 + $0x198] sm:$0xff]
    %v1214 = vld [vmem:[%s1161 + $0x1a0] sm:$0xff]
    %v1215 = vld [vmem:[%s1161 + $0x1a8] sm:$0xff]
    %v1216 = vld [vmem:[%s1161 + $0x1b0] sm:$0xff]
    %v1217 = vld [vmem:[%s1161 + $0x1b8] sm:$0xff]
    %v1218 = vld [vmem:[%s1161 + $0x1c0] sm:$0xff]
    %v1219 = vld [vmem:[%s1161 + $0x1c8] sm:$0xff]
    %v1220 = vld [vmem:[%s1161 + $0x1d0] sm:$0xff]
    %v1221 = vld [vmem:[%s1161 + $0x1d8] sm:$0xff]
    %v1222 = vld [vmem:[%s1161 + $0x1e0] sm:$0xff]
    %v1223 = vld [vmem:[%s1161 + $0x1e8] sm:$0xff]
    %v1224 = vld [vmem:[%s1161 + $0x1f0] sm:$0xff]
    %v1225 = vld [vmem:[%s1161 + $0x1f8] sm:$0xff]
    %v1230 = vunpack.c.l.b16 %v1081
    %v1231 = vunpack.c.h.b16 %v1081
    %v1232 = vunpack.c.l.b16 %v1082
    %v1233 = vunpack.c.h.b16 %v1082
    %v1234 = vunpack.c.l.b16 %v1083
    %v1235 = vunpack.c.h.b16 %v1083
    %v1236 = vunpack.c.l.b16 %v1084
    %v1237 = vunpack.c.h.b16 %v1084
    %v1238 = vpack.c.b16 %v1234, %v1230
    %v1239 = vpack.c.b16 %v1235, %v1231
    %v1240 = vpack.c.b16 %v1236, %v1232
    %v1241 = vpack.c.b16 %v1237, %v1233
    %v1310 = vunpack.c.l.b16 %v1162
    %v1311 = vunpack.c.h.b16 %v1162
    %v1312 = vunpack.c.l.b16 %v1163
    %v1313 = vunpack.c.h.b16 %v1163
    %v1314 = vunpack.c.l.b16 %v1164
    %v1315 = vunpack.c.h.b16 %v1164
    %v1316 = vunpack.c.l.b16 %v1165
    %v1317 = vunpack.c.h.b16 %v1165
    %v1318 = vunpack.c.l.b16 %v1166
    %v1319 = vunpack.c.h.b16 %v1166
    %v1320 = vunpack.c.l.b16 %v1167
    %v1321 = vunpack.c.h.b16 %v1167
    %v1322 = vunpack.c.l.b16 %v1168
    %v1323 = vunpack.c.h.b16 %v1168
    %v1324 = vunpack.c.l.b16 %v1169
    %v1325 = vunpack.c.h.b16 %v1169
    %v1326 = vunpack.c.l.b16 %v1170
    %v1327 = vunpack.c.h.b16 %v1170
    %v1328 = vunpack.c.l.b16 %v1171
    %v1329 = vunpack.c.h.b16 %v1171
    %v1330 = vunpack.c.l.b16 %v1172
    %v1331 = vunpack.c.h.b16 %v1172
    %v1332 = vunpack.c.l.b16 %v1173
    %v1333 = vunpack.c.h.b16 %v1173
    %v1334 = vunpack.c.l.b16 %v1174
    %v1335 = vunpack.c.h.b16 %v1174
    %v1336 = vunpack.c.l.b16 %v1175
    %v1337 = vunpack.c.h.b16 %v1175
    %v1338 = vunpack.c.l.b16 %v1176
    %v1339 = vunpack.c.h.b16 %v1176
    %v1340 = vunpack.c.l.b16 %v1177
    %v1341 = vunpack.c.h.b16 %v1177
    %v1342 = vunpack.c.l.b16 %v1178
    %v1343 = vunpack.c.h.b16 %v1178
    %v1344 = vunpack.c.l.b16 %v1179
    %v1345 = vunpack.c.h.b16 %v1179
    %v1346 = vunpack.c.l.b16 %v1180
    %v1347 = vunpack.c.h.b16 %v1180
    %v1348 = vunpack.c.l.b16 %v1181
    %v1349 = vunpack.c.h.b16 %v1181
    %v1350 = vunpack.c.l.b16 %v1182
    %v1351 = vunpack.c.h.b16 %v1182
    %v1352 = vunpack.c.l.b16 %v1183
    %v1353 = vunpack.c.h.b16 %v1183
    %v1354 = vunpack.c.l.b16 %v1184
    %v1355 = vunpack.c.h.b16 %v1184
    %v1356 = vunpack.c.l.b16 %v1185
    %v1357 = vunpack.c.h.b16 %v1185
    %v1358 = vunpack.c.l.b16 %v1186
    %v1359 = vunpack.c.h.b16 %v1186
    %v1360 = vunpack.c.l.b16 %v1187
    %v1361 = vunpack.c.h.b16 %v1187
    %v1362 = vunpack.c.l.b16 %v1188
    %v1363 = vunpack.c.h.b16 %v1188
    %v1364 = vunpack.c.l.b16 %v1189
    %v1365 = vunpack.c.h.b16 %v1189
    %v1366 = vunpack.c.l.b16 %v1190
    %v1367 = vunpack.c.h.b16 %v1190
    %v1368 = vunpack.c.l.b16 %v1191
    %v1369 = vunpack.c.h.b16 %v1191
    %v1370 = vunpack.c.l.b16 %v1192
    %v1371 = vunpack.c.h.b16 %v1192
    %v1372 = vunpack.c.l.b16 %v1193
    %v1373 = vunpack.c.h.b16 %v1193
    %v1374 = vunpack.c.l.b16 %v1194
    %v1375 = vunpack.c.h.b16 %v1194
    %v1376 = vunpack.c.l.b16 %v1195
    %v1377 = vunpack.c.h.b16 %v1195
    %v1378 = vunpack.c.l.b16 %v1196
    %v1379 = vunpack.c.h.b16 %v1196
    %v1380 = vunpack.c.l.b16 %v1197
    %v1381 = vunpack.c.h.b16 %v1197
    %v1382 = vunpack.c.l.b16 %v1198
    %v1383 = vunpack.c.h.b16 %v1198
    %v1384 = vunpack.c.l.b16 %v1199
    %v1385 = vunpack.c.h.b16 %v1199
    %v1386 = vunpack.c.l.b16 %v1200
    %v1387 = vunpack.c.h.b16 %v1200
    %v1388 = vunpack.c.l.b16 %v1201
    %v1389 = vunpack.c.h.b16 %v1201
    %v1390 = vunpack.c.l.b16 %v1202
    %v1391 = vunpack.c.h.b16 %v1202
    %v1392 = vunpack.c.l.b16 %v1203
    %v1393 = vunpack.c.h.b16 %v1203
    %v1394 = vunpack.c.l.b16 %v1204
    %v1395 = vunpack.c.h.b16 %v1204
    %v1396 = vunpack.c.l.b16 %v1205
    %v1397 = vunpack.c.h.b16 %v1205
    %v1398 = vunpack.c.l.b16 %v1206
    %v1399 = vunpack.c.h.b16 %v1206
    %v1400 = vunpack.c.l.b16 %v1207
    %v1401 = vunpack.c.h.b16 %v1207
    %v1402 = vunpack.c.l.b16 %v1208
    %v1403 = vunpack.c.h.b16 %v1208
    %v1404 = vunpack.c.l.b16 %v1209
    %v1405 = vunpack.c.h.b16 %v1209
    %v1406 = vunpack.c.l.b16 %v1210
    %v1407 = vunpack.c.h.b16 %v1210
    %v1408 = vunpack.c.l.b16 %v1211
    %v1409 = vunpack.c.h.b16 %v1211
    %v1410 = vunpack.c.l.b16 %v1212
    %v1411 = vunpack.c.h.b16 %v1212
    %v1412 = vunpack.c.l.b16 %v1213
    %v1413 = vunpack.c.h.b16 %v1213
    %v1414 = vunpack.c.l.b16 %v1214
    %v1415 = vunpack.c.h.b16 %v1214
    %v1416 = vunpack.c.l.b16 %v1215
    %v1417 = vunpack.c.h.b16 %v1215
    %v1418 = vunpack.c.l.b16 %v1216
    %v1419 = vunpack.c.h.b16 %v1216
    %v1420 = vunpack.c.l.b16 %v1217
    %v1421 = vunpack.c.h.b16 %v1217
    %v1422 = vunpack.c.l.b16 %v1218
    %v1423 = vunpack.c.h.b16 %v1218
    %v1424 = vunpack.c.l.b16 %v1219
    %v1425 = vunpack.c.h.b16 %v1219
    %v1426 = vunpack.c.l.b16 %v1220
    %v1427 = vunpack.c.h.b16 %v1220
    %v1428 = vunpack.c.l.b16 %v1221
    %v1429 = vunpack.c.h.b16 %v1221
    %v1430 = vunpack.c.l.b16 %v1222
    %v1431 = vunpack.c.h.b16 %v1222
    %v1432 = vunpack.c.l.b16 %v1223
    %v1433 = vunpack.c.h.b16 %v1223
    %v1434 = vunpack.c.l.b16 %v1224
    %v1435 = vunpack.c.h.b16 %v1224
    %v1436 = vunpack.c.l.b16 %v1225
    %v1437 = vunpack.c.h.b16 %v1225
    %v1438 = vpack.c.b16 %v1312, %v1310
    %v1439 = vpack.c.b16 %v1313, %v1311
    %v1440 = vpack.c.b16 %v1316, %v1314
    %v1441 = vpack.c.b16 %v1317, %v1315
    %v1442 = vpack.c.b16 %v1320, %v1318
    %v1443 = vpack.c.b16 %v1321, %v1319
    %v1444 = vpack.c.b16 %v1324, %v1322
    %v1445 = vpack.c.b16 %v1325, %v1323
    %v1446 = vpack.c.b16 %v1328, %v1326
    %v1447 = vpack.c.b16 %v1329, %v1327
    %v1448 = vpack.c.b16 %v1332, %v1330
    %v1449 = vpack.c.b16 %v1333, %v1331
    %v1450 = vpack.c.b16 %v1336, %v1334
    %v1451 = vpack.c.b16 %v1337, %v1335
    %v1452 = vpack.c.b16 %v1340, %v1338
    %v1453 = vpack.c.b16 %v1341, %v1339
    %v1454 = vpack.c.b16 %v1344, %v1342
    %v1455 = vpack.c.b16 %v1345, %v1343
    %v1456 = vpack.c.b16 %v1348, %v1346
    %v1457 = vpack.c.b16 %v1349, %v1347
    %v1458 = vpack.c.b16 %v1352, %v1350
    %v1459 = vpack.c.b16 %v1353, %v1351
    %v1460 = vpack.c.b16 %v1356, %v1354
    %v1461 = vpack.c.b16 %v1357, %v1355
    %v1462 = vpack.c.b16 %v1360, %v1358
    %v1463 = vpack.c.b16 %v1361, %v1359
    %v1464 = vpack.c.b16 %v1364, %v1362
    %v1465 = vpack.c.b16 %v1365, %v1363
    %v1466 = vpack.c.b16 %v1368, %v1366
    %v1467 = vpack.c.b16 %v1369, %v1367
    %v1468 = vpack.c.b16 %v1372, %v1370
    %v1469 = vpack.c.b16 %v1373, %v1371
    %v1470 = vpack.c.b16 %v1376, %v1374
    %v1471 = vpack.c.b16 %v1377, %v1375
    %v1472 = vpack.c.b16 %v1380, %v1378
    %v1473 = vpack.c.b16 %v1381, %v1379
    %v1474 = vpack.c.b16 %v1384, %v1382
    %v1475 = vpack.c.b16 %v1385, %v1383
    %v1476 = vpack.c.b16 %v1388, %v1386
    %v1477 = vpack.c.b16 %v1389, %v1387
    %v1478 = vpack.c.b16 %v1392, %v1390
    %v1479 = vpack.c.b16 %v1393, %v1391
    %v1480 = vpack.c.b16 %v1396, %v1394
    %v1481 = vpack.c.b16 %v1397, %v1395
    %v1482 = vpack.c.b16 %v1400, %v1398
    %v1483 = vpack.c.b16 %v1401, %v1399
    %v1484 = vpack.c.b16 %v1404, %v1402
    %v1485 = vpack.c.b16 %v1405, %v1403
    %v1486 = vpack.c.b16 %v1408, %v1406
    %v1487 = vpack.c.b16 %v1409, %v1407
    %v1488 = vpack.c.b16 %v1412, %v1410
    %v1489 = vpack.c.b16 %v1413, %v1411
    %v1490 = vpack.c.b16 %v1416, %v1414
    %v1491 = vpack.c.b16 %v1417, %v1415
    %v1492 = vpack.c.b16 %v1420, %v1418
    %v1493 = vpack.c.b16 %v1421, %v1419
    %v1494 = vpack.c.b16 %v1424, %v1422
    %v1495 = vpack.c.b16 %v1425, %v1423
    %v1496 = vpack.c.b16 %v1428, %v1426
    %v1497 = vpack.c.b16 %v1429, %v1427
    %v1498 = vpack.c.b16 %v1432, %v1430
    %v1499 = vpack.c.b16 %v1433, %v1431
    %v1500 = vpack.c.b16 %v1436, %v1434
    %v1501 = vpack.c.b16 %v1437, %v1435
    %1566 = vmatpush.bf16.msra.mxu0 %v1452
    %1567 = vmatpush.bf16.msra.mxu0 %v1450
    %1568 = vmatpush.bf16.msra.mxu0 %v1448
    %1569 = vmatpush.bf16.msra.mxu0 %v1446
    %1570 = vmatpush.bf16.msra.mxu0 %v1444
    %1571 = vmatpush.bf16.msra.mxu0 %v1442
    %1572 = vmatpush.bf16.msra.mxu0 %v1440
    %1573 = vmatpush.bf16.msra.mxu0 %v1438
    %1574 = vmatmul.bf16.gmra.mxu0 %v1238
    %v1575 = vpop.f32.mrf.mxu0
    %v1576 = vadd.f32 0.0, %v1575
    %v1577 = vpop.f32.mrf.mxu0
    %v1578 = vadd.f32 0.0, %v1577
    %1579 = vdwg.mxu0
    %1580 = vmatpush.bf16.msra.mxu0 %v1468
    %1581 = vmatpush.bf16.msra.mxu0 %v1466
    %1582 = vmatpush.bf16.msra.mxu0 %v1464
    %1583 = vmatpush.bf16.msra.mxu0 %v1462
    %1584 = vmatpush.bf16.msra.mxu0 %v1460
    %1585 = vmatpush.bf16.msra.mxu0 %v1458
    %1586 = vmatpush.bf16.msra.mxu0 %v1456
    %1587 = vmatpush.bf16.msra.mxu0 %v1454
    %1588 = vmatmul.bf16.gmra.mxu0 %v1239
    %v1589 = vpop.f32.mrf.mxu0
    %v1590 = vadd.f32 %v1576, %v1589
    %v1591 = vpop.f32.mrf.mxu0
    %v1592 = vadd.f32 %v1578, %v1591
    %1593 = vdwg.mxu0
    %1594 = vmatpush.bf16.msra.mxu0 %v1484
    %1595 = vmatpush.bf16.msra.mxu0 %v1482
    %1596 = vmatpush.bf16.msra.mxu0 %v1480
    %1597 = vmatpush.bf16.msra.mxu0 %v1478
    %1598 = vmatpush.bf16.msra.mxu0 %v1476
    %1599 = vmatpush.bf16.msra.mxu0 %v1474
    %1600 = vmatpush.bf16.msra.mxu0 %v1472
    %1601 = vmatpush.bf16.msra.mxu0 %v1470
    %1602 = vmatmul.bf16.gmra.mxu0 %v1240
    %v1603 = vpop.f32.mrf.mxu0
    %v1604 = vadd.f32 %v1590, %v1603
    %v1605 = vpop.f32.mrf.mxu0
    %v1606 = vadd.f32 %v1592, %v1605
    %1607 = vdwg.mxu0
    %1608 = vmatpush.bf16.msra.mxu0 %v1500
    %1609 = vmatpush.bf16.msra.mxu0 %v1498
    %1610 = vmatpush.bf16.msra.mxu0 %v1496
    %1611 = vmatpush.bf16.msra.mxu0 %v1494
    %1612 = vmatpush.bf16.msra.mxu0 %v1492
    %1613 = vmatpush.bf16.msra.mxu0 %v1490
    %1614 = vmatpush.bf16.msra.mxu0 %v1488
    %1615 = vmatpush.bf16.msra.mxu0 %v1486
    %1616 = vmatmul.bf16.gmra.mxu0 %v1241
    %v1617 = vpop.f32.mrf.mxu0
    %v1618 = vadd.f32 %v1604, %v1617
    %v1619 = vpop.f32.mrf.mxu0
    %v1620 = vadd.f32 %v1606, %v1619
    %1621 = vdwg.mxu0
    %1622 = vmatpush.bf16.msra.mxu0 %v1453
    %1623 = vmatpush.bf16.msra.mxu0 %v1451
    %1624 = vmatpush.bf16.msra.mxu0 %v1449
    %1625 = vmatpush.bf16.msra.mxu0 %v1447
    %1626 = vmatpush.bf16.msra.mxu0 %v1445
    %1627 = vmatpush.bf16.msra.mxu0 %v1443
    %1628 = vmatpush.bf16.msra.mxu0 %v1441
    %1629 = vmatpush.bf16.msra.mxu0 %v1439
    %1630 = vmatmul.bf16.gmra.mxu0 %v1238
    %v1631 = vpop.f32.mrf.mxu0
    %v1632 = vadd.f32 0.0, %v1631
    %v1633 = vpop.f32.mrf.mxu0
    %v1634 = vadd.f32 0.0, %v1633
    %1635 = vdwg.mxu0
    %1636 = vmatpush.bf16.msra.mxu0 %v1469
    %1637 = vmatpush.bf16.msra.mxu0 %v1467
    %1638 = vmatpush.bf16.msra.mxu0 %v1465
    %1639 = vmatpush.bf16.msra.mxu0 %v1463
    %1640 = vmatpush.bf16.msra.mxu0 %v1461
    %1641 = vmatpush.bf16.msra.mxu0 %v1459
    %1642 = vmatpush.bf16.msra.mxu0 %v1457
    %1643 = vmatpush.bf16.msra.mxu0 %v1455
    %1644 = vmatmul.bf16.gmra.mxu0 %v1239
    %v1645 = vpop.f32.mrf.mxu0
    %v1646 = vadd.f32 %v1632, %v1645
    %v1647 = vpop.f32.mrf.mxu0
    %v1648 = vadd.f32 %v1634, %v1647
    %1649 = vdwg.mxu0
    %1650 = vmatpush.bf16.msra.mxu0 %v1485
    %1651 = vmatpush.bf16.msra.mxu0 %v1483
    %1652 = vmatpush.bf16.msra.mxu0 %v1481
    %1653 = vmatpush.bf16.msra.mxu0 %v1479
    %1654 = vmatpush.bf16.msra.mxu0 %v1477
    %1655 = vmatpush.bf16.msra.mxu0 %v1475
    %1656 = vmatpush.bf16.msra.mxu0 %v1473
    %1657 = vmatpush.bf16.msra.mxu0 %v1471
    %1658 = vmatmul.bf16.gmra.mxu0 %v1240
    %v1659 = vpop.f32.mrf.mxu0
    %v1660 = vadd.f32 %v1646, %v1659
    %v1661 = vpop.f32.mrf.mxu0
    %v1662 = vadd.f32 %v1648, %v1661
    %1663 = vdwg.mxu0
    %1664 = vmatpush.bf16.msra.mxu0 %v1501
    %1665 = vmatpush.bf16.msra.mxu0 %v1499
    %1666 = vmatpush.bf16.msra.mxu0 %v1497
    %1667 = vmatpush.bf16.msra.mxu0 %v1495
    %1668 = vmatpush.bf16.msra.mxu0 %v1493
    %1669 = vmatpush.bf16.msra.mxu0 %v1491
    %1670 = vmatpush.bf16.msra.mxu0 %v1489
    %1671 = vmatpush.bf16.msra.mxu0 %v1487
    %1672 = vmatmul.bf16.gmra.mxu0 %v1241
    %v1673 = vpop.f32.mrf.mxu0
    %v1674 = vadd.f32 %v1660, %v1673
    %v1675 = vpop.f32.mrf.mxu0
    %v1676 = vadd.f32 %v1662, %v1675
    %1677 = vdwg.mxu0
    %v1682 = vunpack.c.l.b16 %v1077
    %v1683 = vunpack.c.h.b16 %v1077
    %v1684 = vunpack.c.l.b16 %v1078
    %v1685 = vunpack.c.h.b16 %v1078
    %v1686 = vunpack.c.l.b16 %v1079
    %v1687 = vunpack.c.h.b16 %v1079
    %v1688 = vunpack.c.l.b16 %v1080
    %v1689 = vunpack.c.h.b16 %v1080
    %v1690 = vpack.c.b16 %v1686, %v1682
    %v1691 = vpack.c.b16 %v1687, %v1683
    %v1692 = vpack.c.b16 %v1688, %v1684
    %v1693 = vpack.c.b16 %v1689, %v1685
    %v1762 = vunpack.c.l.b16 %v1097
    %v1763 = vunpack.c.h.b16 %v1097
    %v1764 = vunpack.c.l.b16 %v1098
    %v1765 = vunpack.c.h.b16 %v1098
    %v1766 = vunpack.c.l.b16 %v1099
    %v1767 = vunpack.c.h.b16 %v1099
    %v1768 = vunpack.c.l.b16 %v1100
    %v1769 = vunpack.c.h.b16 %v1100
    %v1770 = vunpack.c.l.b16 %v1101
    %v1771 = vunpack.c.h.b16 %v1101
    %v1772 = vunpack.c.l.b16 %v1102
    %v1773 = vunpack.c.h.b16 %v1102
    %v1774 = vunpack.c.l.b16 %v1103
    %v1775 = vunpack.c.h.b16 %v1103
    %v1776 = vunpack.c.l.b16 %v1104
    %v1777 = vunpack.c.h.b16 %v1104
    %v1778 = vunpack.c.l.b16 %v1105
    %v1779 = vunpack.c.h.b16 %v1105
    %v1780 = vunpack.c.l.b16 %v1106
    %v1781 = vunpack.c.h.b16 %v1106
    %v1782 = vunpack.c.l.b16 %v1107
    %v1783 = vunpack.c.h.b16 %v1107
    %v1784 = vunpack.c.l.b16 %v1108
    %v1785 = vunpack.c.h.b16 %v1108
    %v1786 = vunpack.c.l.b16 %v1109
    %v1787 = vunpack.c.h.b16 %v1109
    %v1788 = vunpack.c.l.b16 %v1110
    %v1789 = vunpack.c.h.b16 %v1110
    %v1790 = vunpack.c.l.b16 %v1111
    %v1791 = vunpack.c.h.b16 %v1111
    %v1792 = vunpack.c.l.b16 %v1112
    %v1793 = vunpack.c.h.b16 %v1112
    %v1794 = vunpack.c.l.b16 %v1113
    %v1795 = vunpack.c.h.b16 %v1113
    %v1796 = vunpack.c.l.b16 %v1114
    %v1797 = vunpack.c.h.b16 %v1114
    %v1798 = vunpack.c.l.b16 %v1115
    %v1799 = vunpack.c.h.b16 %v1115
    %v1800 = vunpack.c.l.b16 %v1116
    %v1801 = vunpack.c.h.b16 %v1116
    %v1802 = vunpack.c.l.b16 %v1117
    %v1803 = vunpack.c.h.b16 %v1117
    %v1804 = vunpack.c.l.b16 %v1118
    %v1805 = vunpack.c.h.b16 %v1118
    %v1806 = vunpack.c.l.b16 %v1119
    %v1807 = vunpack.c.h.b16 %v1119
    %v1808 = vunpack.c.l.b16 %v1120
    %v1809 = vunpack.c.h.b16 %v1120
    %v1810 = vunpack.c.l.b16 %v1121
    %v1811 = vunpack.c.h.b16 %v1121
    %v1812 = vunpack.c.l.b16 %v1122
    %v1813 = vunpack.c.h.b16 %v1122
    %v1814 = vunpack.c.l.b16 %v1123
    %v1815 = vunpack.c.h.b16 %v1123
    %v1816 = vunpack.c.l.b16 %v1124
    %v1817 = vunpack.c.h.b16 %v1124
    %v1818 = vunpack.c.l.b16 %v1125
    %v1819 = vunpack.c.h.b16 %v1125
    %v1820 = vunpack.c.l.b16 %v1126
    %v1821 = vunpack.c.h.b16 %v1126
    %v1822 = vunpack.c.l.b16 %v1127
    %v1823 = vunpack.c.h.b16 %v1127
    %v1824 = vunpack.c.l.b16 %v1128
    %v1825 = vunpack.c.h.b16 %v1128
    %v1826 = vunpack.c.l.b16 %v1129
    %v1827 = vunpack.c.h.b16 %v1129
    %v1828 = vunpack.c.l.b16 %v1130
    %v1829 = vunpack.c.h.b16 %v1130
    %v1830 = vunpack.c.l.b16 %v1131
    %v1831 = vunpack.c.h.b16 %v1131
    %v1832 = vunpack.c.l.b16 %v1132
    %v1833 = vunpack.c.h.b16 %v1132
    %v1834 = vunpack.c.l.b16 %v1133
    %v1835 = vunpack.c.h.b16 %v1133
    %v1836 = vunpack.c.l.b16 %v1134
    %v1837 = vunpack.c.h.b16 %v1134
    %v1838 = vunpack.c.l.b16 %v1135
    %v1839 = vunpack.c.h.b16 %v1135
    %v1840 = vunpack.c.l.b16 %v1136
    %v1841 = vunpack.c.h.b16 %v1136
    %v1842 = vunpack.c.l.b16 %v1137
    %v1843 = vunpack.c.h.b16 %v1137
    %v1844 = vunpack.c.l.b16 %v1138
    %v1845 = vunpack.c.h.b16 %v1138
    %v1846 = vunpack.c.l.b16 %v1139
    %v1847 = vunpack.c.h.b16 %v1139
    %v1848 = vunpack.c.l.b16 %v1140
    %v1849 = vunpack.c.h.b16 %v1140
    %v1850 = vunpack.c.l.b16 %v1141
    %v1851 = vunpack.c.h.b16 %v1141
    %v1852 = vunpack.c.l.b16 %v1142
    %v1853 = vunpack.c.h.b16 %v1142
    %v1854 = vunpack.c.l.b16 %v1143
    %v1855 = vunpack.c.h.b16 %v1143
    %v1856 = vunpack.c.l.b16 %v1144
    %v1857 = vunpack.c.h.b16 %v1144
    %v1858 = vunpack.c.l.b16 %v1145
    %v1859 = vunpack.c.h.b16 %v1145
    %v1860 = vunpack.c.l.b16 %v1146
    %v1861 = vunpack.c.h.b16 %v1146
    %v1862 = vunpack.c.l.b16 %v1147
    %v1863 = vunpack.c.h.b16 %v1147
    %v1864 = vunpack.c.l.b16 %v1148
    %v1865 = vunpack.c.h.b16 %v1148
    %v1866 = vunpack.c.l.b16 %v1149
    %v1867 = vunpack.c.h.b16 %v1149
    %v1868 = vunpack.c.l.b16 %v1150
    %v1869 = vunpack.c.h.b16 %v1150
    %v1870 = vunpack.c.l.b16 %v1151
    %v1871 = vunpack.c.h.b16 %v1151
    %v1872 = vunpack.c.l.b16 %v1152
    %v1873 = vunpack.c.h.b16 %v1152
    %v1874 = vunpack.c.l.b16 %v1153
    %v1875 = vunpack.c.h.b16 %v1153
    %v1876 = vunpack.c.l.b16 %v1154
    %v1877 = vunpack.c.h.b16 %v1154
    %v1878 = vunpack.c.l.b16 %v1155
    %v1879 = vunpack.c.h.b16 %v1155
    %v1880 = vunpack.c.l.b16 %v1156
    %v1881 = vunpack.c.h.b16 %v1156
    %v1882 = vunpack.c.l.b16 %v1157
    %v1883 = vunpack.c.h.b16 %v1157
    %v1884 = vunpack.c.l.b16 %v1158
    %v1885 = vunpack.c.h.b16 %v1158
    %v1886 = vunpack.c.l.b16 %v1159
    %v1887 = vunpack.c.h.b16 %v1159
    %v1888 = vunpack.c.l.b16 %v1160
    %v1889 = vunpack.c.h.b16 %v1160
    %v1890 = vpack.c.b16 %v1764, %v1762
    %v1891 = vpack.c.b16 %v1765, %v1763
    %v1892 = vpack.c.b16 %v1768, %v1766
    %v1893 = vpack.c.b16 %v1769, %v1767
    %v1894 = vpack.c.b16 %v1772, %v1770
    %v1895 = vpack.c.b16 %v1773, %v1771
    %v1896 = vpack.c.b16 %v1776, %v1774
    %v1897 = vpack.c.b16 %v1777, %v1775
    %v1898 = vpack.c.b16 %v1780, %v1778
    %v1899 = vpack.c.b16 %v1781, %v1779
    %v1900 = vpack.c.b16 %v1784, %v1782
    %v1901 = vpack.c.b16 %v1785, %v1783
    %v1902 = vpack.c.b16 %v1788, %v1786
    %v1903 = vpack.c.b16 %v1789, %v1787
    %v1904 = vpack.c.b16 %v1792, %v1790
    %v1905 = vpack.c.b16 %v1793, %v1791
    %v1906 = vpack.c.b16 %v1796, %v1794
    %v1907 = vpack.c.b16 %v1797, %v1795
    %v1908 = vpack.c.b16 %v1800, %v1798
    %v1909 = vpack.c.b16 %v1801, %v1799
    %v1910 = vpack.c.b16 %v1804, %v1802
    %v1911 = vpack.c.b16 %v1805, %v1803
    %v1912 = vpack.c.b16 %v1808, %v1806
    %v1913 = vpack.c.b16 %v1809, %v1807
    %v1914 = vpack.c.b16 %v1812, %v1810
    %v1915 = vpack.c.b16 %v1813, %v1811
    %v1916 = vpack.c.b16 %v1816, %v1814
    %v1917 = vpack.c.b16 %v1817, %v1815
    %v1918 = vpack.c.b16 %v1820, %v1818
    %v1919 = vpack.c.b16 %v1821, %v1819
    %v1920 = vpack.c.b16 %v1824, %v1822
    %v1921 = vpack.c.b16 %v1825, %v1823
    %v1922 = vpack.c.b16 %v1828, %v1826
    %v1923 = vpack.c.b16 %v1829, %v1827
    %v1924 = vpack.c.b16 %v1832, %v1830
    %v1925 = vpack.c.b16 %v1833, %v1831
    %v1926 = vpack.c.b16 %v1836, %v1834
    %v1927 = vpack.c.b16 %v1837, %v1835
    %v1928 = vpack.c.b16 %v1840, %v1838
    %v1929 = vpack.c.b16 %v1841, %v1839
    %v1930 = vpack.c.b16 %v1844, %v1842
    %v1931 = vpack.c.b16 %v1845, %v1843
    %v1932 = vpack.c.b16 %v1848, %v1846
    %v1933 = vpack.c.b16 %v1849, %v1847
    %v1934 = vpack.c.b16 %v1852, %v1850
    %v1935 = vpack.c.b16 %v1853, %v1851
    %v1936 = vpack.c.b16 %v1856, %v1854
    %v1937 = vpack.c.b16 %v1857, %v1855
    %v1938 = vpack.c.b16 %v1860, %v1858
    %v1939 = vpack.c.b16 %v1861, %v1859
    %v1940 = vpack.c.b16 %v1864, %v1862
    %v1941 = vpack.c.b16 %v1865, %v1863
    %v1942 = vpack.c.b16 %v1868, %v1866
    %v1943 = vpack.c.b16 %v1869, %v1867
    %v1944 = vpack.c.b16 %v1872, %v1870
    %v1945 = vpack.c.b16 %v1873, %v1871
    %v1946 = vpack.c.b16 %v1876, %v1874
    %v1947 = vpack.c.b16 %v1877, %v1875
    %v1948 = vpack.c.b16 %v1880, %v1878
    %v1949 = vpack.c.b16 %v1881, %v1879
    %v1950 = vpack.c.b16 %v1884, %v1882
    %v1951 = vpack.c.b16 %v1885, %v1883
    %v1952 = vpack.c.b16 %v1888, %v1886
    %v1953 = vpack.c.b16 %v1889, %v1887
    %2018 = vmatpush.bf16.msra.mxu0 %v1904
    %2019 = vmatpush.bf16.msra.mxu0 %v1902
    %2020 = vmatpush.bf16.msra.mxu0 %v1900
    %2021 = vmatpush.bf16.msra.mxu0 %v1898
    %2022 = vmatpush.bf16.msra.mxu0 %v1896
    %2023 = vmatpush.bf16.msra.mxu0 %v1894
    %2024 = vmatpush.bf16.msra.mxu0 %v1892
    %2025 = vmatpush.bf16.msra.mxu0 %v1890
    %2026 = vmatmul.bf16.gmra.mxu0 %v1690
    %v2027 = vpop.f32.mrf.mxu0
    %v2028 = vadd.f32 %v1618, %v2027
    %v2029 = vpop.f32.mrf.mxu0
    %v2030 = vadd.f32 %v1620, %v2029
    %2031 = vdwg.mxu0
    %2032 = vmatpush.bf16.msra.mxu0 %v1920
    %2033 = vmatpush.bf16.msra.mxu0 %v1918
    %2034 = vmatpush.bf16.msra.mxu0 %v1916
    %2035 = vmatpush.bf16.msra.mxu0 %v1914
    %2036 = vmatpush.bf16.msra.mxu0 %v1912
    %2037 = vmatpush.bf16.msra.mxu0 %v1910
    %2038 = vmatpush.bf16.msra.mxu0 %v1908
    %2039 = vmatpush.bf16.msra.mxu0 %v1906
    %2040 = vmatmul.bf16.gmra.mxu0 %v1691
    %v2041 = vpop.f32.mrf.mxu0
    %v2042 = vadd.f32 %v2028, %v2041
    %v2043 = vpop.f32.mrf.mxu0
    %v2044 = vadd.f32 %v2030, %v2043
    %2045 = vdwg.mxu0
    %2046 = vmatpush.bf16.msra.mxu0 %v1936
    %2047 = vmatpush.bf16.msra.mxu0 %v1934
    %2048 = vmatpush.bf16.msra.mxu0 %v1932
    %2049 = vmatpush.bf16.msra.mxu0 %v1930
    %2050 = vmatpush.bf16.msra.mxu0 %v1928
    %2051 = vmatpush.bf16.msra.mxu0 %v1926
    %2052 = vmatpush.bf16.msra.mxu0 %v1924
    %2053 = vmatpush.bf16.msra.mxu0 %v1922
    %2054 = vmatmul.bf16.gmra.mxu0 %v1692
    %v2055 = vpop.f32.mrf.mxu0
    %v2056 = vadd.f32 %v2042, %v2055
    %v2057 = vpop.f32.mrf.mxu0
    %v2058 = vadd.f32 %v2044, %v2057
    %2059 = vdwg.mxu0
    %2060 = vmatpush.bf16.msra.mxu0 %v1952
    %2061 = vmatpush.bf16.msra.mxu0 %v1950
    %2062 = vmatpush.bf16.msra.mxu0 %v1948
    %2063 = vmatpush.bf16.msra.mxu0 %v1946
    %2064 = vmatpush.bf16.msra.mxu0 %v1944
    %2065 = vmatpush.bf16.msra.mxu0 %v1942
    %2066 = vmatpush.bf16.msra.mxu0 %v1940
    %2067 = vmatpush.bf16.msra.mxu0 %v1938
    %2068 = vmatmul.bf16.gmra.mxu0 %v1693
    %v2069 = vpop.f32.mrf.mxu0
    %v2070 = vadd.f32 %v2056, %v2069
    %v2071 = vpop.f32.mrf.mxu0
    %v2072 = vadd.f32 %v2058, %v2071
    %2073 = vdwg.mxu0
    %2074 = vmatpush.bf16.msra.mxu0 %v1905
    %2075 = vmatpush.bf16.msra.mxu0 %v1903
    %2076 = vmatpush.bf16.msra.mxu0 %v1901
    %2077 = vmatpush.bf16.msra.mxu0 %v1899
    %2078 = vmatpush.bf16.msra.mxu0 %v1897
    %2079 = vmatpush.bf16.msra.mxu0 %v1895
    %2080 = vmatpush.bf16.msra.mxu0 %v1893
    %2081 = vmatpush.bf16.msra.mxu0 %v1891
    %2082 = vmatmul.bf16.gmra.mxu0 %v1690
    %v2083 = vpop.f32.mrf.mxu0
    %v2084 = vadd.f32 %v1674, %v2083
    %v2085 = vpop.f32.mrf.mxu0
    %v2086 = vadd.f32 %v1676, %v2085
    %2087 = vdwg.mxu0
    %2088 = vmatpush.bf16.msra.mxu0 %v1921
    %2089 = vmatpush.bf16.msra.mxu0 %v1919
    %2090 = vmatpush.bf16.msra.mxu0 %v1917
    %2091 = vmatpush.bf16.msra.mxu0 %v1915
    %2092 = vmatpush.bf16.msra.mxu0 %v1913
    %2093 = vmatpush.bf16.msra.mxu0 %v1911
    %2094 = vmatpush.bf16.msra.mxu0 %v1909
    %2095 = vmatpush.bf16.msra.mxu0 %v1907
    %2096 = vmatmul.bf16.gmra.mxu0 %v1691
    %v2097 = vpop.f32.mrf.mxu0
    %v2098 = vadd.f32 %v2084, %v2097
    %v2099 = vpop.f32.mrf.mxu0
    %v2100 = vadd.f32 %v2086, %v2099
    %2101 = vdwg.mxu0
    %2102 = vmatpush.bf16.msra.mxu0 %v1937
    %2103 = vmatpush.bf16.msra.mxu0 %v1935
    %2104 = vmatpush.bf16.msra.mxu0 %v1933
    %2105 = vmatpush.bf16.msra.mxu0 %v1931
    %2106 = vmatpush.bf16.msra.mxu0 %v1929
    %2107 = vmatpush.bf16.msra.mxu0 %v1927
    %2108 = vmatpush.bf16.msra.mxu0 %v1925
    %2109 = vmatpush.bf16.msra.mxu0 %v1923
    %2110 = vmatmul.bf16.gmra.mxu0 %v1692
    %v2111 = vpop.f32.mrf.mxu0
    %v2112 = vadd.f32 %v2098, %v2111
    %v2113 = vpop.f32.mrf.mxu0
    %v2114 = vadd.f32 %v2100, %v2113
    %2115 = vdwg.mxu0
    %2116 = vmatpush.bf16.msra.mxu0 %v1953
    %2117 = vmatpush.bf16.msra.mxu0 %v1951
    %2118 = vmatpush.bf16.msra.mxu0 %v1949
    %2119 = vmatpush.bf16.msra.mxu0 %v1947
    %2120 = vmatpush.bf16.msra.mxu0 %v1945
    %2121 = vmatpush.bf16.msra.mxu0 %v1943
    %2122 = vmatpush.bf16.msra.mxu0 %v1941
    %2123 = vmatpush.bf16.msra.mxu0 %v1939
    %2124 = vmatmul.bf16.gmra.mxu0 %v1693
    %v2125 = vpop.f32.mrf.mxu0
    %v2126 = vadd.f32 %v2112, %v2125
    %v2127 = vpop.f32.mrf.mxu0
    %v2128 = vadd.f32 %v2114, %v2127
    %2129 = vdwg.mxu0
    %s2130 = scalar_lea.vmem [#allocation7], 1024
    %v2131 = vld [vmem:[%s2130] sm:$0xff]
    %v2132 = vld [vmem:[%s2130 + $0x8] sm:$0xff]
    %v2133 = vld [vmem:[%s2130 + $0x10] sm:$0xff]
    %v2134 = vld [vmem:[%s2130 + $0x18] sm:$0xff]
    %v2135 = vld [vmem:[%s2130 + $0x20] sm:$0xff]
    %v2136 = vld [vmem:[%s2130 + $0x28] sm:$0xff]
    %v2137 = vld [vmem:[%s2130 + $0x30] sm:$0xff]
    %v2138 = vld [vmem:[%s2130 + $0x38] sm:$0xff]
    %v2139 = vld [vmem:[%s2130 + $0x40] sm:$0xff]
    %v2140 = vld [vmem:[%s2130 + $0x48] sm:$0xff]
    %v2141 = vld [vmem:[%s2130 + $0x50] sm:$0xff]
    %v2142 = vld [vmem:[%s2130 + $0x58] sm:$0xff]
    %v2143 = vld [vmem:[%s2130 + $0x60] sm:$0xff]
    %v2144 = vld [vmem:[%s2130 + $0x68] sm:$0xff]
    %v2145 = vld [vmem:[%s2130 + $0x70] sm:$0xff]
    %v2146 = vld [vmem:[%s2130 + $0x78] sm:$0xff]
    %v2147 = vld [vmem:[%s2130 + $0x80] sm:$0xff]
    %v2148 = vld [vmem:[%s2130 + $0x88] sm:$0xff]
    %v2149 = vld [vmem:[%s2130 + $0x90] sm:$0xff]
    %v2150 = vld [vmem:[%s2130 + $0x98] sm:$0xff]
    %v2151 = vld [vmem:[%s2130 + $0xa0] sm:$0xff]
    %v2152 = vld [vmem:[%s2130 + $0xa8] sm:$0xff]
    %v2153 = vld [vmem:[%s2130 + $0xb0] sm:$0xff]
    %v2154 = vld [vmem:[%s2130 + $0xb8] sm:$0xff]
    %v2155 = vld [vmem:[%s2130 + $0xc0] sm:$0xff]
    %v2156 = vld [vmem:[%s2130 + $0xc8] sm:$0xff]
    %v2157 = vld [vmem:[%s2130 + $0xd0] sm:$0xff]
    %v2158 = vld [vmem:[%s2130 + $0xd8] sm:$0xff]
    %v2159 = vld [vmem:[%s2130 + $0xe0] sm:$0xff]
    %v2160 = vld [vmem:[%s2130 + $0xe8] sm:$0xff]
    %v2161 = vld [vmem:[%s2130 + $0xf0] sm:$0xff]
    %v2162 = vld [vmem:[%s2130 + $0xf8] sm:$0xff]
    %v2163 = vld [vmem:[%s2130 + $0x100] sm:$0xff]
    %v2164 = vld [vmem:[%s2130 + $0x108] sm:$0xff]
    %v2165 = vld [vmem:[%s2130 + $0x110] sm:$0xff]
    %v2166 = vld [vmem:[%s2130 + $0x118] sm:$0xff]
    %v2167 = vld [vmem:[%s2130 + $0x120] sm:$0xff]
    %v2168 = vld [vmem:[%s2130 + $0x128] sm:$0xff]
    %v2169 = vld [vmem:[%s2130 + $0x130] sm:$0xff]
    %v2170 = vld [vmem:[%s2130 + $0x138] sm:$0xff]
    %v2171 = vld [vmem:[%s2130 + $0x140] sm:$0xff]
    %v2172 = vld [vmem:[%s2130 + $0x148] sm:$0xff]
    %v2173 = vld [vmem:[%s2130 + $0x150] sm:$0xff]
    %v2174 = vld [vmem:[%s2130 + $0x158] sm:$0xff]
    %v2175 = vld [vmem:[%s2130 + $0x160] sm:$0xff]
    %v2176 = vld [vmem:[%s2130 + $0x168] sm:$0xff]
    %v2177 = vld [vmem:[%s2130 + $0x170] sm:$0xff]
    %v2178 = vld [vmem:[%s2130 + $0x178] sm:$0xff]
    %v2179 = vld [vmem:[%s2130 + $0x180] sm:$0xff]
    %v2180 = vld [vmem:[%s2130 + $0x188] sm:$0xff]
    %v2181 = vld [vmem:[%s2130 + $0x190] sm:$0xff]
    %v2182 = vld [vmem:[%s2130 + $0x198] sm:$0xff]
    %v2183 = vld [vmem:[%s2130 + $0x1a0] sm:$0xff]
    %v2184 = vld [vmem:[%s2130 + $0x1a8] sm:$0xff]
    %v2185 = vld [vmem:[%s2130 + $0x1b0] sm:$0xff]
    %v2186 = vld [vmem:[%s2130 + $0x1b8] sm:$0xff]
    %v2187 = vld [vmem:[%s2130 + $0x1c0] sm:$0xff]
    %v2188 = vld [vmem:[%s2130 + $0x1c8] sm:$0xff]
    %v2189 = vld [vmem:[%s2130 + $0x1d0] sm:$0xff]
    %v2190 = vld [vmem:[%s2130 + $0x1d8] sm:$0xff]
    %v2191 = vld [vmem:[%s2130 + $0x1e0] sm:$0xff]
    %v2192 = vld [vmem:[%s2130 + $0x1e8] sm:$0xff]
    %v2193 = vld [vmem:[%s2130 + $0x1f0] sm:$0xff]
    %v2194 = vld [vmem:[%s2130 + $0x1f8] sm:$0xff]
    %v2199 = vunpack.c.l.b16 %v1085
    %v2200 = vunpack.c.h.b16 %v1085
    %v2201 = vunpack.c.l.b16 %v1086
    %v2202 = vunpack.c.h.b16 %v1086
    %v2203 = vunpack.c.l.b16 %v1087
    %v2204 = vunpack.c.h.b16 %v1087
    %v2205 = vunpack.c.l.b16 %v1088
    %v2206 = vunpack.c.h.b16 %v1088
    %v2207 = vpack.c.b16 %v2203, %v2199
    %v2208 = vpack.c.b16 %v2204, %v2200
    %v2209 = vpack.c.b16 %v2205, %v2201
    %v2210 = vpack.c.b16 %v2206, %v2202
    %v2279 = vunpack.c.l.b16 %v2131
    %v2280 = vunpack.c.h.b16 %v2131
    %v2281 = vunpack.c.l.b16 %v2132
    %v2282 = vunpack.c.h.b16 %v2132
    %v2283 = vunpack.c.l.b16 %v2133
    %v2284 = vunpack.c.h.b16 %v2133
    %v2285 = vunpack.c.l.b16 %v2134
    %v2286 = vunpack.c.h.b16 %v2134
    %v2287 = vunpack.c.l.b16 %v2135
    %v2288 = vunpack.c.h.b16 %v2135
    %v2289 = vunpack.c.l.b16 %v2136
    %v2290 = vunpack.c.h.b16 %v2136
    %v2291 = vunpack.c.l.b16 %v2137
    %v2292 = vunpack.c.h.b16 %v2137
    %v2293 = vunpack.c.l.b16 %v2138
    %v2294 = vunpack.c.h.b16 %v2138
    %v2295 = vunpack.c.l.b16 %v2139
    %v2296 = vunpack.c.h.b16 %v2139
    %v2297 = vunpack.c.l.b16 %v2140
    %v2298 = vunpack.c.h.b16 %v2140
    %v2299 = vunpack.c.l.b16 %v2141
    %v2300 = vunpack.c.h.b16 %v2141
    %v2301 = vunpack.c.l.b16 %v2142
    %v2302 = vunpack.c.h.b16 %v2142
    %v2303 = vunpack.c.l.b16 %v2143
    %v2304 = vunpack.c.h.b16 %v2143
    %v2305 = vunpack.c.l.b16 %v2144
    %v2306 = vunpack.c.h.b16 %v2144
    %v2307 = vunpack.c.l.b16 %v2145
    %v2308 = vunpack.c.h.b16 %v2145
    %v2309 = vunpack.c.l.b16 %v2146
    %v2310 = vunpack.c.h.b16 %v2146
    %v2311 = vunpack.c.l.b16 %v2147
    %v2312 = vunpack.c.h.b16 %v2147
    %v2313 = vunpack.c.l.b16 %v2148
    %v2314 = vunpack.c.h.b16 %v2148
    %v2315 = vunpack.c.l.b16 %v2149
    %v2316 = vunpack.c.h.b16 %v2149
    %v2317 = vunpack.c.l.b16 %v2150
    %v2318 = vunpack.c.h.b16 %v2150
    %v2319 = vunpack.c.l.b16 %v2151
    %v2320 = vunpack.c.h.b16 %v2151
    %v2321 = vunpack.c.l.b16 %v2152
    %v2322 = vunpack.c.h.b16 %v2152
    %v2323 = vunpack.c.l.b16 %v2153
    %v2324 = vunpack.c.h.b16 %v2153
    %v2325 = vunpack.c.l.b16 %v2154
    %v2326 = vunpack.c.h.b16 %v2154
    %v2327 = vunpack.c.l.b16 %v2155
    %v2328 = vunpack.c.h.b16 %v2155
    %v2329 = vunpack.c.l.b16 %v2156
    %v2330 = vunpack.c.h.b16 %v2156
    %v2331 = vunpack.c.l.b16 %v2157
    %v2332 = vunpack.c.h.b16 %v2157
    %v2333 = vunpack.c.l.b16 %v2158
    %v2334 = vunpack.c.h.b16 %v2158
    %v2335 = vunpack.c.l.b16 %v2159
    %v2336 = vunpack.c.h.b16 %v2159
    %v2337 = vunpack.c.l.b16 %v2160
    %v2338 = vunpack.c.h.b16 %v2160
    %v2339 = vunpack.c.l.b16 %v2161
    %v2340 = vunpack.c.h.b16 %v2161
    %v2341 = vunpack.c.l.b16 %v2162
    %v2342 = vunpack.c.h.b16 %v2162
    %v2343 = vunpack.c.l.b16 %v2163
    %v2344 = vunpack.c.h.b16 %v2163
    %v2345 = vunpack.c.l.b16 %v2164
    %v2346 = vunpack.c.h.b16 %v2164
    %v2347 = vunpack.c.l.b16 %v2165
    %v2348 = vunpack.c.h.b16 %v2165
    %v2349 = vunpack.c.l.b16 %v2166
    %v2350 = vunpack.c.h.b16 %v2166
    %v2351 = vunpack.c.l.b16 %v2167
    %v2352 = vunpack.c.h.b16 %v2167
    %v2353 = vunpack.c.l.b16 %v2168
    %v2354 = vunpack.c.h.b16 %v2168
    %v2355 = vunpack.c.l.b16 %v2169
    %v2356 = vunpack.c.h.b16 %v2169
    %v2357 = vunpack.c.l.b16 %v2170
    %v2358 = vunpack.c.h.b16 %v2170
    %v2359 = vunpack.c.l.b16 %v2171
    %v2360 = vunpack.c.h.b16 %v2171
    %v2361 = vunpack.c.l.b16 %v2172
    %v2362 = vunpack.c.h.b16 %v2172
    %v2363 = vunpack.c.l.b16 %v2173
    %v2364 = vunpack.c.h.b16 %v2173
    %v2365 = vunpack.c.l.b16 %v2174
    %v2366 = vunpack.c.h.b16 %v2174
    %v2367 = vunpack.c.l.b16 %v2175
    %v2368 = vunpack.c.h.b16 %v2175
    %v2369 = vunpack.c.l.b16 %v2176
    %v2370 = vunpack.c.h.b16 %v2176
    %v2371 = vunpack.c.l.b16 %v2177
    %v2372 = vunpack.c.h.b16 %v2177
    %v2373 = vunpack.c.l.b16 %v2178
    %v2374 = vunpack.c.h.b16 %v2178
    %v2375 = vunpack.c.l.b16 %v2179
    %v2376 = vunpack.c.h.b16 %v2179
    %v2377 = vunpack.c.l.b16 %v2180
    %v2378 = vunpack.c.h.b16 %v2180
    %v2379 = vunpack.c.l.b16 %v2181
    %v2380 = vunpack.c.h.b16 %v2181
    %v2381 = vunpack.c.l.b16 %v2182
    %v2382 = vunpack.c.h.b16 %v2182
    %v2383 = vunpack.c.l.b16 %v2183
    %v2384 = vunpack.c.h.b16 %v2183
    %v2385 = vunpack.c.l.b16 %v2184
    %v2386 = vunpack.c.h.b16 %v2184
    %v2387 = vunpack.c.l.b16 %v2185
    %v2388 = vunpack.c.h.b16 %v2185
    %v2389 = vunpack.c.l.b16 %v2186
    %v2390 = vunpack.c.h.b16 %v2186
    %v2391 = vunpack.c.l.b16 %v2187
    %v2392 = vunpack.c.h.b16 %v2187
    %v2393 = vunpack.c.l.b16 %v2188
    %v2394 = vunpack.c.h.b16 %v2188
    %v2395 = vunpack.c.l.b16 %v2189
    %v2396 = vunpack.c.h.b16 %v2189
    %v2397 = vunpack.c.l.b16 %v2190
    %v2398 = vunpack.c.h.b16 %v2190
    %v2399 = vunpack.c.l.b16 %v2191
    %v2400 = vunpack.c.h.b16 %v2191
    %v2401 = vunpack.c.l.b16 %v2192
    %v2402 = vunpack.c.h.b16 %v2192
    %v2403 = vunpack.c.l.b16 %v2193
    %v2404 = vunpack.c.h.b16 %v2193
    %v2405 = vunpack.c.l.b16 %v2194
    %v2406 = vunpack.c.h.b16 %v2194
    %v2407 = vpack.c.b16 %v2281, %v2279
    %v2408 = vpack.c.b16 %v2282, %v2280
    %v2409 = vpack.c.b16 %v2285, %v2283
    %v2410 = vpack.c.b16 %v2286, %v2284
    %v2411 = vpack.c.b16 %v2289, %v2287
    %v2412 = vpack.c.b16 %v2290, %v2288
    %v2413 = vpack.c.b16 %v2293, %v2291
    %v2414 = vpack.c.b16 %v2294, %v2292
    %v2415 = vpack.c.b16 %v2297, %v2295
    %v2416 = vpack.c.b16 %v2298, %v2296
    %v2417 = vpack.c.b16 %v2301, %v2299
    %v2418 = vpack.c.b16 %v2302, %v2300
    %v2419 = vpack.c.b16 %v2305, %v2303
    %v2420 = vpack.c.b16 %v2306, %v2304
    %v2421 = vpack.c.b16 %v2309, %v2307
    %v2422 = vpack.c.b16 %v2310, %v2308
    %v2423 = vpack.c.b16 %v2313, %v2311
    %v2424 = vpack.c.b16 %v2314, %v2312
    %v2425 = vpack.c.b16 %v2317, %v2315
    %v2426 = vpack.c.b16 %v2318, %v2316
    %v2427 = vpack.c.b16 %v2321, %v2319
    %v2428 = vpack.c.b16 %v2322, %v2320
    %v2429 = vpack.c.b16 %v2325, %v2323
    %v2430 = vpack.c.b16 %v2326, %v2324
    %v2431 = vpack.c.b16 %v2329, %v2327
    %v2432 = vpack.c.b16 %v2330, %v2328
    %v2433 = vpack.c.b16 %v2333, %v2331
    %v2434 = vpack.c.b16 %v2334, %v2332
    %v2435 = vpack.c.b16 %v2337, %v2335
    %v2436 = vpack.c.b16 %v2338, %v2336
    %v2437 = vpack.c.b16 %v2341, %v2339
    %v2438 = vpack.c.b16 %v2342, %v2340
    %v2439 = vpack.c.b16 %v2345, %v2343
    %v2440 = vpack.c.b16 %v2346, %v2344
    %v2441 = vpack.c.b16 %v2349, %v2347
    %v2442 = vpack.c.b16 %v2350, %v2348
    %v2443 = vpack.c.b16 %v2353, %v2351
    %v2444 = vpack.c.b16 %v2354, %v2352
    %v2445 = vpack.c.b16 %v2357, %v2355
    %v2446 = vpack.c.b16 %v2358, %v2356
    %v2447 = vpack.c.b16 %v2361, %v2359
    %v2448 = vpack.c.b16 %v2362, %v2360
    %v2449 = vpack.c.b16 %v2365, %v2363
    %v2450 = vpack.c.b16 %v2366, %v2364
    %v2451 = vpack.c.b16 %v2369, %v2367
    %v2452 = vpack.c.b16 %v2370, %v2368
    %v2453 = vpack.c.b16 %v2373, %v2371
    %v2454 = vpack.c.b16 %v2374, %v2372
    %v2455 = vpack.c.b16 %v2377, %v2375
    %v2456 = vpack.c.b16 %v2378, %v2376
    %v2457 = vpack.c.b16 %v2381, %v2379
    %v2458 = vpack.c.b16 %v2382, %v2380
    %v2459 = vpack.c.b16 %v2385, %v2383
    %v2460 = vpack.c.b16 %v2386, %v2384
    %v2461 = vpack.c.b16 %v2389, %v2387
    %v2462 = vpack.c.b16 %v2390, %v2388
    %v2463 = vpack.c.b16 %v2393, %v2391
    %v2464 = vpack.c.b16 %v2394, %v2392
    %v2465 = vpack.c.b16 %v2397, %v2395
    %v2466 = vpack.c.b16 %v2398, %v2396
    %v2467 = vpack.c.b16 %v2401, %v2399
    %v2468 = vpack.c.b16 %v2402, %v2400
    %v2469 = vpack.c.b16 %v2405, %v2403
    %v2470 = vpack.c.b16 %v2406, %v2404
    %2535 = vmatpush.bf16.msra.mxu0 %v2421
    %2536 = vmatpush.bf16.msra.mxu0 %v2419
    %2537 = vmatpush.bf16.msra.mxu0 %v2417
    %2538 = vmatpush.bf16.msra.mxu0 %v2415
    %2539 = vmatpush.bf16.msra.mxu0 %v2413
    %2540 = vmatpush.bf16.msra.mxu0 %v2411
    %2541 = vmatpush.bf16.msra.mxu0 %v2409
    %2542 = vmatpush.bf16.msra.mxu0 %v2407
    %2543 = vmatmul.bf16.gmra.mxu0 %v2207
    %v2544 = vpop.f32.mrf.mxu0
    %v2545 = vadd.f32 0.0, %v2544
    %v2546 = vpop.f32.mrf.mxu0
    %v2547 = vadd.f32 0.0, %v2546
    %2548 = vdwg.mxu0
    %2549 = vmatpush.bf16.msra.mxu0 %v2437
    %2550 = vmatpush.bf16.msra.mxu0 %v2435
    %2551 = vmatpush.bf16.msra.mxu0 %v2433
    %2552 = vmatpush.bf16.msra.mxu0 %v2431
    %2553 = vmatpush.bf16.msra.mxu0 %v2429
    %2554 = vmatpush.bf16.msra.mxu0 %v2427
    %2555 = vmatpush.bf16.msra.mxu0 %v2425
    %2556 = vmatpush.bf16.msra.mxu0 %v2423
    %2557 = vmatmul.bf16.gmra.mxu0 %v2208
    %v2558 = vpop.f32.mrf.mxu0
    %v2559 = vadd.f32 %v2545, %v2558
    %v2560 = vpop.f32.mrf.mxu0
    %v2561 = vadd.f32 %v2547, %v2560
    %2562 = vdwg.mxu0
    %2563 = vmatpush.bf16.msra.mxu0 %v2453
    %2564 = vmatpush.bf16.msra.mxu0 %v2451
    %2565 = vmatpush.bf16.msra.mxu0 %v2449
    %2566 = vmatpush.bf16.msra.mxu0 %v2447
    %2567 = vmatpush.bf16.msra.mxu0 %v2445
    %2568 = vmatpush.bf16.msra.mxu0 %v2443
    %2569 = vmatpush.bf16.msra.mxu0 %v2441
    %2570 = vmatpush.bf16.msra.mxu0 %v2439
    %2571 = vmatmul.bf16.gmra.mxu0 %v2209
    %v2572 = vpop.f32.mrf.mxu0
    %v2573 = vadd.f32 %v2559, %v2572
    %v2574 = vpop.f32.mrf.mxu0
    %v2575 = vadd.f32 %v2561, %v2574
    %2576 = vdwg.mxu0
    %2577 = vmatpush.bf16.msra.mxu0 %v2469
    %2578 = vmatpush.bf16.msra.mxu0 %v2467
    %2579 = vmatpush.bf16.msra.mxu0 %v2465
    %2580 = vmatpush.bf16.msra.mxu0 %v2463
    %2581 = vmatpush.bf16.msra.mxu0 %v2461
    %2582 = vmatpush.bf16.msra.mxu0 %v2459
    %2583 = vmatpush.bf16.msra.mxu0 %v2457
    %2584 = vmatpush.bf16.msra.mxu0 %v2455
    %2585 = vmatmul.bf16.gmra.mxu0 %v2210
    %v2586 = vpop.f32.mrf.mxu0
    %v2587 = vadd.f32 %v2573, %v2586
    %v2588 = vpop.f32.mrf.mxu0
    %v2589 = vadd.f32 %v2575, %v2588
    %2590 = vdwg.mxu0
    %2591 = vmatpush.bf16.msra.mxu0 %v2422
    %2592 = vmatpush.bf16.msra.mxu0 %v2420
    %2593 = vmatpush.bf16.msra.mxu0 %v2418
    %2594 = vmatpush.bf16.msra.mxu0 %v2416
    %2595 = vmatpush.bf16.msra.mxu0 %v2414
    %2596 = vmatpush.bf16.msra.mxu0 %v2412
    %2597 = vmatpush.bf16.msra.mxu0 %v2410
    %2598 = vmatpush.bf16.msra.mxu0 %v2408
    %2599 = vmatmul.bf16.gmra.mxu0 %v2207
    %v2600 = vpop.f32.mrf.mxu0
    %v2601 = vadd.f32 0.0, %v2600
    %v2602 = vpop.f32.mrf.mxu0
    %v2603 = vadd.f32 0.0, %v2602
    %2604 = vdwg.mxu0
    %2605 = vmatpush.bf16.msra.mxu0 %v2438
    %2606 = vmatpush.bf16.msra.mxu0 %v2436
    %2607 = vmatpush.bf16.msra.mxu0 %v2434
    %2608 = vmatpush.bf16.msra.mxu0 %v2432
    %2609 = vmatpush.bf16.msra.mxu0 %v2430
    %2610 = vmatpush.bf16.msra.mxu0 %v2428
    %2611 = vmatpush.bf16.msra.mxu0 %v2426
    %2612 = vmatpush.bf16.msra.mxu0 %v2424
    %2613 = vmatmul.bf16.gmra.mxu0 %v2208
    %v2614 = vpop.f32.mrf.mxu0
    %v2615 = vadd.f32 %v2601, %v2614
    %v2616 = vpop.f32.mrf.mxu0
    %v2617 = vadd.f32 %v2603, %v2616
    %2618 = vdwg.mxu0
    %2619 = vmatpush.bf16.msra.mxu0 %v2454
    %2620 = vmatpush.bf16.msra.mxu0 %v2452
    %2621 = vmatpush.bf16.msra.mxu0 %v2450
    %2622 = vmatpush.bf16.msra.mxu0 %v2448
    %2623 = vmatpush.bf16.msra.mxu0 %v2446
    %2624 = vmatpush.bf16.msra.mxu0 %v2444
    %2625 = vmatpush.bf16.msra.mxu0 %v2442
    %2626 = vmatpush.bf16.msra.mxu0 %v2440
    %2627 = vmatmul.bf16.gmra.mxu0 %v2209
    %v2628 = vpop.f32.mrf.mxu0
    %v2629 = vadd.f32 %v2615, %v2628
    %v2630 = vpop.f32.mrf.mxu0
    %v2631 = vadd.f32 %v2617, %v2630
    %2632 = vdwg.mxu0
    %2633 = vmatpush.bf16.msra.mxu0 %v2470
    %2634 = vmatpush.bf16.msra.mxu0 %v2468
    %2635 = vmatpush.bf16.msra.mxu0 %v2466
    %2636 = vmatpush.bf16.msra.mxu0 %v2464
    %2637 = vmatpush.bf16.msra.mxu0 %v2462
    %2638 = vmatpush.bf16.msra.mxu0 %v2460
    %2639 = vmatpush.bf16.msra.mxu0 %v2458
    %2640 = vmatpush.bf16.msra.mxu0 %v2456
    %2641 = vmatmul.bf16.gmra.mxu0 %v2210
    %v2642 = vpop.f32.mrf.mxu0
    %v2643 = vadd.f32 %v2629, %v2642
    %v2644 = vpop.f32.mrf.mxu0
    %v2645 = vadd.f32 %v2631, %v2644
    %2646 = vdwg.mxu0
    %v2647 = vadd.f32 %v2070, %v2587
    %v2648 = vadd.f32 %v2126, %v2643
    %v2649 = vadd.f32 %v2072, %v2589
    %v2650 = vadd.f32 %v2128, %v2645
    %s2651 = scalar_lea.vmem [#allocation7], 1536
    %v2652 = vld [vmem:[%s2651] sm:$0xff]
    %v2653 = vld [vmem:[%s2651 + $0x8] sm:$0xff]
    %v2654 = vld [vmem:[%s2651 + $0x10] sm:$0xff]
    %v2655 = vld [vmem:[%s2651 + $0x18] sm:$0xff]
    %v2656 = vld [vmem:[%s2651 + $0x20] sm:$0xff]
    %v2657 = vld [vmem:[%s2651 + $0x28] sm:$0xff]
    %v2658 = vld [vmem:[%s2651 + $0x30] sm:$0xff]
    %v2659 = vld [vmem:[%s2651 + $0x38] sm:$0xff]
    %v2660 = vld [vmem:[%s2651 + $0x40] sm:$0xff]
    %v2661 = vld [vmem:[%s2651 + $0x48] sm:$0xff]
    %v2662 = vld [vmem:[%s2651 + $0x50] sm:$0xff]
    %v2663 = vld [vmem:[%s2651 + $0x58] sm:$0xff]
    %v2664 = vld [vmem:[%s2651 + $0x60] sm:$0xff]
    %v2665 = vld [vmem:[%s2651 + $0x68] sm:$0xff]
    %v2666 = vld [vmem:[%s2651 + $0x70] sm:$0xff]
    %v2667 = vld [vmem:[%s2651 + $0x78] sm:$0xff]
    %v2668 = vld [vmem:[%s2651 + $0x80] sm:$0xff]
    %v2669 = vld [vmem:[%s2651 + $0x88] sm:$0xff]
    %v2670 = vld [vmem:[%s2651 + $0x90] sm:$0xff]
    %v2671 = vld [vmem:[%s2651 + $0x98] sm:$0xff]
    %v2672 = vld [vmem:[%s2651 + $0xa0] sm:$0xff]
    %v2673 = vld [vmem:[%s2651 + $0xa8] sm:$0xff]
    %v2674 = vld [vmem:[%s2651 + $0xb0] sm:$0xff]
    %v2675 = vld [vmem:[%s2651 + $0xb8] sm:$0xff]
    %v2676 = vld [vmem:[%s2651 + $0xc0] sm:$0xff]
    %v2677 = vld [vmem:[%s2651 + $0xc8] sm:$0xff]
    %v2678 = vld [vmem:[%s2651 + $0xd0] sm:$0xff]
    %v2679 = vld [vmem:[%s2651 + $0xd8] sm:$0xff]
    %v2680 = vld [vmem:[%s2651 + $0xe0] sm:$0xff]
    %v2681 = vld [vmem:[%s2651 + $0xe8] sm:$0xff]
    %v2682 = vld [vmem:[%s2651 + $0xf0] sm:$0xff]
    %v2683 = vld [vmem:[%s2651 + $0xf8] sm:$0xff]
    %v2684 = vld [vmem:[%s2651 + $0x100] sm:$0xff]
    %v2685 = vld [vmem:[%s2651 + $0x108] sm:$0xff]
    %v2686 = vld [vmem:[%s2651 + $0x110] sm:$0xff]
    %v2687 = vld [vmem:[%s2651 + $0x118] sm:$0xff]
    %v2688 = vld [vmem:[%s2651 + $0x120] sm:$0xff]
    %v2689 = vld [vmem:[%s2651 + $0x128] sm:$0xff]
    %v2690 = vld [vmem:[%s2651 + $0x130] sm:$0xff]
    %v2691 = vld [vmem:[%s2651 + $0x138] sm:$0xff]
    %v2692 = vld [vmem:[%s2651 + $0x140] sm:$0xff]
    %v2693 = vld [vmem:[%s2651 + $0x148] sm:$0xff]
    %v2694 = vld [vmem:[%s2651 + $0x150] sm:$0xff]
    %v2695 = vld [vmem:[%s2651 + $0x158] sm:$0xff]
    %v2696 = vld [vmem:[%s2651 + $0x160] sm:$0xff]
    %v2697 = vld [vmem:[%s2651 + $0x168] sm:$0xff]
    %v2698 = vld [vmem:[%s2651 + $0x170] sm:$0xff]
    %v2699 = vld [vmem:[%s2651 + $0x178] sm:$0xff]
    %v2700 = vld [vmem:[%s2651 + $0x180] sm:$0xff]
    %v2701 = vld [vmem:[%s2651 + $0x188] sm:$0xff]
    %v2702 = vld [vmem:[%s2651 + $0x190] sm:$0xff]
    %v2703 = vld [vmem:[%s2651 + $0x198] sm:$0xff]
    %v2704 = vld [vmem:[%s2651 + $0x1a0] sm:$0xff]
    %v2705 = vld [vmem:[%s2651 + $0x1a8] sm:$0xff]
    %v2706 = vld [vmem:[%s2651 + $0x1b0] sm:$0xff]
    %v2707 = vld [vmem:[%s2651 + $0x1b8] sm:$0xff]
    %v2708 = vld [vmem:[%s2651 + $0x1c0] sm:$0xff]
    %v2709 = vld [vmem:[%s2651 + $0x1c8] sm:$0xff]
    %v2710 = vld [vmem:[%s2651 + $0x1d0] sm:$0xff]
    %v2711 = vld [vmem:[%s2651 + $0x1d8] sm:$0xff]
    %v2712 = vld [vmem:[%s2651 + $0x1e0] sm:$0xff]
    %v2713 = vld [vmem:[%s2651 + $0x1e8] sm:$0xff]
    %v2714 = vld [vmem:[%s2651 + $0x1f0] sm:$0xff]
    %v2715 = vld [vmem:[%s2651 + $0x1f8] sm:$0xff]
    %v2720 = vunpack.c.l.b16 %v1089
    %v2721 = vunpack.c.h.b16 %v1089
    %v2722 = vunpack.c.l.b16 %v1090
    %v2723 = vunpack.c.h.b16 %v1090
    %v2724 = vunpack.c.l.b16 %v1091
    %v2725 = vunpack.c.h.b16 %v1091
    %v2726 = vunpack.c.l.b16 %v1092
    %v2727 = vunpack.c.h.b16 %v1092
    %v2728 = vpack.c.b16 %v2724, %v2720
    %v2729 = vpack.c.b16 %v2725, %v2721
    %v2730 = vpack.c.b16 %v2726, %v2722
    %v2731 = vpack.c.b16 %v2727, %v2723
    %v2800 = vunpack.c.l.b16 %v2652
    %v2801 = vunpack.c.h.b16 %v2652
    %v2802 = vunpack.c.l.b16 %v2653
    %v2803 = vunpack.c.h.b16 %v2653
    %v2804 = vunpack.c.l.b16 %v2654
    %v2805 = vunpack.c.h.b16 %v2654
    %v2806 = vunpack.c.l.b16 %v2655
    %v2807 = vunpack.c.h.b16 %v2655
    %v2808 = vunpack.c.l.b16 %v2656
    %v2809 = vunpack.c.h.b16 %v2656
    %v2810 = vunpack.c.l.b16 %v2657
    %v2811 = vunpack.c.h.b16 %v2657
    %v2812 = vunpack.c.l.b16 %v2658
    %v2813 = vunpack.c.h.b16 %v2658
    %v2814 = vunpack.c.l.b16 %v2659
    %v2815 = vunpack.c.h.b16 %v2659
    %v2816 = vunpack.c.l.b16 %v2660
    %v2817 = vunpack.c.h.b16 %v2660
    %v2818 = vunpack.c.l.b16 %v2661
    %v2819 = vunpack.c.h.b16 %v2661
    %v2820 = vunpack.c.l.b16 %v2662
    %v2821 = vunpack.c.h.b16 %v2662
    %v2822 = vunpack.c.l.b16 %v2663
    %v2823 = vunpack.c.h.b16 %v2663
    %v2824 = vunpack.c.l.b16 %v2664
    %v2825 = vunpack.c.h.b16 %v2664
    %v2826 = vunpack.c.l.b16 %v2665
    %v2827 = vunpack.c.h.b16 %v2665
    %v2828 = vunpack.c.l.b16 %v2666
    %v2829 = vunpack.c.h.b16 %v2666
    %v2830 = vunpack.c.l.b16 %v2667
    %v2831 = vunpack.c.h.b16 %v2667
    %v2832 = vunpack.c.l.b16 %v2668
    %v2833 = vunpack.c.h.b16 %v2668
    %v2834 = vunpack.c.l.b16 %v2669
    %v2835 = vunpack.c.h.b16 %v2669
    %v2836 = vunpack.c.l.b16 %v2670
    %v2837 = vunpack.c.h.b16 %v2670
    %v2838 = vunpack.c.l.b16 %v2671
    %v2839 = vunpack.c.h.b16 %v2671
    %v2840 = vunpack.c.l.b16 %v2672
    %v2841 = vunpack.c.h.b16 %v2672
    %v2842 = vunpack.c.l.b16 %v2673
    %v2843 = vunpack.c.h.b16 %v2673
    %v2844 = vunpack.c.l.b16 %v2674
    %v2845 = vunpack.c.h.b16 %v2674
    %v2846 = vunpack.c.l.b16 %v2675
    %v2847 = vunpack.c.h.b16 %v2675
    %v2848 = vunpack.c.l.b16 %v2676
    %v2849 = vunpack.c.h.b16 %v2676
    %v2850 = vunpack.c.l.b16 %v2677
    %v2851 = vunpack.c.h.b16 %v2677
    %v2852 = vunpack.c.l.b16 %v2678
    %v2853 = vunpack.c.h.b16 %v2678
    %v2854 = vunpack.c.l.b16 %v2679
    %v2855 = vunpack.c.h.b16 %v2679
    %v2856 = vunpack.c.l.b16 %v2680
    %v2857 = vunpack.c.h.b16 %v2680
    %v2858 = vunpack.c.l.b16 %v2681
    %v2859 = vunpack.c.h.b16 %v2681
    %v2860 = vunpack.c.l.b16 %v2682
    %v2861 = vunpack.c.h.b16 %v2682
    %v2862 = vunpack.c.l.b16 %v2683
    %v2863 = vunpack.c.h.b16 %v2683
    %v2864 = vunpack.c.l.b16 %v2684
    %v2865 = vunpack.c.h.b16 %v2684
    %v2866 = vunpack.c.l.b16 %v2685
    %v2867 = vunpack.c.h.b16 %v2685
    %v2868 = vunpack.c.l.b16 %v2686
    %v2869 = vunpack.c.h.b16 %v2686
    %v2870 = vunpack.c.l.b16 %v2687
    %v2871 = vunpack.c.h.b16 %v2687
    %v2872 = vunpack.c.l.b16 %v2688
    %v2873 = vunpack.c.h.b16 %v2688
    %v2874 = vunpack.c.l.b16 %v2689
    %v2875 = vunpack.c.h.b16 %v2689
    %v2876 = vunpack.c.l.b16 %v2690
    %v2877 = vunpack.c.h.b16 %v2690
    %v2878 = vunpack.c.l.b16 %v2691
    %v2879 = vunpack.c.h.b16 %v2691
    %v2880 = vunpack.c.l.b16 %v2692
    %v2881 = vunpack.c.h.b16 %v2692
    %v2882 = vunpack.c.l.b16 %v2693
    %v2883 = vunpack.c.h.b16 %v2693
    %v2884 = vunpack.c.l.b16 %v2694
    %v2885 = vunpack.c.h.b16 %v2694
    %v2886 = vunpack.c.l.b16 %v2695
    %v2887 = vunpack.c.h.b16 %v2695
    %v2888 = vunpack.c.l.b16 %v2696
    %v2889 = vunpack.c.h.b16 %v2696
    %v2890 = vunpack.c.l.b16 %v2697
    %v2891 = vunpack.c.h.b16 %v2697
    %v2892 = vunpack.c.l.b16 %v2698
    %v2893 = vunpack.c.h.b16 %v2698
    %v2894 = vunpack.c.l.b16 %v2699
    %v2895 = vunpack.c.h.b16 %v2699
    %v2896 = vunpack.c.l.b16 %v2700
    %v2897 = vunpack.c.h.b16 %v2700
    %v2898 = vunpack.c.l.b16 %v2701
    %v2899 = vunpack.c.h.b16 %v2701
    %v2900 = vunpack.c.l.b16 %v2702
    %v2901 = vunpack.c.h.b16 %v2702
    %v2902 = vunpack.c.l.b16 %v2703
    %v2903 = vunpack.c.h.b16 %v2703
    %v2904 = vunpack.c.l.b16 %v2704
    %v2905 = vunpack.c.h.b16 %v2704
    %v2906 = vunpack.c.l.b16 %v2705
    %v2907 = vunpack.c.h.b16 %v2705
    %v2908 = vunpack.c.l.b16 %v2706
    %v2909 = vunpack.c.h.b16 %v2706
    %v2910 = vunpack.c.l.b16 %v2707
    %v2911 = vunpack.c.h.b16 %v2707
    %v2912 = vunpack.c.l.b16 %v2708
    %v2913 = vunpack.c.h.b16 %v2708
    %v2914 = vunpack.c.l.b16 %v2709
    %v2915 = vunpack.c.h.b16 %v2709
    %v2916 = vunpack.c.l.b16 %v2710
    %v2917 = vunpack.c.h.b16 %v2710
    %v2918 = vunpack.c.l.b16 %v2711
    %v2919 = vunpack.c.h.b16 %v2711
    %v2920 = vunpack.c.l.b16 %v2712
    %v2921 = vunpack.c.h.b16 %v2712
    %v2922 = vunpack.c.l.b16 %v2713
    %v2923 = vunpack.c.h.b16 %v2713
    %v2924 = vunpack.c.l.b16 %v2714
    %v2925 = vunpack.c.h.b16 %v2714
    %v2926 = vunpack.c.l.b16 %v2715
    %v2927 = vunpack.c.h.b16 %v2715
    %v2928 = vpack.c.b16 %v2802, %v2800
    %v2929 = vpack.c.b16 %v2803, %v2801
    %v2930 = vpack.c.b16 %v2806, %v2804
    %v2931 = vpack.c.b16 %v2807, %v2805
    %v2932 = vpack.c.b16 %v2810, %v2808
    %v2933 = vpack.c.b16 %v2811, %v2809
    %v2934 = vpack.c.b16 %v2814, %v2812
    %v2935 = vpack.c.b16 %v2815, %v2813
    %v2936 = vpack.c.b16 %v2818, %v2816
    %v2937 = vpack.c.b16 %v2819, %v2817
    %v2938 = vpack.c.b16 %v2822, %v2820
    %v2939 = vpack.c.b16 %v2823, %v2821
    %v2940 = vpack.c.b16 %v2826, %v2824
    %v2941 = vpack.c.b16 %v2827, %v2825
    %v2942 = vpack.c.b16 %v2830, %v2828
    %v2943 = vpack.c.b16 %v2831, %v2829
    %v2944 = vpack.c.b16 %v2834, %v2832
    %v2945 = vpack.c.b16 %v2835, %v2833
    %v2946 = vpack.c.b16 %v2838, %v2836
    %v2947 = vpack.c.b16 %v2839, %v2837
    %v2948 = vpack.c.b16 %v2842, %v2840
    %v2949 = vpack.c.b16 %v2843, %v2841
    %v2950 = vpack.c.b16 %v2846, %v2844
    %v2951 = vpack.c.b16 %v2847, %v2845
    %v2952 = vpack.c.b16 %v2850, %v2848
    %v2953 = vpack.c.b16 %v2851, %v2849
    %v2954 = vpack.c.b16 %v2854, %v2852
    %v2955 = vpack.c.b16 %v2855, %v2853
    %v2956 = vpack.c.b16 %v2858, %v2856
    %v2957 = vpack.c.b16 %v2859, %v2857
    %v2958 = vpack.c.b16 %v2862, %v2860
    %v2959 = vpack.c.b16 %v2863, %v2861
    %v2960 = vpack.c.b16 %v2866, %v2864
    %v2961 = vpack.c.b16 %v2867, %v2865
    %v2962 = vpack.c.b16 %v2870, %v2868
    %v2963 = vpack.c.b16 %v2871, %v2869
    %v2964 = vpack.c.b16 %v2874, %v2872
    %v2965 = vpack.c.b16 %v2875, %v2873
    %v2966 = vpack.c.b16 %v2878, %v2876
    %v2967 = vpack.c.b16 %v2879, %v2877
    %v2968 = vpack.c.b16 %v2882, %v2880
    %v2969 = vpack.c.b16 %v2883, %v2881
    %v2970 = vpack.c.b16 %v2886, %v2884
    %v2971 = vpack.c.b16 %v2887, %v2885
    %v2972 = vpack.c.b16 %v2890, %v2888
    %v2973 = vpack.c.b16 %v2891, %v2889
    %v2974 = vpack.c.b16 %v2894, %v2892
    %v2975 = vpack.c.b16 %v2895, %v2893
    %v2976 = vpack.c.b16 %v2898, %v2896
    %v2977 = vpack.c.b16 %v2899, %v2897
    %v2978 = vpack.c.b16 %v2902, %v2900
    %v2979 = vpack.c.b16 %v2903, %v2901
    %v2980 = vpack.c.b16 %v2906, %v2904
    %v2981 = vpack.c.b16 %v2907, %v2905
    %v2982 = vpack.c.b16 %v2910, %v2908
    %v2983 = vpack.c.b16 %v2911, %v2909
    %v2984 = vpack.c.b16 %v2914, %v2912
    %v2985 = vpack.c.b16 %v2915, %v2913
    %v2986 = vpack.c.b16 %v2918, %v2916
    %v2987 = vpack.c.b16 %v2919, %v2917
    %v2988 = vpack.c.b16 %v2922, %v2920
    %v2989 = vpack.c.b16 %v2923, %v2921
    %v2990 = vpack.c.b16 %v2926, %v2924
    %v2991 = vpack.c.b16 %v2927, %v2925
    %3056 = vmatpush.bf16.msra.mxu0 %v2942
    %3057 = vmatpush.bf16.msra.mxu0 %v2940
    %3058 = vmatpush.bf16.msra.mxu0 %v2938
    %3059 = vmatpush.bf16.msra.mxu0 %v2936
    %3060 = vmatpush.bf16.msra.mxu0 %v2934
    %3061 = vmatpush.bf16.msra.mxu0 %v2932
    %3062 = vmatpush.bf16.msra.mxu0 %v2930
    %3063 = vmatpush.bf16.msra.mxu0 %v2928
    %3064 = vmatmul.bf16.gmra.mxu0 %v2728
    %v3065 = vpop.f32.mrf.mxu0
    %v3066 = vadd.f32 0.0, %v3065
    %v3067 = vpop.f32.mrf.mxu0
    %v3068 = vadd.f32 0.0, %v3067
    %3069 = vdwg.mxu0
    %3070 = vmatpush.bf16.msra.mxu0 %v2958
    %3071 = vmatpush.bf16.msra.mxu0 %v2956
    %3072 = vmatpush.bf16.msra.mxu0 %v2954
    %3073 = vmatpush.bf16.msra.mxu0 %v2952
    %3074 = vmatpush.bf16.msra.mxu0 %v2950
    %3075 = vmatpush.bf16.msra.mxu0 %v2948
    %3076 = vmatpush.bf16.msra.mxu0 %v2946
    %3077 = vmatpush.bf16.msra.mxu0 %v2944
    %3078 = vmatmul.bf16.gmra.mxu0 %v2729
    %v3079 = vpop.f32.mrf.mxu0
    %v3080 = vadd.f32 %v3066, %v3079
    %v3081 = vpop.f32.mrf.mxu0
    %v3082 = vadd.f32 %v3068, %v3081
    %3083 = vdwg.mxu0
    %3084 = vmatpush.bf16.msra.mxu0 %v2974
    %3085 = vmatpush.bf16.msra.mxu0 %v2972
    %3086 = vmatpush.bf16.msra.mxu0 %v2970
    %3087 = vmatpush.bf16.msra.mxu0 %v2968
    %3088 = vmatpush.bf16.msra.mxu0 %v2966
    %3089 = vmatpush.bf16.msra.mxu0 %v2964
    %3090 = vmatpush.bf16.msra.mxu0 %v2962
    %3091 = vmatpush.bf16.msra.mxu0 %v2960
    %3092 = vmatmul.bf16.gmra.mxu0 %v2730
    %v3093 = vpop.f32.mrf.mxu0
    %v3094 = vadd.f32 %v3080, %v3093
    %v3095 = vpop.f32.mrf.mxu0
    %v3096 = vadd.f32 %v3082, %v3095
    %3097 = vdwg.mxu0
    %3098 = vmatpush.bf16.msra.mxu0 %v2990
    %3099 = vmatpush.bf16.msra.mxu0 %v2988
    %3100 = vmatpush.bf16.msra.mxu0 %v2986
    %3101 = vmatpush.bf16.msra.mxu0 %v2984
    %3102 = vmatpush.bf16.msra.mxu0 %v2982
    %3103 = vmatpush.bf16.msra.mxu0 %v2980
    %3104 = vmatpush.bf16.msra.mxu0 %v2978
    %3105 = vmatpush.bf16.msra.mxu0 %v2976
    %3106 = vmatmul.bf16.gmra.mxu0 %v2731
    %v3107 = vpop.f32.mrf.mxu0
    %v3108 = vadd.f32 %v3094, %v3107
    %v3109 = vpop.f32.mrf.mxu0
    %v3110 = vadd.f32 %v3096, %v3109
    %3111 = vdwg.mxu0
    %3112 = vmatpush.bf16.msra.mxu0 %v2943
    %3113 = vmatpush.bf16.msra.mxu0 %v2941
    %3114 = vmatpush.bf16.msra.mxu0 %v2939
    %3115 = vmatpush.bf16.msra.mxu0 %v2937
    %3116 = vmatpush.bf16.msra.mxu0 %v2935
    %3117 = vmatpush.bf16.msra.mxu0 %v2933
    %3118 = vmatpush.bf16.msra.mxu0 %v2931
    %3119 = vmatpush.bf16.msra.mxu0 %v2929
    %3120 = vmatmul.bf16.gmra.mxu0 %v2728
    %v3121 = vpop.f32.mrf.mxu0
    %v3122 = vadd.f32 0.0, %v3121
    %v3123 = vpop.f32.mrf.mxu0
    %v3124 = vadd.f32 0.0, %v3123
    %3125 = vdwg.mxu0
    %3126 = vmatpush.bf16.msra.mxu0 %v2959
    %3127 = vmatpush.bf16.msra.mxu0 %v2957
    %3128 = vmatpush.bf16.msra.mxu0 %v2955
    %3129 = vmatpush.bf16.msra.mxu0 %v2953
    %3130 = vmatpush.bf16.msra.mxu0 %v2951
    %3131 = vmatpush.bf16.msra.mxu0 %v2949
    %3132 = vmatpush.bf16.msra.mxu0 %v2947
    %3133 = vmatpush.bf16.msra.mxu0 %v2945
    %3134 = vmatmul.bf16.gmra.mxu0 %v2729
    %v3135 = vpop.f32.mrf.mxu0
    %v3136 = vadd.f32 %v3122, %v3135
    %v3137 = vpop.f32.mrf.mxu0
    %v3138 = vadd.f32 %v3124, %v3137
    %3139 = vdwg.mxu0
    %3140 = vmatpush.bf16.msra.mxu0 %v2975
    %3141 = vmatpush.bf16.msra.mxu0 %v2973
    %3142 = vmatpush.bf16.msra.mxu0 %v2971
    %3143 = vmatpush.bf16.msra.mxu0 %v2969
    %3144 = vmatpush.bf16.msra.mxu0 %v2967
    %3145 = vmatpush.bf16.msra.mxu0 %v2965
    %3146 = vmatpush.bf16.msra.mxu0 %v2963
    %3147 = vmatpush.bf16.msra.mxu0 %v2961
    %3148 = vmatmul.bf16.gmra.mxu0 %v2730
    %v3149 = vpop.f32.mrf.mxu0
    %v3150 = vadd.f32 %v3136, %v3149
    %v3151 = vpop.f32.mrf.mxu0
    %v3152 = vadd.f32 %v3138, %v3151
    %3153 = vdwg.mxu0
    %3154 = vmatpush.bf16.msra.mxu0 %v2991
    %3155 = vmatpush.bf16.msra.mxu0 %v2989
    %3156 = vmatpush.bf16.msra.mxu0 %v2987
    %3157 = vmatpush.bf16.msra.mxu0 %v2985
    %3158 = vmatpush.bf16.msra.mxu0 %v2983
    %3159 = vmatpush.bf16.msra.mxu0 %v2981
    %3160 = vmatpush.bf16.msra.mxu0 %v2979
    %3161 = vmatpush.bf16.msra.mxu0 %v2977
    %3162 = vmatmul.bf16.gmra.mxu0 %v2731
    %v3163 = vpop.f32.mrf.mxu0
    %v3164 = vadd.f32 %v3150, %v3163
    %v3165 = vpop.f32.mrf.mxu0
    %v3166 = vadd.f32 %v3152, %v3165
    %3167 = vdwg.mxu0
    %v3168 = vadd.f32 %v2647, %v3108
    %v3169 = vadd.f32 %v2648, %v3164
    %v3170 = vadd.f32 %v2649, %v3110
    %v3171 = vadd.f32 %v2650, %v3166
    %s3172 = scalar_lea.vmem [#allocation7], 2048
    %v3173 = vld [vmem:[%s3172] sm:$0xff]
    %v3174 = vld [vmem:[%s3172 + $0x8] sm:$0xff]
    %v3175 = vld [vmem:[%s3172 + $0x10] sm:$0xff]
    %v3176 = vld [vmem:[%s3172 + $0x18] sm:$0xff]
    %v3177 = vld [vmem:[%s3172 + $0x20] sm:$0xff]
    %v3178 = vld [vmem:[%s3172 + $0x28] sm:$0xff]
    %v3179 = vld [vmem:[%s3172 + $0x30] sm:$0xff]
    %v3180 = vld [vmem:[%s3172 + $0x38] sm:$0xff]
    %v3181 = vld [vmem:[%s3172 + $0x40] sm:$0xff]
    %v3182 = vld [vmem:[%s3172 + $0x48] sm:$0xff]
    %v3183 = vld [vmem:[%s3172 + $0x50] sm:$0xff]
    %v3184 = vld [vmem:[%s3172 + $0x58] sm:$0xff]
    %v3185 = vld [vmem:[%s3172 + $0x60] sm:$0xff]
    %v3186 = vld [vmem:[%s3172 + $0x68] sm:$0xff]
    %v3187 = vld [vmem:[%s3172 + $0x70] sm:$0xff]
    %v3188 = vld [vmem:[%s3172 + $0x78] sm:$0xff]
    %v3189 = vld [vmem:[%s3172 + $0x80] sm:$0xff]
    %v3190 = vld [vmem:[%s3172 + $0x88] sm:$0xff]
    %v3191 = vld [vmem:[%s3172 + $0x90] sm:$0xff]
    %v3192 = vld [vmem:[%s3172 + $0x98] sm:$0xff]
    %v3193 = vld [vmem:[%s3172 + $0xa0] sm:$0xff]
    %v3194 = vld [vmem:[%s3172 + $0xa8] sm:$0xff]
    %v3195 = vld [vmem:[%s3172 + $0xb0] sm:$0xff]
    %v3196 = vld [vmem:[%s3172 + $0xb8] sm:$0xff]
    %v3197 = vld [vmem:[%s3172 + $0xc0] sm:$0xff]
    %v3198 = vld [vmem:[%s3172 + $0xc8] sm:$0xff]
    %v3199 = vld [vmem:[%s3172 + $0xd0] sm:$0xff]
    %v3200 = vld [vmem:[%s3172 + $0xd8] sm:$0xff]
    %v3201 = vld [vmem:[%s3172 + $0xe0] sm:$0xff]
    %v3202 = vld [vmem:[%s3172 + $0xe8] sm:$0xff]
    %v3203 = vld [vmem:[%s3172 + $0xf0] sm:$0xff]
    %v3204 = vld [vmem:[%s3172 + $0xf8] sm:$0xff]
    %v3205 = vld [vmem:[%s3172 + $0x100] sm:$0xff]
    %v3206 = vld [vmem:[%s3172 + $0x108] sm:$0xff]
    %v3207 = vld [vmem:[%s3172 + $0x110] sm:$0xff]
    %v3208 = vld [vmem:[%s3172 + $0x118] sm:$0xff]
    %v3209 = vld [vmem:[%s3172 + $0x120] sm:$0xff]
    %v3210 = vld [vmem:[%s3172 + $0x128] sm:$0xff]
    %v3211 = vld [vmem:[%s3172 + $0x130] sm:$0xff]
    %v3212 = vld [vmem:[%s3172 + $0x138] sm:$0xff]
    %v3213 = vld [vmem:[%s3172 + $0x140] sm:$0xff]
    %v3214 = vld [vmem:[%s3172 + $0x148] sm:$0xff]
    %v3215 = vld [vmem:[%s3172 + $0x150] sm:$0xff]
    %v3216 = vld [vmem:[%s3172 + $0x158] sm:$0xff]
    %v3217 = vld [vmem:[%s3172 + $0x160] sm:$0xff]
    %v3218 = vld [vmem:[%s3172 + $0x168] sm:$0xff]
    %v3219 = vld [vmem:[%s3172 + $0x170] sm:$0xff]
    %v3220 = vld [vmem:[%s3172 + $0x178] sm:$0xff]
    %v3221 = vld [vmem:[%s3172 + $0x180] sm:$0xff]
    %v3222 = vld [vmem:[%s3172 + $0x188] sm:$0xff]
    %v3223 = vld [vmem:[%s3172 + $0x190] sm:$0xff]
    %v3224 = vld [vmem:[%s3172 + $0x198] sm:$0xff]
    %v3225 = vld [vmem:[%s3172 + $0x1a0] sm:$0xff]
    %v3226 = vld [vmem:[%s3172 + $0x1a8] sm:$0xff]
    %v3227 = vld [vmem:[%s3172 + $0x1b0] sm:$0xff]
    %v3228 = vld [vmem:[%s3172 + $0x1b8] sm:$0xff]
    %v3229 = vld [vmem:[%s3172 + $0x1c0] sm:$0xff]
    %v3230 = vld [vmem:[%s3172 + $0x1c8] sm:$0xff]
    %v3231 = vld [vmem:[%s3172 + $0x1d0] sm:$0xff]
    %v3232 = vld [vmem:[%s3172 + $0x1d8] sm:$0xff]
    %v3233 = vld [vmem:[%s3172 + $0x1e0] sm:$0xff]
    %v3234 = vld [vmem:[%s3172 + $0x1e8] sm:$0xff]
    %v3235 = vld [vmem:[%s3172 + $0x1f0] sm:$0xff]
    %v3236 = vld [vmem:[%s3172 + $0x1f8] sm:$0xff]
    %v3241 = vunpack.c.l.b16 %v1093
    %v3242 = vunpack.c.h.b16 %v1093
    %v3243 = vunpack.c.l.b16 %v1094
    %v3244 = vunpack.c.h.b16 %v1094
    %v3245 = vunpack.c.l.b16 %v1095
    %v3246 = vunpack.c.h.b16 %v1095
    %v3247 = vunpack.c.l.b16 %v1096
    %v3248 = vunpack.c.h.b16 %v1096
    %v3249 = vpack.c.b16 %v3245, %v3241
    %v3250 = vpack.c.b16 %v3246, %v3242
    %v3251 = vpack.c.b16 %v3247, %v3243
    %v3252 = vpack.c.b16 %v3248, %v3244
    %v3321 = vunpack.c.l.b16 %v3173
    %v3322 = vunpack.c.h.b16 %v3173
    %v3323 = vunpack.c.l.b16 %v3174
    %v3324 = vunpack.c.h.b16 %v3174
    %v3325 = vunpack.c.l.b16 %v3175
    %v3326 = vunpack.c.h.b16 %v3175
    %v3327 = vunpack.c.l.b16 %v3176
    %v3328 = vunpack.c.h.b16 %v3176
    %v3329 = vunpack.c.l.b16 %v3177
    %v3330 = vunpack.c.h.b16 %v3177
    %v3331 = vunpack.c.l.b16 %v3178
    %v3332 = vunpack.c.h.b16 %v3178
    %v3333 = vunpack.c.l.b16 %v3179
    %v3334 = vunpack.c.h.b16 %v3179
    %v3335 = vunpack.c.l.b16 %v3180
    %v3336 = vunpack.c.h.b16 %v3180
    %v3337 = vunpack.c.l.b16 %v3181
    %v3338 = vunpack.c.h.b16 %v3181
    %v3339 = vunpack.c.l.b16 %v3182
    %v3340 = vunpack.c.h.b16 %v3182
    %v3341 = vunpack.c.l.b16 %v3183
    %v3342 = vunpack.c.h.b16 %v3183
    %v3343 = vunpack.c.l.b16 %v3184
    %v3344 = vunpack.c.h.b16 %v3184
    %v3345 = vunpack.c.l.b16 %v3185
    %v3346 = vunpack.c.h.b16 %v3185
    %v3347 = vunpack.c.l.b16 %v3186
    %v3348 = vunpack.c.h.b16 %v3186
    %v3349 = vunpack.c.l.b16 %v3187
    %v3350 = vunpack.c.h.b16 %v3187
    %v3351 = vunpack.c.l.b16 %v3188
    %v3352 = vunpack.c.h.b16 %v3188
    %v3353 = vunpack.c.l.b16 %v3189
    %v3354 = vunpack.c.h.b16 %v3189
    %v3355 = vunpack.c.l.b16 %v3190
    %v3356 = vunpack.c.h.b16 %v3190
    %v3357 = vunpack.c.l.b16 %v3191
    %v3358 = vunpack.c.h.b16 %v3191
    %v3359 = vunpack.c.l.b16 %v3192
    %v3360 = vunpack.c.h.b16 %v3192
    %v3361 = vunpack.c.l.b16 %v3193
    %v3362 = vunpack.c.h.b16 %v3193
    %v3363 = vunpack.c.l.b16 %v3194
    %v3364 = vunpack.c.h.b16 %v3194
    %v3365 = vunpack.c.l.b16 %v3195
    %v3366 = vunpack.c.h.b16 %v3195
    %v3367 = vunpack.c.l.b16 %v3196
    %v3368 = vunpack.c.h.b16 %v3196
    %v3369 = vunpack.c.l.b16 %v3197
    %v3370 = vunpack.c.h.b16 %v3197
    %v3371 = vunpack.c.l.b16 %v3198
    %v3372 = vunpack.c.h.b16 %v3198
    %v3373 = vunpack.c.l.b16 %v3199
    %v3374 = vunpack.c.h.b16 %v3199
    %v3375 = vunpack.c.l.b16 %v3200
    %v3376 = vunpack.c.h.b16 %v3200
    %v3377 = vunpack.c.l.b16 %v3201
    %v3378 = vunpack.c.h.b16 %v3201
    %v3379 = vunpack.c.l.b16 %v3202
    %v3380 = vunpack.c.h.b16 %v3202
    %v3381 = vunpack.c.l.b16 %v3203
    %v3382 = vunpack.c.h.b16 %v3203
    %v3383 = vunpack.c.l.b16 %v3204
    %v3384 = vunpack.c.h.b16 %v3204
    %v3385 = vunpack.c.l.b16 %v3205
    %v3386 = vunpack.c.h.b16 %v3205
    %v3387 = vunpack.c.l.b16 %v3206
    %v3388 = vunpack.c.h.b16 %v3206
    %v3389 = vunpack.c.l.b16 %v3207
    %v3390 = vunpack.c.h.b16 %v3207
    %v3391 = vunpack.c.l.b16 %v3208
    %v3392 = vunpack.c.h.b16 %v3208
    %v3393 = vunpack.c.l.b16 %v3209
    %v3394 = vunpack.c.h.b16 %v3209
    %v3395 = vunpack.c.l.b16 %v3210
    %v3396 = vunpack.c.h.b16 %v3210
    %v3397 = vunpack.c.l.b16 %v3211
    %v3398 = vunpack.c.h.b16 %v3211
    %v3399 = vunpack.c.l.b16 %v3212
    %v3400 = vunpack.c.h.b16 %v3212
    %v3401 = vunpack.c.l.b16 %v3213
    %v3402 = vunpack.c.h.b16 %v3213
    %v3403 = vunpack.c.l.b16 %v3214
    %v3404 = vunpack.c.h.b16 %v3214
    %v3405 = vunpack.c.l.b16 %v3215
    %v3406 = vunpack.c.h.b16 %v3215
    %v3407 = vunpack.c.l.b16 %v3216
    %v3408 = vunpack.c.h.b16 %v3216
    %v3409 = vunpack.c.l.b16 %v3217
    %v3410 = vunpack.c.h.b16 %v3217
    %v3411 = vunpack.c.l.b16 %v3218
    %v3412 = vunpack.c.h.b16 %v3218
    %v3413 = vunpack.c.l.b16 %v3219
    %v3414 = vunpack.c.h.b16 %v3219
    %v3415 = vunpack.c.l.b16 %v3220
    %v3416 = vunpack.c.h.b16 %v3220
    %v3417 = vunpack.c.l.b16 %v3221
    %v3418 = vunpack.c.h.b16 %v3221
    %v3419 = vunpack.c.l.b16 %v3222
    %v3420 = vunpack.c.h.b16 %v3222
    %v3421 = vunpack.c.l.b16 %v3223
    %v3422 = vunpack.c.h.b16 %v3223
    %v3423 = vunpack.c.l.b16 %v3224
    %v3424 = vunpack.c.h.b16 %v3224
    %v3425 = vunpack.c.l.b16 %v3225
    %v3426 = vunpack.c.h.b16 %v3225
    %v3427 = vunpack.c.l.b16 %v3226
    %v3428 = vunpack.c.h.b16 %v3226
    %v3429 = vunpack.c.l.b16 %v3227
    %v3430 = vunpack.c.h.b16 %v3227
    %v3431 = vunpack.c.l.b16 %v3228
    %v3432 = vunpack.c.h.b16 %v3228
    %v3433 = vunpack.c.l.b16 %v3229
    %v3434 = vunpack.c.h.b16 %v3229
    %v3435 = vunpack.c.l.b16 %v3230
    %v3436 = vunpack.c.h.b16 %v3230
    %v3437 = vunpack.c.l.b16 %v3231
    %v3438 = vunpack.c.h.b16 %v3231
    %v3439 = vunpack.c.l.b16 %v3232
    %v3440 = vunpack.c.h.b16 %v3232
    %v3441 = vunpack.c.l.b16 %v3233
    %v3442 = vunpack.c.h.b16 %v3233
    %v3443 = vunpack.c.l.b16 %v3234
    %v3444 = vunpack.c.h.b16 %v3234
    %v3445 = vunpack.c.l.b16 %v3235
    %v3446 = vunpack.c.h.b16 %v3235
    %v3447 = vunpack.c.l.b16 %v3236
    %v3448 = vunpack.c.h.b16 %v3236
    %v3449 = vpack.c.b16 %v3323, %v3321
    %v3450 = vpack.c.b16 %v3324, %v3322
    %v3451 = vpack.c.b16 %v3327, %v3325
    %v3452 = vpack.c.b16 %v3328, %v3326
    %v3453 = vpack.c.b16 %v3331, %v3329
    %v3454 = vpack.c.b16 %v3332, %v3330
    %v3455 = vpack.c.b16 %v3335, %v3333
    %v3456 = vpack.c.b16 %v3336, %v3334
    %v3457 = vpack.c.b16 %v3339, %v3337
    %v3458 = vpack.c.b16 %v3340, %v3338
    %v3459 = vpack.c.b16 %v3343, %v3341
    %v3460 = vpack.c.b16 %v3344, %v3342
    %v3461 = vpack.c.b16 %v3347, %v3345
    %v3462 = vpack.c.b16 %v3348, %v3346
    %v3463 = vpack.c.b16 %v3351, %v3349
    %v3464 = vpack.c.b16 %v3352, %v3350
    %v3465 = vpack.c.b16 %v3355, %v3353
    %v3466 = vpack.c.b16 %v3356, %v3354
    %v3467 = vpack.c.b16 %v3359, %v3357
    %v3468 = vpack.c.b16 %v3360, %v3358
    %v3469 = vpack.c.b16 %v3363, %v3361
    %v3470 = vpack.c.b16 %v3364, %v3362
    %v3471 = vpack.c.b16 %v3367, %v3365
    %v3472 = vpack.c.b16 %v3368, %v3366
    %v3473 = vpack.c.b16 %v3371, %v3369
    %v3474 = vpack.c.b16 %v3372, %v3370
    %v3475 = vpack.c.b16 %v3375, %v3373
    %v3476 = vpack.c.b16 %v3376, %v3374
    %v3477 = vpack.c.b16 %v3379, %v3377
    %v3478 = vpack.c.b16 %v3380, %v3378
    %v3479 = vpack.c.b16 %v3383, %v3381
    %v3480 = vpack.c.b16 %v3384, %v3382
    %v3481 = vpack.c.b16 %v3387, %v3385
    %v3482 = vpack.c.b16 %v3388, %v3386
    %v3483 = vpack.c.b16 %v3391, %v3389
    %v3484 = vpack.c.b16 %v3392, %v3390
    %v3485 = vpack.c.b16 %v3395, %v3393
    %v3486 = vpack.c.b16 %v3396, %v3394
    %v3487 = vpack.c.b16 %v3399, %v3397
    %v3488 = vpack.c.b16 %v3400, %v3398
    %v3489 = vpack.c.b16 %v3403, %v3401
    %v3490 = vpack.c.b16 %v3404, %v3402
    %v3491 = vpack.c.b16 %v3407, %v3405
    %v3492 = vpack.c.b16 %v3408, %v3406
    %v3493 = vpack.c.b16 %v3411, %v3409
    %v3494 = vpack.c.b16 %v3412, %v3410
    %v3495 = vpack.c.b16 %v3415, %v3413
    %v3496 = vpack.c.b16 %v3416, %v3414
    %v3497 = vpack.c.b16 %v3419, %v3417
    %v3498 = vpack.c.b16 %v3420, %v3418
    %v3499 = vpack.c.b16 %v3423, %v3421
    %v3500 = vpack.c.b16 %v3424, %v3422
    %v3501 = vpack.c.b16 %v3427, %v3425
    %v3502 = vpack.c.b16 %v3428, %v3426
    %v3503 = vpack.c.b16 %v3431, %v3429
    %v3504 = vpack.c.b16 %v3432, %v3430
    %v3505 = vpack.c.b16 %v3435, %v3433
    %v3506 = vpack.c.b16 %v3436, %v3434
    %v3507 = vpack.c.b16 %v3439, %v3437
    %v3508 = vpack.c.b16 %v3440, %v3438
    %v3509 = vpack.c.b16 %v3443, %v3441
    %v3510 = vpack.c.b16 %v3444, %v3442
    %v3511 = vpack.c.b16 %v3447, %v3445
    %v3512 = vpack.c.b16 %v3448, %v3446
    %3577 = vmatpush.bf16.msra.mxu0 %v3463
    %3578 = vmatpush.bf16.msra.mxu0 %v3461
    %3579 = vmatpush.bf16.msra.mxu0 %v3459
    %3580 = vmatpush.bf16.msra.mxu0 %v3457
    %3581 = vmatpush.bf16.msra.mxu0 %v3455
    %3582 = vmatpush.bf16.msra.mxu0 %v3453
    %3583 = vmatpush.bf16.msra.mxu0 %v3451
    %3584 = vmatpush.bf16.msra.mxu0 %v3449
    %3585 = vmatmul.bf16.gmra.mxu0 %v3249
    %v3586 = vpop.f32.mrf.mxu0
    %v3587 = vadd.f32 0.0, %v3586
    %v3588 = vpop.f32.mrf.mxu0
    %v3589 = vadd.f32 0.0, %v3588
    %3590 = vdwg.mxu0
    %3591 = vmatpush.bf16.msra.mxu0 %v3479
    %3592 = vmatpush.bf16.msra.mxu0 %v3477
    %3593 = vmatpush.bf16.msra.mxu0 %v3475
    %3594 = vmatpush.bf16.msra.mxu0 %v3473
    %3595 = vmatpush.bf16.msra.mxu0 %v3471
    %3596 = vmatpush.bf16.msra.mxu0 %v3469
    %3597 = vmatpush.bf16.msra.mxu0 %v3467
    %3598 = vmatpush.bf16.msra.mxu0 %v3465
    %3599 = vmatmul.bf16.gmra.mxu0 %v3250
    %v3600 = vpop.f32.mrf.mxu0
    %v3601 = vadd.f32 %v3587, %v3600
    %v3602 = vpop.f32.mrf.mxu0
    %v3603 = vadd.f32 %v3589, %v3602
    %3604 = vdwg.mxu0
    %3605 = vmatpush.bf16.msra.mxu0 %v3495
    %3606 = vmatpush.bf16.msra.mxu0 %v3493
    %3607 = vmatpush.bf16.msra.mxu0 %v3491
    %3608 = vmatpush.bf16.msra.mxu0 %v3489
    %3609 = vmatpush.bf16.msra.mxu0 %v3487
    %3610 = vmatpush.bf16.msra.mxu0 %v3485
    %3611 = vmatpush.bf16.msra.mxu0 %v3483
    %3612 = vmatpush.bf16.msra.mxu0 %v3481
    %3613 = vmatmul.bf16.gmra.mxu0 %v3251
    %v3614 = vpop.f32.mrf.mxu0
    %v3615 = vadd.f32 %v3601, %v3614
    %v3616 = vpop.f32.mrf.mxu0
    %v3617 = vadd.f32 %v3603, %v3616
    %3618 = vdwg.mxu0
    %3619 = vmatpush.bf16.msra.mxu0 %v3511
    %3620 = vmatpush.bf16.msra.mxu0 %v3509
    %3621 = vmatpush.bf16.msra.mxu0 %v3507
    %3622 = vmatpush.bf16.msra.mxu0 %v3505
    %3623 = vmatpush.bf16.msra.mxu0 %v3503
    %3624 = vmatpush.bf16.msra.mxu0 %v3501
    %3625 = vmatpush.bf16.msra.mxu0 %v3499
    %3626 = vmatpush.bf16.msra.mxu0 %v3497
    %3627 = vmatmul.bf16.gmra.mxu0 %v3252
    %v3628 = vpop.f32.mrf.mxu0
    %v3629 = vadd.f32 %v3615, %v3628
    %v3630 = vpop.f32.mrf.mxu0
    %v3631 = vadd.f32 %v3617, %v3630
    %3632 = vdwg.mxu0
    %3633 = vmatpush.bf16.msra.mxu0 %v3464
    %3634 = vmatpush.bf16.msra.mxu0 %v3462
    %3635 = vmatpush.bf16.msra.mxu0 %v3460
    %3636 = vmatpush.bf16.msra.mxu0 %v3458
    %3637 = vmatpush.bf16.msra.mxu0 %v3456
    %3638 = vmatpush.bf16.msra.mxu0 %v3454
    %3639 = vmatpush.bf16.msra.mxu0 %v3452
    %3640 = vmatpush.bf16.msra.mxu0 %v3450
    %3641 = vmatmul.bf16.gmra.mxu0 %v3249
    %v3642 = vpop.f32.mrf.mxu0
    %v3643 = vadd.f32 0.0, %v3642
    %v3644 = vpop.f32.mrf.mxu0
    %v3645 = vadd.f32 0.0, %v3644
    %3646 = vdwg.mxu0
    %3647 = vmatpush.bf16.msra.mxu0 %v3480
    %3648 = vmatpush.bf16.msra.mxu0 %v3478
    %3649 = vmatpush.bf16.msra.mxu0 %v3476
    %3650 = vmatpush.bf16.msra.mxu0 %v3474
    %3651 = vmatpush.bf16.msra.mxu0 %v3472
    %3652 = vmatpush.bf16.msra.mxu0 %v3470
    %3653 = vmatpush.bf16.msra.mxu0 %v3468
    %3654 = vmatpush.bf16.msra.mxu0 %v3466
    %3655 = vmatmul.bf16.gmra.mxu0 %v3250
    %v3656 = vpop.f32.mrf.mxu0
    %v3657 = vadd.f32 %v3643, %v3656
    %v3658 = vpop.f32.mrf.mxu0
    %v3659 = vadd.f32 %v3645, %v3658
    %3660 = vdwg.mxu0
    %3661 = vmatpush.bf16.msra.mxu0 %v3496
    %3662 = vmatpush.bf16.msra.mxu0 %v3494
    %3663 = vmatpush.bf16.msra.mxu0 %v3492
    %3664 = vmatpush.bf16.msra.mxu0 %v3490
    %3665 = vmatpush.bf16.msra.mxu0 %v3488
    %3666 = vmatpush.bf16.msra.mxu0 %v3486
    %3667 = vmatpush.bf16.msra.mxu0 %v3484
    %3668 = vmatpush.bf16.msra.mxu0 %v3482
    %3669 = vmatmul.bf16.gmra.mxu0 %v3251
    %v3670 = vpop.f32.mrf.mxu0
    %v3671 = vadd.f32 %v3657, %v3670
    %v3672 = vpop.f32.mrf.mxu0
    %v3673 = vadd.f32 %v3659, %v3672
    %3674 = vdwg.mxu0
    %3675 = vmatpush.bf16.msra.mxu0 %v3512
    %3676 = vmatpush.bf16.msra.mxu0 %v3510
    %3677 = vmatpush.bf16.msra.mxu0 %v3508
    %3678 = vmatpush.bf16.msra.mxu0 %v3506
    %3679 = vmatpush.bf16.msra.mxu0 %v3504
    %3680 = vmatpush.bf16.msra.mxu0 %v3502
    %3681 = vmatpush.bf16.msra.mxu0 %v3500
    %3682 = vmatpush.bf16.msra.mxu0 %v3498
    %3683 = vmatmul.bf16.gmra.mxu0 %v3252
    %v3684 = vpop.f32.mrf.mxu0
    %v3685 = vadd.f32 %v3671, %v3684
    %v3686 = vpop.f32.mrf.mxu0
    %v3687 = vadd.f32 %v3673, %v3686
    %3688 = vdwg.mxu0
    %v3689 = vadd.f32 %v3168, %v3629
    %v3690 = vadd.f32 %v3169, %v3685
    %v3691 = vadd.f32 %v3170, %v3631
    %v3692 = vadd.f32 %v3171, %v3687
    %v3693 = vld [vmem:[#allocation11] sm:$0x3]
    %v3695 = vperm.slane %v3693, 0
    %v3696 = vperm.slane %v3693, 1
    %v3699 = vadd.f32 %v3689, %v3695
    %v3700 = vadd.f32 %v3690, %v3696
    %v3701 = vadd.f32 %v3691, %v3695
    %v3702 = vadd.f32 %v3692, %v3696
    %v3703 = vmax.f32 %v3699, 0.0
    %v3704 = vmax.f32 %v3700, 0.0
    %v3705 = vmax.f32 %v3701, 0.0
    %v3706 = vmax.f32 %v3702, 0.0
    %v3707 = vpack.c.bf16 %v3705, %v3703
    %v3708 = vpack.c.bf16 %v3706, %v3704
    %v3709 = vld [vmem:[%s3] sm:$0xf]
    %v3710 = vld [vmem:[%s3 + $0x4] sm:$0xf]
    %v3711 = vld [vmem:[%s3 + $0x8] sm:$0xf]
    %v3712 = vld [vmem:[%s3 + $0xc] sm:$0xf]
    %v3713 = vld [vmem:[%s3 + $0x10] sm:$0xf]
    %v3719 = vunpack.c.l.b16 %v3709
    %v3720 = vunpack.c.l.b16 %v3710
    %v3721 = vunpack.c.l.b16 %v3711
    %v3722 = vunpack.c.l.b16 %v3712
    %v3723 = vunpack.c.l.b16 %v3713
    %v3724 = vpack.c.b16 %v3720, %v3719
    %v3725 = vpack.c.b16 %v3722, %v3721
    %v3726 = vpack.c.b16 %v3723, %v3723
    %vm3727 = vcmask 130048
    %v3729 = vsel %vm3727, %v3724, 0
    %v3732 = vsel %vm3727, %v3725, 0
    %v3735 = vsel %vm3727, %v3726, 0
    %3737 = vmatpush.bf16.msra.mxu0 0
    %3738 = vmatpush.bf16.msra.mxu0 0
    %3739 = vmatpush.bf16.msra.mxu0 0
    %3740 = vmatpush.bf16.msra.mxu0 0
    %3741 = vmatpush.bf16.msra.mxu0 0
    %3742 = vmatpush.bf16.msra.mxu0 0
    %3743 = vmatpush.bf16.msra.mxu0 0
    %3744 = vmatpush.bf16.msra.mxu0 %v3707
    %3745 = vmatmul.bf16.gmra.mxu0 %v3729
    %v3746 = vpop.f32.mrf.mxu0
    %v3747 = vadd.f32 0.0, %v3746
    %v3748 = vpop.f32.mrf.mxu0
    %v3749 = vadd.f32 0.0, %v3748
    %3750 = vmatmul.bf16.gmra.mxu0 %v3732
    %v3751 = vpop.f32.mrf.mxu0
    %v3752 = vadd.f32 0.0, %v3751
    %v3753 = vpop.f32.mrf.mxu0
    %v3754 = vadd.f32 0.0, %v3753
    %3755 = vmatmul.bf16.gmra.mxu0 %v3735
    %v3756 = vpop.f32.mrf.mxu0
    %v3757 = vadd.f32 0.0, %v3756
    %v3758 = vpop.f32.mrf.mxu0
    %3759 = vdwg.mxu0
    %3760 = vmatpush.bf16.msra.mxu0 0
    %3761 = vmatpush.bf16.msra.mxu0 0
    %3762 = vmatpush.bf16.msra.mxu0 0
    %3763 = vmatpush.bf16.msra.mxu0 0
    %3764 = vmatpush.bf16.msra.mxu0 0
    %3765 = vmatpush.bf16.msra.mxu0 0
    %3766 = vmatpush.bf16.msra.mxu0 0
    %3767 = vmatpush.bf16.msra.mxu0 %v3708
    %3768 = vmatmul.bf16.gmra.mxu0 %v3729
    %v3769 = vpop.f32.mrf.mxu0
    %v3770 = vadd.f32 0.0, %v3769
    %v3771 = vpop.f32.mrf.mxu0
    %v3772 = vadd.f32 0.0, %v3771
    %3773 = vmatmul.bf16.gmra.mxu0 %v3732
    %v3774 = vpop.f32.mrf.mxu0
    %v3775 = vadd.f32 0.0, %v3774
    %v3776 = vpop.f32.mrf.mxu0
    %v3777 = vadd.f32 0.0, %v3776
    %3778 = vmatmul.bf16.gmra.mxu0 %v3735
    %v3779 = vpop.f32.mrf.mxu0
    %v3780 = vadd.f32 0.0, %v3779
    %v3781 = vpop.f32.mrf.mxu0
    %3782 = vdwg.mxu0
    %v3783 = vpack.c.bf16 %v3770, %v3747
    %v3784 = vpack.c.bf16 %v3772, %v3749
    %v3785 = vpack.c.bf16 %v3775, %v3752
    %v3786 = vpack.c.bf16 %v3777, %v3754
    %v3787 = vpack.c.bf16 %v3780, %v3757
    %v3788 = vld [vmem:[#allocation8] sm:$0xf]
    %v3789 = vld [vmem:[#allocation8 + $0x4] sm:$0xf]
    %v3790 = vld [vmem:[#allocation8 + $0x8] sm:$0xf]
    %v3791 = vld [vmem:[#allocation8 + $0xc] sm:$0xf]
    %v3792 = vld [vmem:[#allocation8 + $0x10] sm:$0xf]
    %v3793 = vld [vmem:[#allocation8 + $0x14] sm:$0xf]
    %v3794 = vld [vmem:[#allocation8 + $0x18] sm:$0xf]
    %v3795 = vld [vmem:[#allocation8 + $0x1c] sm:$0xf]
    %v3796 = vld [vmem:[#allocation8 + $0x20] sm:$0xf]
    %v3797 = vld [vmem:[#allocation8 + $0x24] sm:$0xf]
    %v3798 = vld [vmem:[#allocation8 + $0x28] sm:$0xf]
    %v3799 = vld [vmem:[#allocation8 + $0x2c] sm:$0xf]
    %v3800 = vld [vmem:[#allocation8 + $0x30] sm:$0xf]
    %v3801 = vld [vmem:[#allocation8 + $0x34] sm:$0xf]
    %v3802 = vld [vmem:[#allocation8 + $0x38] sm:$0xf]
    %v3803 = vld [vmem:[#allocation8 + $0x3c] sm:$0xf]
    %v3804 = vld [vmem:[#allocation8 + $0x40] sm:$0xf]
    %v3805 = vld [vmem:[#allocation8 + $0x44] sm:$0xf]
    %v3806 = vld [vmem:[#allocation8 + $0x48] sm:$0xf]
    %v3807 = vld [vmem:[#allocation8 + $0x4c] sm:$0xf]
    %v3808 = vld [vmem:[#allocation8 + $0x50] sm:$0xf]
    %v3809 = vld [vmem:[#allocation8 + $0x54] sm:$0xf]
    %v3810 = vld [vmem:[#allocation8 + $0x58] sm:$0xf]
    %v3811 = vld [vmem:[#allocation8 + $0x5c] sm:$0xf]
    %v3812 = vld [vmem:[#allocation8 + $0x60] sm:$0xf]
    %v3813 = vld [vmem:[#allocation8 + $0x64] sm:$0xf]
    %v3814 = vld [vmem:[#allocation8 + $0x68] sm:$0xf]
    %v3815 = vld [vmem:[#allocation8 + $0x6c] sm:$0xf]
    %v3816 = vld [vmem:[#allocation8 + $0x70] sm:$0xf]
    %v3817 = vld [vmem:[#allocation8 + $0x74] sm:$0xf]
    %v3818 = vld [vmem:[#allocation8 + $0x78] sm:$0xf]
    %v3819 = vld [vmem:[#allocation8 + $0x7c] sm:$0xf]
    %s3820 = scalar_lea.vmem [#allocation8], 128
    %v3821 = vld [vmem:[%s3820] sm:$0xf]
    %v3822 = vld [vmem:[%s3820 + $0x4] sm:$0xf]
    %v3823 = vld [vmem:[%s3820 + $0x8] sm:$0xf]
    %v3824 = vld [vmem:[%s3820 + $0xc] sm:$0xf]
    %v3825 = vld [vmem:[%s3820 + $0x10] sm:$0xf]
    %v3826 = vld [vmem:[%s3820 + $0x14] sm:$0xf]
    %v3827 = vld [vmem:[%s3820 + $0x18] sm:$0xf]
    %v3828 = vld [vmem:[%s3820 + $0x1c] sm:$0xf]
    %v3829 = vld [vmem:[%s3820 + $0x20] sm:$0xf]
    %v3830 = vld [vmem:[%s3820 + $0x24] sm:$0xf]
    %v3831 = vld [vmem:[%s3820 + $0x28] sm:$0xf]
    %v3832 = vld [vmem:[%s3820 + $0x2c] sm:$0xf]
    %v3833 = vld [vmem:[%s3820 + $0x30] sm:$0xf]
    %v3834 = vld [vmem:[%s3820 + $0x34] sm:$0xf]
    %v3835 = vld [vmem:[%s3820 + $0x38] sm:$0xf]
    %v3836 = vld [vmem:[%s3820 + $0x3c] sm:$0xf]
    %v3837 = vld [vmem:[%s3820 + $0x40] sm:$0xf]
    %v3838 = vld [vmem:[%s3820 + $0x44] sm:$0xf]
    %v3839 = vld [vmem:[%s3820 + $0x48] sm:$0xf]
    %v3840 = vld [vmem:[%s3820 + $0x4c] sm:$0xf]
    %v3841 = vld [vmem:[%s3820 + $0x50] sm:$0xf]
    %v3842 = vld [vmem:[%s3820 + $0x54] sm:$0xf]
    %v3843 = vld [vmem:[%s3820 + $0x58] sm:$0xf]
    %v3844 = vld [vmem:[%s3820 + $0x5c] sm:$0xf]
    %v3845 = vld [vmem:[%s3820 + $0x60] sm:$0xf]
    %v3846 = vld [vmem:[%s3820 + $0x64] sm:$0xf]
    %v3847 = vld [vmem:[%s3820 + $0x68] sm:$0xf]
    %v3848 = vld [vmem:[%s3820 + $0x6c] sm:$0xf]
    %v3849 = vld [vmem:[%s3820 + $0x70] sm:$0xf]
    %v3850 = vld [vmem:[%s3820 + $0x74] sm:$0xf]
    %v3851 = vld [vmem:[%s3820 + $0x78] sm:$0xf]
    %v3852 = vld [vmem:[%s3820 + $0x7c] sm:$0xf]
    %v3854 = vunpack.c.l.b16 %v3784
    %v3855 = vunpack.c.h.b16 %v3784
    %v3856 = vpack.c.b16 %v3854, %v3854
    %v3857 = vpack.c.b16 %v3855, %v3855
    %v3892 = vunpack.c.l.b16 %v3821
    %v3893 = vunpack.c.l.b16 %v3822
    %v3894 = vunpack.c.l.b16 %v3823
    %v3895 = vunpack.c.l.b16 %v3824
    %v3896 = vunpack.c.l.b16 %v3825
    %v3897 = vunpack.c.l.b16 %v3826
    %v3898 = vunpack.c.l.b16 %v3827
    %v3899 = vunpack.c.l.b16 %v3828
    %v3900 = vunpack.c.l.b16 %v3829
    %v3901 = vunpack.c.l.b16 %v3830
    %v3902 = vunpack.c.l.b16 %v3831
    %v3903 = vunpack.c.l.b16 %v3832
    %v3904 = vunpack.c.l.b16 %v3833
    %v3905 = vunpack.c.l.b16 %v3834
    %v3906 = vunpack.c.l.b16 %v3835
    %v3907 = vunpack.c.l.b16 %v3836
    %v3908 = vunpack.c.l.b16 %v3837
    %v3909 = vunpack.c.l.b16 %v3838
    %v3910 = vunpack.c.l.b16 %v3839
    %v3911 = vunpack.c.l.b16 %v3840
    %v3912 = vunpack.c.l.b16 %v3841
    %v3913 = vunpack.c.l.b16 %v3842
    %v3914 = vunpack.c.l.b16 %v3843
    %v3915 = vunpack.c.l.b16 %v3844
    %v3916 = vunpack.c.l.b16 %v3845
    %v3917 = vunpack.c.l.b16 %v3846
    %v3918 = vunpack.c.l.b16 %v3847
    %v3919 = vunpack.c.l.b16 %v3848
    %v3920 = vunpack.c.l.b16 %v3849
    %v3921 = vunpack.c.l.b16 %v3850
    %v3922 = vunpack.c.l.b16 %v3851
    %v3923 = vunpack.c.l.b16 %v3852
    %v3924 = vpack.c.b16 %v3893, %v3892
    %v3925 = vpack.c.b16 %v3895, %v3894
    %v3926 = vpack.c.b16 %v3897, %v3896
    %v3927 = vpack.c.b16 %v3899, %v3898
    %v3928 = vpack.c.b16 %v3901, %v3900
    %v3929 = vpack.c.b16 %v3903, %v3902
    %v3930 = vpack.c.b16 %v3905, %v3904
    %v3931 = vpack.c.b16 %v3907, %v3906
    %v3932 = vpack.c.b16 %v3909, %v3908
    %v3933 = vpack.c.b16 %v3911, %v3910
    %v3934 = vpack.c.b16 %v3913, %v3912
    %v3935 = vpack.c.b16 %v3915, %v3914
    %v3936 = vpack.c.b16 %v3917, %v3916
    %v3937 = vpack.c.b16 %v3919, %v3918
    %v3938 = vpack.c.b16 %v3921, %v3920
    %v3939 = vpack.c.b16 %v3923, %v3922
    %3956 = vmatpush.bf16.msra.mxu0 %v3931
    %3957 = vmatpush.bf16.msra.mxu0 %v3930
    %3958 = vmatpush.bf16.msra.mxu0 %v3929
    %3959 = vmatpush.bf16.msra.mxu0 %v3928
    %3960 = vmatpush.bf16.msra.mxu0 %v3927
    %3961 = vmatpush.bf16.msra.mxu0 %v3926
    %3962 = vmatpush.bf16.msra.mxu0 %v3925
    %3963 = vmatpush.bf16.msra.mxu0 %v3924
    %3964 = vmatmul.bf16.gmra.mxu0 %v3856
    %v3965 = vpop.f32.mrf.mxu0
    %v3966 = vadd.f32 0.0, %v3965
    %v3967 = vpop.f32.mrf.mxu0
    %3968 = vdwg.mxu0
    %3969 = vmatpush.bf16.msra.mxu0 %v3939
    %3970 = vmatpush.bf16.msra.mxu0 %v3938
    %3971 = vmatpush.bf16.msra.mxu0 %v3937
    %3972 = vmatpush.bf16.msra.mxu0 %v3936
    %3973 = vmatpush.bf16.msra.mxu0 %v3935
    %3974 = vmatpush.bf16.msra.mxu0 %v3934
    %3975 = vmatpush.bf16.msra.mxu0 %v3933
    %3976 = vmatpush.bf16.msra.mxu0 %v3932
    %3977 = vmatmul.bf16.gmra.mxu0 %v3857
    %v3978 = vpop.f32.mrf.mxu0
    %v3979 = vadd.f32 %v3966, %v3978
    %v3980 = vpop.f32.mrf.mxu0
    %3981 = vdwg.mxu0
    %v3983 = vunpack.c.l.b16 %v3783
    %v3984 = vunpack.c.h.b16 %v3783
    %v3985 = vpack.c.b16 %v3983, %v3983
    %v3986 = vpack.c.b16 %v3984, %v3984
    %v4021 = vunpack.c.l.b16 %v3788
    %v4022 = vunpack.c.l.b16 %v3789
    %v4023 = vunpack.c.l.b16 %v3790
    %v4024 = vunpack.c.l.b16 %v3791
    %v4025 = vunpack.c.l.b16 %v3792
    %v4026 = vunpack.c.l.b16 %v3793
    %v4027 = vunpack.c.l.b16 %v3794
    %v4028 = vunpack.c.l.b16 %v3795
    %v4029 = vunpack.c.l.b16 %v3796
    %v4030 = vunpack.c.l.b16 %v3797
    %v4031 = vunpack.c.l.b16 %v3798
    %v4032 = vunpack.c.l.b16 %v3799
    %v4033 = vunpack.c.l.b16 %v3800
    %v4034 = vunpack.c.l.b16 %v3801
    %v4035 = vunpack.c.l.b16 %v3802
    %v4036 = vunpack.c.l.b16 %v3803
    %v4037 = vunpack.c.l.b16 %v3804
    %v4038 = vunpack.c.l.b16 %v3805
    %v4039 = vunpack.c.l.b16 %v3806
    %v4040 = vunpack.c.l.b16 %v3807
    %v4041 = vunpack.c.l.b16 %v3808
    %v4042 = vunpack.c.l.b16 %v3809
    %v4043 = vunpack.c.l.b16 %v3810
    %v4044 = vunpack.c.l.b16 %v3811
    %v4045 = vunpack.c.l.b16 %v3812
    %v4046 = vunpack.c.l.b16 %v3813
    %v4047 = vunpack.c.l.b16 %v3814
    %v4048 = vunpack.c.l.b16 %v3815
    %v4049 = vunpack.c.l.b16 %v3816
    %v4050 = vunpack.c.l.b16 %v3817
    %v4051 = vunpack.c.l.b16 %v3818
    %v4052 = vunpack.c.l.b16 %v3819
    %v4053 = vpack.c.b16 %v4022, %v4021
    %v4054 = vpack.c.b16 %v4024, %v4023
    %v4055 = vpack.c.b16 %v4026, %v4025
    %v4056 = vpack.c.b16 %v4028, %v4027
    %v4057 = vpack.c.b16 %v4030, %v4029
    %v4058 = vpack.c.b16 %v4032, %v4031
    %v4059 = vpack.c.b16 %v4034, %v4033
    %v4060 = vpack.c.b16 %v4036, %v4035
    %v4061 = vpack.c.b16 %v4038, %v4037
    %v4062 = vpack.c.b16 %v4040, %v4039
    %v4063 = vpack.c.b16 %v4042, %v4041
    %v4064 = vpack.c.b16 %v4044, %v4043
    %v4065 = vpack.c.b16 %v4046, %v4045
    %v4066 = vpack.c.b16 %v4048, %v4047
    %v4067 = vpack.c.b16 %v4050, %v4049
    %v4068 = vpack.c.b16 %v4052, %v4051
    %4085 = vmatpush.bf16.msra.mxu0 %v4060
    %4086 = vmatpush.bf16.msra.mxu0 %v4059
    %4087 = vmatpush.bf16.msra.mxu0 %v4058
    %4088 = vmatpush.bf16.msra.mxu0 %v4057
    %4089 = vmatpush.bf16.msra.mxu0 %v4056
    %4090 = vmatpush.bf16.msra.mxu0 %v4055
    %4091 = vmatpush.bf16.msra.mxu0 %v4054
    %4092 = vmatpush.bf16.msra.mxu0 %v4053
    %4093 = vmatmul.bf16.gmra.mxu0 %v3985
    %v4094 = vpop.f32.mrf.mxu0
    %v4095 = vadd.f32 %v3979, %v4094
    %v4096 = vpop.f32.mrf.mxu0
    %4097 = vdwg.mxu0
    %4098 = vmatpush.bf16.msra.mxu0 %v4068
    %4099 = vmatpush.bf16.msra.mxu0 %v4067
    %4100 = vmatpush.bf16.msra.mxu0 %v4066
    %4101 = vmatpush.bf16.msra.mxu0 %v4065
    %4102 = vmatpush.bf16.msra.mxu0 %v4064
    %4103 = vmatpush.bf16.msra.mxu0 %v4063
    %4104 = vmatpush.bf16.msra.mxu0 %v4062
    %4105 = vmatpush.bf16.msra.mxu0 %v4061
    %4106 = vmatmul.bf16.gmra.mxu0 %v3986
    %v4107 = vpop.f32.mrf.mxu0
    %v4108 = vadd.f32 %v4095, %v4107
    %v4109 = vpop.f32.mrf.mxu0
    %4110 = vdwg.mxu0
    %s4111 = scalar_lea.vmem [#allocation8], 256
    %v4112 = vld [vmem:[%s4111] sm:$0xf]
    %v4113 = vld [vmem:[%s4111 + $0x4] sm:$0xf]
    %v4114 = vld [vmem:[%s4111 + $0x8] sm:$0xf]
    %v4115 = vld [vmem:[%s4111 + $0xc] sm:$0xf]
    %v4116 = vld [vmem:[%s4111 + $0x10] sm:$0xf]
    %v4117 = vld [vmem:[%s4111 + $0x14] sm:$0xf]
    %v4118 = vld [vmem:[%s4111 + $0x18] sm:$0xf]
    %v4119 = vld [vmem:[%s4111 + $0x1c] sm:$0xf]
    %v4120 = vld [vmem:[%s4111 + $0x20] sm:$0xf]
    %v4121 = vld [vmem:[%s4111 + $0x24] sm:$0xf]
    %v4122 = vld [vmem:[%s4111 + $0x28] sm:$0xf]
    %v4123 = vld [vmem:[%s4111 + $0x2c] sm:$0xf]
    %v4124 = vld [vmem:[%s4111 + $0x30] sm:$0xf]
    %v4125 = vld [vmem:[%s4111 + $0x34] sm:$0xf]
    %v4126 = vld [vmem:[%s4111 + $0x38] sm:$0xf]
    %v4127 = vld [vmem:[%s4111 + $0x3c] sm:$0xf]
    %v4128 = vld [vmem:[%s4111 + $0x40] sm:$0xf]
    %v4129 = vld [vmem:[%s4111 + $0x44] sm:$0xf]
    %v4130 = vld [vmem:[%s4111 + $0x48] sm:$0xf]
    %v4131 = vld [vmem:[%s4111 + $0x4c] sm:$0xf]
    %v4132 = vld [vmem:[%s4111 + $0x50] sm:$0xf]
    %v4133 = vld [vmem:[%s4111 + $0x54] sm:$0xf]
    %v4134 = vld [vmem:[%s4111 + $0x58] sm:$0xf]
    %v4135 = vld [vmem:[%s4111 + $0x5c] sm:$0xf]
    %v4136 = vld [vmem:[%s4111 + $0x60] sm:$0xf]
    %v4137 = vld [vmem:[%s4111 + $0x64] sm:$0xf]
    %v4138 = vld [vmem:[%s4111 + $0x68] sm:$0xf]
    %v4139 = vld [vmem:[%s4111 + $0x6c] sm:$0xf]
    %v4140 = vld [vmem:[%s4111 + $0x70] sm:$0xf]
    %v4141 = vld [vmem:[%s4111 + $0x74] sm:$0xf]
    %v4142 = vld [vmem:[%s4111 + $0x78] sm:$0xf]
    %v4143 = vld [vmem:[%s4111 + $0x7c] sm:$0xf]
    %v4145 = vunpack.c.l.b16 %v3785
    %v4146 = vunpack.c.h.b16 %v3785
    %v4147 = vpack.c.b16 %v4145, %v4145
    %v4148 = vpack.c.b16 %v4146, %v4146
    %v4183 = vunpack.c.l.b16 %v4112
    %v4184 = vunpack.c.l.b16 %v4113
    %v4185 = vunpack.c.l.b16 %v4114
    %v4186 = vunpack.c.l.b16 %v4115
    %v4187 = vunpack.c.l.b16 %v4116
    %v4188 = vunpack.c.l.b16 %v4117
    %v4189 = vunpack.c.l.b16 %v4118
    %v4190 = vunpack.c.l.b16 %v4119
    %v4191 = vunpack.c.l.b16 %v4120
    %v4192 = vunpack.c.l.b16 %v4121
    %v4193 = vunpack.c.l.b16 %v4122
    %v4194 = vunpack.c.l.b16 %v4123
    %v4195 = vunpack.c.l.b16 %v4124
    %v4196 = vunpack.c.l.b16 %v4125
    %v4197 = vunpack.c.l.b16 %v4126
    %v4198 = vunpack.c.l.b16 %v4127
    %v4199 = vunpack.c.l.b16 %v4128
    %v4200 = vunpack.c.l.b16 %v4129
    %v4201 = vunpack.c.l.b16 %v4130
    %v4202 = vunpack.c.l.b16 %v4131
    %v4203 = vunpack.c.l.b16 %v4132
    %v4204 = vunpack.c.l.b16 %v4133
    %v4205 = vunpack.c.l.b16 %v4134
    %v4206 = vunpack.c.l.b16 %v4135
    %v4207 = vunpack.c.l.b16 %v4136
    %v4208 = vunpack.c.l.b16 %v4137
    %v4209 = vunpack.c.l.b16 %v4138
    %v4210 = vunpack.c.l.b16 %v4139
    %v4211 = vunpack.c.l.b16 %v4140
    %v4212 = vunpack.c.l.b16 %v4141
    %v4213 = vunpack.c.l.b16 %v4142
    %v4214 = vunpack.c.l.b16 %v4143
    %v4215 = vpack.c.b16 %v4184, %v4183
    %v4216 = vpack.c.b16 %v4186, %v4185
    %v4217 = vpack.c.b16 %v4188, %v4187
    %v4218 = vpack.c.b16 %v4190, %v4189
    %v4219 = vpack.c.b16 %v4192, %v4191
    %v4220 = vpack.c.b16 %v4194, %v4193
    %v4221 = vpack.c.b16 %v4196, %v4195
    %v4222 = vpack.c.b16 %v4198, %v4197
    %v4223 = vpack.c.b16 %v4200, %v4199
    %v4224 = vpack.c.b16 %v4202, %v4201
    %v4225 = vpack.c.b16 %v4204, %v4203
    %v4226 = vpack.c.b16 %v4206, %v4205
    %v4227 = vpack.c.b16 %v4208, %v4207
    %v4228 = vpack.c.b16 %v4210, %v4209
    %v4229 = vpack.c.b16 %v4212, %v4211
    %v4230 = vpack.c.b16 %v4214, %v4213
    %4247 = vmatpush.bf16.msra.mxu0 %v4222
    %4248 = vmatpush.bf16.msra.mxu0 %v4221
    %4249 = vmatpush.bf16.msra.mxu0 %v4220
    %4250 = vmatpush.bf16.msra.mxu0 %v4219
    %4251 = vmatpush.bf16.msra.mxu0 %v4218
    %4252 = vmatpush.bf16.msra.mxu0 %v4217
    %4253 = vmatpush.bf16.msra.mxu0 %v4216
    %4254 = vmatpush.bf16.msra.mxu0 %v4215
    %4255 = vmatmul.bf16.gmra.mxu0 %v4147
    %v4256 = vpop.f32.mrf.mxu0
    %v4257 = vadd.f32 0.0, %v4256
    %v4258 = vpop.f32.mrf.mxu0
    %4259 = vdwg.mxu0
    %4260 = vmatpush.bf16.msra.mxu0 %v4230
    %4261 = vmatpush.bf16.msra.mxu0 %v4229
    %4262 = vmatpush.bf16.msra.mxu0 %v4228
    %4263 = vmatpush.bf16.msra.mxu0 %v4227
    %4264 = vmatpush.bf16.msra.mxu0 %v4226
    %4265 = vmatpush.bf16.msra.mxu0 %v4225
    %4266 = vmatpush.bf16.msra.mxu0 %v4224
    %4267 = vmatpush.bf16.msra.mxu0 %v4223
    %4268 = vmatmul.bf16.gmra.mxu0 %v4148
    %v4269 = vpop.f32.mrf.mxu0
    %v4270 = vadd.f32 %v4257, %v4269
    %v4271 = vpop.f32.mrf.mxu0
    %4272 = vdwg.mxu0
    %v4273 = vadd.f32 %v4108, %v4270
    %s4274 = scalar_lea.vmem [#allocation8], 384
    %v4275 = vld [vmem:[%s4274] sm:$0xf]
    %v4276 = vld [vmem:[%s4274 + $0x4] sm:$0xf]
    %v4277 = vld [vmem:[%s4274 + $0x8] sm:$0xf]
    %v4278 = vld [vmem:[%s4274 + $0xc] sm:$0xf]
    %v4279 = vld [vmem:[%s4274 + $0x10] sm:$0xf]
    %v4280 = vld [vmem:[%s4274 + $0x14] sm:$0xf]
    %v4281 = vld [vmem:[%s4274 + $0x18] sm:$0xf]
    %v4282 = vld [vmem:[%s4274 + $0x1c] sm:$0xf]
    %v4283 = vld [vmem:[%s4274 + $0x20] sm:$0xf]
    %v4284 = vld [vmem:[%s4274 + $0x24] sm:$0xf]
    %v4285 = vld [vmem:[%s4274 + $0x28] sm:$0xf]
    %v4286 = vld [vmem:[%s4274 + $0x2c] sm:$0xf]
    %v4287 = vld [vmem:[%s4274 + $0x30] sm:$0xf]
    %v4288 = vld [vmem:[%s4274 + $0x34] sm:$0xf]
    %v4289 = vld [vmem:[%s4274 + $0x38] sm:$0xf]
    %v4290 = vld [vmem:[%s4274 + $0x3c] sm:$0xf]
    %v4291 = vld [vmem:[%s4274 + $0x40] sm:$0xf]
    %v4292 = vld [vmem:[%s4274 + $0x44] sm:$0xf]
    %v4293 = vld [vmem:[%s4274 + $0x48] sm:$0xf]
    %v4294 = vld [vmem:[%s4274 + $0x4c] sm:$0xf]
    %v4295 = vld [vmem:[%s4274 + $0x50] sm:$0xf]
    %v4296 = vld [vmem:[%s4274 + $0x54] sm:$0xf]
    %v4297 = vld [vmem:[%s4274 + $0x58] sm:$0xf]
    %v4298 = vld [vmem:[%s4274 + $0x5c] sm:$0xf]
    %v4299 = vld [vmem:[%s4274 + $0x60] sm:$0xf]
    %v4300 = vld [vmem:[%s4274 + $0x64] sm:$0xf]
    %v4301 = vld [vmem:[%s4274 + $0x68] sm:$0xf]
    %v4302 = vld [vmem:[%s4274 + $0x6c] sm:$0xf]
    %v4303 = vld [vmem:[%s4274 + $0x70] sm:$0xf]
    %v4304 = vld [vmem:[%s4274 + $0x74] sm:$0xf]
    %v4305 = vld [vmem:[%s4274 + $0x78] sm:$0xf]
    %v4306 = vld [vmem:[%s4274 + $0x7c] sm:$0xf]
    %v4308 = vunpack.c.l.b16 %v3786
    %v4309 = vunpack.c.h.b16 %v3786
    %v4310 = vpack.c.b16 %v4308, %v4308
    %v4311 = vpack.c.b16 %v4309, %v4309
    %v4346 = vunpack.c.l.b16 %v4275
    %v4347 = vunpack.c.l.b16 %v4276
    %v4348 = vunpack.c.l.b16 %v4277
    %v4349 = vunpack.c.l.b16 %v4278
    %v4350 = vunpack.c.l.b16 %v4279
    %v4351 = vunpack.c.l.b16 %v4280
    %v4352 = vunpack.c.l.b16 %v4281
    %v4353 = vunpack.c.l.b16 %v4282
    %v4354 = vunpack.c.l.b16 %v4283
    %v4355 = vunpack.c.l.b16 %v4284
    %v4356 = vunpack.c.l.b16 %v4285
    %v4357 = vunpack.c.l.b16 %v4286
    %v4358 = vunpack.c.l.b16 %v4287
    %v4359 = vunpack.c.l.b16 %v4288
    %v4360 = vunpack.c.l.b16 %v4289
    %v4361 = vunpack.c.l.b16 %v4290
    %v4362 = vunpack.c.l.b16 %v4291
    %v4363 = vunpack.c.l.b16 %v4292
    %v4364 = vunpack.c.l.b16 %v4293
    %v4365 = vunpack.c.l.b16 %v4294
    %v4366 = vunpack.c.l.b16 %v4295
    %v4367 = vunpack.c.l.b16 %v4296
    %v4368 = vunpack.c.l.b16 %v4297
    %v4369 = vunpack.c.l.b16 %v4298
    %v4370 = vunpack.c.l.b16 %v4299
    %v4371 = vunpack.c.l.b16 %v4300
    %v4372 = vunpack.c.l.b16 %v4301
    %v4373 = vunpack.c.l.b16 %v4302
    %v4374 = vunpack.c.l.b16 %v4303
    %v4375 = vunpack.c.l.b16 %v4304
    %v4376 = vunpack.c.l.b16 %v4305
    %v4377 = vunpack.c.l.b16 %v4306
    %v4378 = vpack.c.b16 %v4347, %v4346
    %v4379 = vpack.c.b16 %v4349, %v4348
    %v4380 = vpack.c.b16 %v4351, %v4350
    %v4381 = vpack.c.b16 %v4353, %v4352
    %v4382 = vpack.c.b16 %v4355, %v4354
    %v4383 = vpack.c.b16 %v4357, %v4356
    %v4384 = vpack.c.b16 %v4359, %v4358
    %v4385 = vpack.c.b16 %v4361, %v4360
    %v4386 = vpack.c.b16 %v4363, %v4362
    %v4387 = vpack.c.b16 %v4365, %v4364
    %v4388 = vpack.c.b16 %v4367, %v4366
    %v4389 = vpack.c.b16 %v4369, %v4368
    %v4390 = vpack.c.b16 %v4371, %v4370
    %v4391 = vpack.c.b16 %v4373, %v4372
    %v4392 = vpack.c.b16 %v4375, %v4374
    %v4393 = vpack.c.b16 %v4377, %v4376
    %4410 = vmatpush.bf16.msra.mxu0 %v4385
    %4411 = vmatpush.bf16.msra.mxu0 %v4384
    %4412 = vmatpush.bf16.msra.mxu0 %v4383
    %4413 = vmatpush.bf16.msra.mxu0 %v4382
    %4414 = vmatpush.bf16.msra.mxu0 %v4381
    %4415 = vmatpush.bf16.msra.mxu0 %v4380
    %4416 = vmatpush.bf16.msra.mxu0 %v4379
    %4417 = vmatpush.bf16.msra.mxu0 %v4378
    %4418 = vmatmul.bf16.gmra.mxu0 %v4310
    %v4419 = vpop.f32.mrf.mxu0
    %v4420 = vadd.f32 0.0, %v4419
    %v4421 = vpop.f32.mrf.mxu0
    %4422 = vdwg.mxu0
    %4423 = vmatpush.bf16.msra.mxu0 %v4393
    %4424 = vmatpush.bf16.msra.mxu0 %v4392
    %4425 = vmatpush.bf16.msra.mxu0 %v4391
    %4426 = vmatpush.bf16.msra.mxu0 %v4390
    %4427 = vmatpush.bf16.msra.mxu0 %v4389
    %4428 = vmatpush.bf16.msra.mxu0 %v4388
    %4429 = vmatpush.bf16.msra.mxu0 %v4387
    %4430 = vmatpush.bf16.msra.mxu0 %v4386
    %4431 = vmatmul.bf16.gmra.mxu0 %v4311
    %v4432 = vpop.f32.mrf.mxu0
    %v4433 = vadd.f32 %v4420, %v4432
    %v4434 = vpop.f32.mrf.mxu0
    %4435 = vdwg.mxu0
    %v4436 = vadd.f32 %v4273, %v4433
    %s4437 = scalar_lea.vmem [#allocation8], 512
    %v4438 = vld [vmem:[%s4437] sm:$0xf]
    %v4439 = vld [vmem:[%s4437 + $0x4] sm:$0xf]
    %v4440 = vld [vmem:[%s4437 + $0x8] sm:$0xf]
    %v4441 = vld [vmem:[%s4437 + $0xc] sm:$0xf]
    %v4442 = vld [vmem:[%s4437 + $0x10] sm:$0xf]
    %v4443 = vld [vmem:[%s4437 + $0x14] sm:$0xf]
    %v4444 = vld [vmem:[%s4437 + $0x18] sm:$0xf]
    %v4445 = vld [vmem:[%s4437 + $0x1c] sm:$0xf]
    %v4446 = vld [vmem:[%s4437 + $0x20] sm:$0xf]
    %v4447 = vld [vmem:[%s4437 + $0x24] sm:$0xf]
    %v4448 = vld [vmem:[%s4437 + $0x28] sm:$0xf]
    %v4449 = vld [vmem:[%s4437 + $0x2c] sm:$0xf]
    %v4450 = vld [vmem:[%s4437 + $0x30] sm:$0xf]
    %v4451 = vld [vmem:[%s4437 + $0x34] sm:$0xf]
    %v4452 = vld [vmem:[%s4437 + $0x38] sm:$0xf]
    %v4453 = vld [vmem:[%s4437 + $0x3c] sm:$0xf]
    %v4454 = vld [vmem:[%s4437 + $0x40] sm:$0xf]
    %v4455 = vld [vmem:[%s4437 + $0x44] sm:$0xf]
    %v4456 = vld [vmem:[%s4437 + $0x48] sm:$0xf]
    %v4457 = vld [vmem:[%s4437 + $0x4c] sm:$0xf]
    %v4458 = vld [vmem:[%s4437 + $0x50] sm:$0xf]
    %v4459 = vld [vmem:[%s4437 + $0x54] sm:$0xf]
    %v4460 = vld [vmem:[%s4437 + $0x58] sm:$0xf]
    %v4461 = vld [vmem:[%s4437 + $0x5c] sm:$0xf]
    %v4462 = vld [vmem:[%s4437 + $0x60] sm:$0xf]
    %v4463 = vld [vmem:[%s4437 + $0x64] sm:$0xf]
    %v4464 = vld [vmem:[%s4437 + $0x68] sm:$0xf]
    %v4465 = vld [vmem:[%s4437 + $0x6c] sm:$0xf]
    %v4466 = vld [vmem:[%s4437 + $0x70] sm:$0xf]
    %v4467 = vld [vmem:[%s4437 + $0x74] sm:$0xf]
    %v4468 = vld [vmem:[%s4437 + $0x78] sm:$0xf]
    %v4469 = vld [vmem:[%s4437 + $0x7c] sm:$0xf]
    %v4471 = vunpack.c.l.b16 %v3787
    %v4472 = vunpack.c.h.b16 %v3787
    %v4473 = vpack.c.b16 %v4471, %v4471
    %v4474 = vpack.c.b16 %v4472, %v4472
    %v4509 = vunpack.c.l.b16 %v4438
    %v4510 = vunpack.c.l.b16 %v4439
    %v4511 = vunpack.c.l.b16 %v4440
    %v4512 = vunpack.c.l.b16 %v4441
    %v4513 = vunpack.c.l.b16 %v4442
    %v4514 = vunpack.c.l.b16 %v4443
    %v4515 = vunpack.c.l.b16 %v4444
    %v4516 = vunpack.c.l.b16 %v4445
    %v4517 = vunpack.c.l.b16 %v4446
    %v4518 = vunpack.c.l.b16 %v4447
    %v4519 = vunpack.c.l.b16 %v4448
    %v4520 = vunpack.c.l.b16 %v4449
    %v4521 = vunpack.c.l.b16 %v4450
    %v4522 = vunpack.c.l.b16 %v4451
    %v4523 = vunpack.c.l.b16 %v4452
    %v4524 = vunpack.c.l.b16 %v4453
    %v4525 = vunpack.c.l.b16 %v4454
    %v4526 = vunpack.c.l.b16 %v4455
    %v4527 = vunpack.c.l.b16 %v4456
    %v4528 = vunpack.c.l.b16 %v4457
    %v4529 = vunpack.c.l.b16 %v4458
    %v4530 = vunpack.c.l.b16 %v4459
    %v4531 = vunpack.c.l.b16 %v4460
    %v4532 = vunpack.c.l.b16 %v4461
    %v4533 = vunpack.c.l.b16 %v4462
    %v4534 = vunpack.c.l.b16 %v4463
    %v4535 = vunpack.c.l.b16 %v4464
    %v4536 = vunpack.c.l.b16 %v4465
    %v4537 = vunpack.c.l.b16 %v4466
    %v4538 = vunpack.c.l.b16 %v4467
    %v4539 = vunpack.c.l.b16 %v4468
    %v4540 = vunpack.c.l.b16 %v4469
    %v4541 = vpack.c.b16 %v4510, %v4509
    %v4542 = vpack.c.b16 %v4512, %v4511
    %v4543 = vpack.c.b16 %v4514, %v4513
    %v4544 = vpack.c.b16 %v4516, %v4515
    %v4545 = vpack.c.b16 %v4518, %v4517
    %v4546 = vpack.c.b16 %v4520, %v4519
    %v4547 = vpack.c.b16 %v4522, %v4521
    %v4548 = vpack.c.b16 %v4524, %v4523
    %v4549 = vpack.c.b16 %v4526, %v4525
    %v4550 = vpack.c.b16 %v4528, %v4527
    %v4551 = vpack.c.b16 %v4530, %v4529
    %v4552 = vpack.c.b16 %v4532, %v4531
    %v4553 = vpack.c.b16 %v4534, %v4533
    %v4554 = vpack.c.b16 %v4536, %v4535
    %v4555 = vpack.c.b16 %v4538, %v4537
    %v4556 = vpack.c.b16 %v4540, %v4539
    %4573 = vmatpush.bf16.msra.mxu0 %v4548
    %4574 = vmatpush.bf16.msra.mxu0 %v4547
    %4575 = vmatpush.bf16.msra.mxu0 %v4546
    %4576 = vmatpush.bf16.msra.mxu0 %v4545
    %4577 = vmatpush.bf16.msra.mxu0 %v4544
    %4578 = vmatpush.bf16.msra.mxu0 %v4543
    %4579 = vmatpush.bf16.msra.mxu0 %v4542
    %4580 = vmatpush.bf16.msra.mxu0 %v4541
    %4581 = vmatmul.bf16.gmra.mxu0 %v4473
    %v4582 = vpop.f32.mrf.mxu0
    %v4583 = vadd.f32 0.0, %v4582
    %v4584 = vpop.f32.mrf.mxu0
    %4585 = vdwg.mxu0
    %4586 = vmatpush.bf16.msra.mxu0 %v4556
    %4587 = vmatpush.bf16.msra.mxu0 %v4555
    %4588 = vmatpush.bf16.msra.mxu0 %v4554
    %4589 = vmatpush.bf16.msra.mxu0 %v4553
    %4590 = vmatpush.bf16.msra.mxu0 %v4552
    %4591 = vmatpush.bf16.msra.mxu0 %v4551
    %4592 = vmatpush.bf16.msra.mxu0 %v4550
    %4593 = vmatpush.bf16.msra.mxu0 %v4549
    %4594 = vmatmul.bf16.gmra.mxu0 %v4474
    %v4595 = vpop.f32.mrf.mxu0
    %v4596 = vadd.f32 %v4583, %v4595
    %v4597 = vpop.f32.mrf.mxu0
    %4598 = vdwg.mxu0
    %v4599 = vadd.f32 %v4436, %v4596
    %v4600 = vld [vmem:[#allocation13] sm:$0x1]
    %v4602 = vperm.slane %v4600, 0
    %v4604 = vadd.f32 %v4599, %v4602
    %4605 = vst [vmem:[#allocation14] sm:$0xff] %v4604
    // Predicated region
    $region70: #{tpu_custom_call.1} parent=1 // pred_check
      _
    $region71: #{tpu_custom_call.1} parent=1 // pred_check_branch
      %4607 = sbr.rel (0) target = $region73
    $region72: #{tpu_custom_call.1} parent=1 // pred_region
      %4609 = vsyncadd [#allocation4], 0
      %s4611 = sshll.u32 [#allocation14], 4
      %s4612 = int_to_ptr.vmem [resolvable:$true] %s4611
      %s4613 = sshll.u32 %s10, 4
      %s4614 = int_to_ptr.hbm [resolvable:$true] %s4613
      %4616 = dma.vmem_to_hbm [thread:$0]  %s4612, 128, %s4614, [#allocation4]
    $region73: #{tpu_custom_call.1} parent=1 // pred_fallthru
      _
    // Predicated region
    $region74: #{tpu_custom_call.1} parent=1 // pred_check
      _
    $region75: #{tpu_custom_call.1} parent=1 // pred_check_branch
      %4618 = sbr.rel (0) target = $region77
    $region76: #{tpu_custom_call.1} parent=1 // pred_region
      %4620 = dma.done [#allocation4], 128
    $region77: #{tpu_custom_call.1} parent=1 // pred_fallthru
      _
    %4621 = vsyncpa [#allocation3], 1
    %4622 = vsyncpa [#allocation6], 1
    %4623 = vsyncpa [#allocation9], 1
    %4624 = vsyncpa [#allocation12], 1
    %4625 = vsyncpa [#allocation4], 1

</llo_original>
